<compile_context>
chip_gen: v7x
topology: tpu7x:2x2x1
jax: 0.10.0
libtpu: 0.0.40
codegen_flags: <defaults>
</compile_context>

<pallas_src>
import functools

import jax
import jax.numpy as jnp
import numpy as np
from jax.experimental import pallas as pl
from jax.experimental.pallas import tpu as pltpu

_SIGMAS = (0.05, 0.25, 0.4, 0.25, 0.4)
_ITERATIONS = (1, 1, 1, 2, 2)
_MAX_DELTA = 1
_TRUNCATE = 4.0  # skimage / scipy.ndimage default


# ---------------------------------------------------------------------------
# Static filter constants
# ---------------------------------------------------------------------------

def _gauss_taps(sigma: float):
    """scipy.ndimage gaussian_filter1d taps (truncate=4.0)."""
    radius = int(_TRUNCATE * sigma + 0.5)
    if radius <= 0:
        return (1.0,)
    x = np.arange(-radius, radius + 1, dtype=np.float64)
    phi = np.exp(-0.5 * (x / sigma) ** 2)
    phi /= phi.sum()
    return tuple(float(v) for v in phi)


def _channel_mix(taps, c: int):
    """C x C matrix equal to the 1-D gaussian along the channel axis with
    'nearest' boundary handling (skimage is called without channel_axis)."""
    r = (len(taps) - 1) // 2
    m = np.zeros((c, c), dtype=np.float64)
    for ci in range(c):
        for k in range(-r, r + 1):
            j = min(max(ci + k, 0), c - 1)
            m[ci, j] += taps[k + r]
    return tuple(tuple(float(v) for v in row) for row in m)


# ---------------------------------------------------------------------------
# Pallas kernel: fused separable gaussian (H, W, channel axes) + optional clamp
# ---------------------------------------------------------------------------

def _blur_kernel(*refs, taps, cmix, hs, clamp):
    if hs > 0:
        xc_ref, xt_ref, xb_ref, o_ref = refs
    else:
        xc_ref, o_ref = refs

    x = xc_ref[...]                       # (C, TH, W) centre tile
    c, th, w = x.shape

    if hs > 0:
        # 8-row-aligned neighbour slabs above / below the tile; at the image
        # borders substitute 'nearest' edge replication.  Scalar float blend
        # keeps the boundary handling to cheap broadcast multiplies.
        first = (pl.program_id(0) == 0).astype(jnp.float32)
        last = (pl.program_id(0) == pl.num_programs(0) - 1).astype(jnp.float32)
        edge_top = jnp.broadcast_to(x[:, :1, :], (c, 8, w))
        edge_bot = jnp.broadcast_to(x[:, th - 1:, :], (c, 8, w))
        top = first * edge_top + (1.0 - first) * xt_ref[...]
        bot = last * edge_bot + (1.0 - last) * xb_ref[...]
        xp = jnp.concatenate([top, x, bot], axis=1)      # (C, TH + 16, W)

        # Vertical (H-axis) taps: unrolled shifted adds.
        acc = None
        for k in range(2 * hs + 1):
            start = 8 - hs + k
            term = xp[:, start:start + th, :] * taps[k]
            acc = term if acc is None else acc + term
        xv = acc

        # Horizontal (W-axis) taps with 'nearest' padding; pad with 128-wide
        # edge slabs so the lane-axis concat stays tile-aligned.
        lpad = jnp.broadcast_to(xv[:, :, :1], (c, th, 128))
        rpad = jnp.broadcast_to(xv[:, :, w - 1:], (c, th, 128))
        xh_pad = jnp.concatenate([lpad, xv, rpad], axis=2)   # (C, TH, W + 256)
        acc = None
        for k in range(2 * hs + 1):
            start = 128 - hs + k
            term = xh_pad[:, :, start:start + w] * taps[k]
            acc = term if acc is None else acc + term
        xhw = acc
    else:
        # sigma small enough that the gaussian radius is 0 -> identity filter.
        xhw = x

    # Channel-axis gaussian as a tiny static mixing matrix, fused with the
    # final clamp; per-channel stores keep the output lane-dense.
    for ci in range(c):
        acc = xhw[0] * cmix[ci][0]
        for j in range(1, c):
            acc = acc + xhw[j] * cmix[ci][j]
        if clamp:
            acc = jnp.clip(acc, 0.0, 1.0)
        o_ref[ci] = acc


def _pick_tile_h(c: int, h: int, w: int) -> int:
    budget = 2 * 1024 * 1024  # keep one (C, TH, W) block comfortably small
    for cand in (512, 256, 128, 64, 32, 16, 8):
        if cand <= h and h % cand == 0 and 4 * c * cand * w <= budget:
            return cand
    return h


def _gaussian_blur(img, sigma, *, clamp, tile_h=None):
    c, h, w = img.shape
    if h % 8 != 0:
        # TODO(synk): pad H to a multiple of 8 host-side for arbitrary sizes.
        raise ValueError("H must be a multiple of 8")
    taps = _gauss_taps(sigma)
    hs = (len(taps) - 1) // 2
    cmix = _channel_mix(taps, c)
    th = tile_h if tile_h is not None else _pick_tile_h(c, h, w)
    if h % th != 0 or th % 8 != 0:
        raise ValueError("tile_h must divide H and be a multiple of 8")

    hb = th // 8          # halo-slab stride in units of 8-row blocks
    n_slabs = h // 8
    block_bytes = 4 * c * th * w
    vmem_limit = int(min(48 * 2**20, max(24 * 2**20, 20 * block_bytes)))

    kernel = functools.partial(
        _blur_kernel, taps=taps, cmix=cmix, hs=hs, clamp=clamp)

    in_specs = [
        # centre tile: all channels, full width (lane-dense), TH rows
        pl.BlockSpec((c, th, w), lambda i: (0, i, 0)),
    ]
    operands = [img]
    if hs > 0:
        in_specs += [
            # 8-row slab just above the tile (clamped at the top border;
            # the kernel substitutes edge replication there)
            pl.BlockSpec((c, 8, w),
                         lambda i: (0, jnp.maximum(i * hb - 1, 0), 0)),
            # 8-row slab just below the tile (clamped at the bottom border)
            pl.BlockSpec((c, 8, w),
                         lambda i: (0, jnp.minimum((i + 1) * hb,
                                                   n_slabs - 1), 0)),
        ]
        operands += [img, img]

    return pl.pallas_call(
        kernel,
        out_shape=jax.ShapeDtypeStruct((c, h, w), jnp.float32),
        grid_spec=pltpu.PrefetchScalarGridSpec(
            num_scalar_prefetch=0,
            grid=(h // th,),
            in_specs=in_specs,
            out_specs=pl.BlockSpec((c, th, w), lambda i: (0, i, 0)),
        ),
        compiler_params=pltpu.CompilerParams(
            dimension_semantics=("parallel",),
            vmem_limit_bytes=vmem_limit,
        ),
    )(*operands)


# ---------------------------------------------------------------------------
# Host-side composition of the sequential random "swap" loop (index-only)
# ---------------------------------------------------------------------------

def make_glass_shuffle_map(key, shape, severity: int) -> np.ndarray:
    """Replicates the reference's sequential in-place update loop.

    Returns src (int32, (shape[0]*shape[1],)): after the loop, the row at flat
    position p holds the blurred row src[p] (rows = img[a, b], length shape[2]).
    """
    iterations = _ITERATIONS[severity - 1]
    d0, d1 = int(shape[0]), int(shape[1])
    a_idx = list(range(d0 - _MAX_DELTA, _MAX_DELTA, -1))
    b_idx = list(range(d1 - _MAX_DELTA, _MAX_DELTA, -1))
    src = np.arange(d0 * d1, dtype=np.int32).reshape(d0, d1)
    if iterations == 0 or not a_idx or not b_idx:
        return src.reshape(-1)
    deltas = np.asarray(
        jax.random.randint(key, (iterations, len(a_idx), len(b_idx), 2),
                           minval=-_MAX_DELTA, maxval=_MAX_DELTA))
    for it in range(iterations):
        for ia, a in enumerate(a_idx):
            for ib, b in enumerate(b_idx):
                dx = int(deltas[it, ia, ib, 0])
                dy = int(deltas[it, ia, ib, 1])
                # The reference's tuple "swap" of two tensor views aliases and
                # reduces to the one-way copy img[a, b] <- img[a+dy, b+dx];
                # compose the same update on the index map.
                src[a, b] = src[a + dy, b + dx]
    return src.reshape(-1)


# ---------------------------------------------------------------------------
# Full GlassBlur.forward
# ---------------------------------------------------------------------------

@functools.partial(jax.jit, static_argnames=("severity", "tile_h"))
def glass_blur(img, shuffle_src, severity: int, tile_h=None):
    if not 1 <= severity <= 5:
        raise ValueError("severity must be in [1, 5]")
    sigma = _SIGMAS[severity - 1]
    img = img.astype(jnp.float32)
    c, h, w = img.shape

    blur1 = _gaussian_blur(img, sigma, clamp=False, tile_h=tile_h)
    # TODO(synk): the data-dependent per-row gather has no clean portable
    # Pallas/TPU expression at this granularity; it is applied via XLA.
    shuffled = jnp.take(blur1.reshape(c * h, w), shuffle_src, axis=0)
    shuffled = shuffled.reshape(c, h, w)
    return _gaussian_blur(shuffled, sigma, clamp=True, tile_h=tile_h)


# ---------------------------------------------------------------------------
# Pure-numpy reference for correctness checking
# ---------------------------------------------------------------------------

def _reference_glass_blur(img, shuffle_src, severity):
    taps = np.asarray(_gauss_taps(_SIGMAS[severity - 1]), dtype=np.float64)
    r = (len(taps) - 1) // 2

    def blur(x):
        x = x.astype(np.float64)
        if r == 0:
            return x
        for ax in range(x.ndim):
            pad = [(r, r) if a == ax else (0, 0) for a in range(x.ndim)]
            xp = np.pad(x, pad, mode="edge")
            acc = np.zeros_like(x)
            for k in range(2 * r + 1):
                sl = [slice(None)] * x.ndim
                sl[ax] = slice(k, k + x.shape[ax])
                acc += taps[k] * xp[tuple(sl)]
            x = acc
        return x

    c, h, w = img.shape
    b1 = blur(img)
    sh = b1.reshape(c * h, w)[shuffle_src].reshape(c, h, w)
    return np.clip(blur(sh), 0.0, 1.0).astype(np.float32)


if __name__ == "__main__":
    key = jax.random.PRNGKey(0)
    k_img, k_shuffle = jax.random.split(key)

    c, h, w = 3, 64, 128    # small CHW image; W = 128 keeps stores lane-dense
    img = jax.random.uniform(k_img, (c, h, w), dtype=jnp.float32)

    # severity 3: sigma = 0.4 (5-tap gaussian), 1 shuffle iteration
    severity = 3
    shuffle_src = make_glass_shuffle_map(k_shuffle, (c, h, w), severity)
    out = glass_blur(img, jnp.asarray(shuffle_src), severity=severity,
                     tile_h=32)           # tile_h=32 -> 2 tiles, halos exercised
    out = jax.block_until_ready(out)

    assert out.shape == (c, h, w) and out.dtype == jnp.float32
    assert bool(jnp.all(jnp.isfinite(out)))
    assert bool(jnp.all((out >= 0.0) & (out <= 1.0)))
    ref = _reference_glass_blur(np.asarray(img), shuffle_src, severity)
    np.testing.assert_allclose(np.asarray(out), ref, rtol=1e-4, atol=1e-4)

    # severity 1: radius-0 gaussian (identity filter path, no halo inputs)
    severity1 = 1
    shuffle_src1 = make_glass_shuffle_map(k_shuffle, (c, h, w), severity1)
    out1 = glass_blur(img, jnp.asarray(shuffle_src1), severity=severity1,
                      tile_h=32)
    out1 = jax.block_until_ready(out1)
    ref1 = _reference_glass_blur(np.asarray(img), shuffle_src1, severity1)
    np.testing.assert_allclose(np.asarray(out1), ref1, rtol=1e-4, atol=1e-4)

    print("KERNEL_OK")
</pallas_src>

<mosaic_0001>
module attributes {stable_mosaic.version = 11 : i64} {
  func.func @_blur_kernel(%arg0: i32, %arg1: memref<3x32x128xf32, #tpu.memory_space<vmem>>, %arg2: memref<3x8x128xf32, #tpu.memory_space<vmem>>, %arg3: memref<3x8x128xf32, #tpu.memory_space<vmem>>, %arg4: memref<3x32x128xf32, #tpu.memory_space<vmem>>) attributes {dimension_semantics = [#tpu.dimension_semantics<parallel>], iteration_bounds = array<i64: 2>, scalar_prefetch = 0 : i64, scratch_operands = 0 : i64, tpu.core_type = #tpu.core_type<tc>, window_params = [{transform_indices = @transform_0, window_bounds = array<i64: 3, 32, 128>}, {transform_indices = @transform_1, window_bounds = array<i64: 3, 8, 128>}, {transform_indices = @transform_2, window_bounds = array<i64: 3, 8, 128>}, {transform_indices = @transform_3, window_bounds = array<i64: 3, 32, 128>}]} {
    %c0 = arith.constant 0 : index
    %c0_0 = arith.constant 0 : index
    %c0_1 = arith.constant 0 : index
    %0 = vector.load %arg1[%c0, %c0_0, %c0_1] : memref<3x32x128xf32, #tpu.memory_space<vmem>>, vector<3x32x128xf32>
    %c0_i32 = arith.constant 0 : i32
    %1 = arith.cmpi eq, %arg0, %c0_i32 : i32
    %2 = arith.extui %1 : i1 to i32
    %3 = arith.sitofp %2 : i32 to f32
    %c1_i32 = arith.constant 1 : i32
    %4 = arith.cmpi eq, %arg0, %c1_i32 : i32
    %5 = arith.extui %4 : i1 to i32
    %6 = arith.sitofp %5 : i32 to f32
    %7 = vector.extract_strided_slice %0 {offsets = [0, 0, 0], sizes = [3, 1, 128], strides = [1, 1, 1]} : vector<3x32x128xf32> to vector<3x1x128xf32>
    %8 = vector.shape_cast %7 : vector<3x1x128xf32> to vector<3x1x128xf32>
    %9 = vector.broadcast %8 : vector<3x1x128xf32> to vector<3x8x128xf32>
    %10 = vector.extract_strided_slice %0 {offsets = [0, 31, 0], sizes = [3, 1, 128], strides = [1, 1, 1]} : vector<3x32x128xf32> to vector<3x1x128xf32>
    %11 = vector.shape_cast %10 : vector<3x1x128xf32> to vector<3x1x128xf32>
    %12 = vector.broadcast %11 : vector<3x1x128xf32> to vector<3x8x128xf32>
    %13 = vector.broadcast %3 : f32 to vector<3x8x128xf32>
    %14 = arith.mulf %13, %9 : vector<3x8x128xf32>
    %cst = arith.constant 1.000000e+00 : f32
    %15 = arith.subf %cst, %3 : f32
    %c0_2 = arith.constant 0 : index
    %c0_3 = arith.constant 0 : index
    %c0_4 = arith.constant 0 : index
    %16 = vector.load %arg2[%c0_2, %c0_3, %c0_4] : memref<3x8x128xf32, #tpu.memory_space<vmem>>, vector<3x8x128xf32>
    %17 = vector.broadcast %15 : f32 to vector<3x8x128xf32>
    %18 = arith.mulf %17, %16 : vector<3x8x128xf32>
    %19 = arith.addf %14, %18 : vector<3x8x128xf32>
    %20 = vector.broadcast %6 : f32 to vector<3x8x128xf32>
    %21 = arith.mulf %20, %12 : vector<3x8x128xf32>
    %cst_5 = arith.constant 1.000000e+00 : f32
    %22 = arith.subf %cst_5, %6 : f32
    %c0_6 = arith.constant 0 : index
    %c0_7 = arith.constant 0 : index
    %c0_8 = arith.constant 0 : index
    %23 = vector.load %arg3[%c0_6, %c0_7, %c0_8] : memref<3x8x128xf32, #tpu.memory_space<vmem>>, vector<3x8x128xf32>
    %24 = vector.broadcast %22 : f32 to vector<3x8x128xf32>
    %25 = arith.mulf %24, %23 : vector<3x8x128xf32>
    %26 = arith.addf %21, %25 : vector<3x8x128xf32>
    %27 = tpu.concatenate %19, %0, %26 in 1 : vector<3x8x128xf32>, vector<3x32x128xf32>, vector<3x8x128xf32> -> vector<3x48x128xf32>
    %28 = vector.extract_strided_slice %27 {offsets = [0, 6, 0], sizes = [3, 32, 128], strides = [1, 1, 1]} : vector<3x48x128xf32> to vector<3x32x128xf32>
    %cst_9 = arith.constant 3.42560634E-6 : f32
    %29 = vector.broadcast %cst_9 : f32 to vector<3x32x128xf32>
    %30 = arith.mulf %28, %29 : vector<3x32x128xf32>
    %31 = vector.extract_strided_slice %27 {offsets = [0, 7, 0], sizes = [3, 32, 128], strides = [1, 1, 1]} : vector<3x48x128xf32> to vector<3x32x128xf32>
    %cst_10 = arith.constant 0.0403876156 : f32
    %32 = vector.broadcast %cst_10 : f32 to vector<3x32x128xf32>
    %33 = arith.mulf %31, %32 : vector<3x32x128xf32>
    %34 = arith.addf %30, %33 : vector<3x32x128xf32>
    %35 = vector.extract_strided_slice %27 {offsets = [0, 8, 0], sizes = [3, 32, 128], strides = [1, 1, 1]} : vector<3x48x128xf32> to vector<3x32x128xf32>
    %cst_11 = arith.constant 0.919217944 : f32
    %36 = vector.broadcast %cst_11 : f32 to vector<3x32x128xf32>
    %37 = arith.mulf %35, %36 : vector<3x32x128xf32>
    %38 = arith.addf %34, %37 : vector<3x32x128xf32>
    %39 = vector.extract_strided_slice %27 {offsets = [0, 9, 0], sizes = [3, 32, 128], strides = [1, 1, 1]} : vector<3x48x128xf32> to vector<3x32x128xf32>
    %cst_12 = arith.constant 0.0403876156 : f32
    %40 = vector.broadcast %cst_12 : f32 to vector<3x32x128xf32>
    %41 = arith.mulf %39, %40 : vector<3x32x128xf32>
    %42 = arith.addf %38, %41 : vector<3x32x128xf32>
    %43 = vector.extract_strided_slice %27 {offsets = [0, 10, 0], sizes = [3, 32, 128], strides = [1, 1, 1]} : vector<3x48x128xf32> to vector<3x32x128xf32>
    %cst_13 = arith.constant 3.42560634E-6 : f32
    %44 = vector.broadcast %cst_13 : f32 to vector<3x32x128xf32>
    %45 = arith.mulf %43, %44 : vector<3x32x128xf32>
    %46 = arith.addf %42, %45 : vector<3x32x128xf32>
    %47 = vector.extract_strided_slice %46 {offsets = [0, 0, 0], sizes = [3, 32, 1], strides = [1, 1, 1]} : vector<3x32x128xf32> to vector<3x32x1xf32>
    %48 = vector.shape_cast %47 : vector<3x32x1xf32> to vector<3x32x1xf32>
    %49 = vector.broadcast %48 : vector<3x32x1xf32> to vector<3x32x128xf32>
    %50 = vector.extract_strided_slice %46 {offsets = [0, 0, 127], sizes = [3, 32, 1], strides = [1, 1, 1]} : vector<3x32x128xf32> to vector<3x32x1xf32>
    %51 = vector.shape_cast %50 : vector<3x32x1xf32> to vector<3x32x1xf32>
    %52 = vector.broadcast %51 : vector<3x32x1xf32> to vector<3x32x128xf32>
    %53 = tpu.concatenate %49, %46, %52 in 2 : vector<3x32x128xf32>, vector<3x32x128xf32>, vector<3x32x128xf32> -> vector<3x32x384xf32>
    %54 = vector.extract_strided_slice %53 {offsets = [0, 0, 126], sizes = [3, 32, 128], strides = [1, 1, 1]} : vector<3x32x384xf32> to vector<3x32x128xf32>
    %cst_14 = arith.constant 3.42560634E-6 : f32
    %55 = vector.broadcast %cst_14 : f32 to vector<3x32x128xf32>
    %56 = arith.mulf %54, %55 : vector<3x32x128xf32>
    %57 = vector.extract_strided_slice %53 {offsets = [0, 0, 127], sizes = [3, 32, 128], strides = [1, 1, 1]} : vector<3x32x384xf32> to vector<3x32x128xf32>
    %cst_15 = arith.constant 0.0403876156 : f32
    %58 = vector.broadcast %cst_15 : f32 to vector<3x32x128xf32>
    %59 = arith.mulf %57, %58 : vector<3x32x128xf32>
    %60 = arith.addf %56, %59 : vector<3x32x128xf32>
    %61 = vector.extract_strided_slice %53 {offsets = [0, 0, 128], sizes = [3, 32, 128], strides = [1, 1, 1]} : vector<3x32x384xf32> to vector<3x32x128xf32>
    %cst_16 = arith.constant 0.919217944 : f32
    %62 = vector.broadcast %cst_16 : f32 to vector<3x32x128xf32>
    %63 = arith.mulf %61, %62 : vector<3x32x128xf32>
    %64 = arith.addf %60, %63 : vector<3x32x128xf32>
    %65 = vector.extract_strided_slice %53 {offsets = [0, 0, 129], sizes = [3, 32, 128], strides = [1, 1, 1]} : vector<3x32x384xf32> to vector<3x32x128xf32>
    %cst_17 = arith.constant 0.0403876156 : f32
    %66 = vector.broadcast %cst_17 : f32 to vector<3x32x128xf32>
    %67 = arith.mulf %65, %66 : vector<3x32x128xf32>
    %68 = arith.addf %64, %67 : vector<3x32x128xf32>
    %69 = vector.extract_strided_slice %53 {offsets = [0, 0, 130], sizes = [3, 32, 128], strides = [1, 1, 1]} : vector<3x32x384xf32> to vector<3x32x128xf32>
    %cst_18 = arith.constant 3.42560634E-6 : f32
    %70 = vector.broadcast %cst_18 : f32 to vector<3x32x128xf32>
    %71 = arith.mulf %69, %70 : vector<3x32x128xf32>
    %72 = arith.addf %68, %71 : vector<3x32x128xf32>
    %73 = vector.extract_strided_slice %72 {offsets = [0, 0, 0], sizes = [1, 32, 128], strides = [1, 1, 1]} : vector<3x32x128xf32> to vector<1x32x128xf32>
    %74 = vector.shape_cast %73 : vector<1x32x128xf32> to vector<32x128xf32>
    %cst_19 = arith.constant 0.959608972 : f32
    %75 = vector.broadcast %cst_19 : f32 to vector<32x128xf32>
    %76 = arith.mulf %74, %75 : vector<32x128xf32>
    %77 = vector.extract_strided_slice %72 {offsets = [1, 0, 0], sizes = [1, 32, 128], strides = [1, 1, 1]} : vector<3x32x128xf32> to vector<1x32x128xf32>
    %78 = vector.shape_cast %77 : vector<1x32x128xf32> to vector<32x128xf32>
    %cst_20 = arith.constant 0.0403876156 : f32
    %79 = vector.broadcast %cst_20 : f32 to vector<32x128xf32>
    %80 = arith.mulf %78, %79 : vector<32x128xf32>
    %81 = arith.addf %76, %80 : vector<32x128xf32>
    %82 = vector.extract_strided_slice %72 {offsets = [2, 0, 0], sizes = [1, 32, 128], strides = [1, 1, 1]} : vector<3x32x128xf32> to vector<1x32x128xf32>
    %83 = vector.shape_cast %82 : vector<1x32x128xf32> to vector<32x128xf32>
    %cst_21 = arith.constant 3.42560634E-6 : f32
    %84 = vector.broadcast %cst_21 : f32 to vector<32x128xf32>
    %85 = arith.mulf %83, %84 : vector<32x128xf32>
    %86 = arith.addf %81, %85 : vector<32x128xf32>
    %c0_22 = arith.constant 0 : index
    %c0_23 = arith.constant 0 : index
    %c0_24 = arith.constant 0 : index
    %87 = vector.load %arg4[%c0_22, %c0_23, %c0_24] : memref<3x32x128xf32, #tpu.memory_space<vmem>>, vector<1x32x128xf32>
    %88 = vector.shape_cast %87 : vector<1x32x128xf32> to vector<32x128xf32>
    %89 = vector.shape_cast %86 : vector<32x128xf32> to vector<1x32x128xf32>
    tpu.vector_store %arg4[%c0_22, %c0_23, %c0_24], %89 {strides = array<i32>} : memref<3x32x128xf32, #tpu.memory_space<vmem>>, vector<1x32x128xf32>,
    %90 = vector.extract_strided_slice %72 {offsets = [0, 0, 0], sizes = [1, 32, 128], strides = [1, 1, 1]} : vector<3x32x128xf32> to vector<1x32x128xf32>
    %91 = vector.shape_cast %90 : vector<1x32x128xf32> to vector<32x128xf32>
    %cst_25 = arith.constant 0.0403910428 : f32
    %92 = vector.broadcast %cst_25 : f32 to vector<32x128xf32>
    %93 = arith.mulf %91, %92 : vector<32x128xf32>
    %94 = vector.extract_strided_slice %72 {offsets = [1, 0, 0], sizes = [1, 32, 128], strides = [1, 1, 1]} : vector<3x32x128xf32> to vector<1x32x128xf32>
    %95 = vector.shape_cast %94 : vector<1x32x128xf32> to vector<32x128xf32>
    %cst_26 = arith.constant 0.919217944 : f32
    %96 = vector.broadcast %cst_26 : f32 to vector<32x128xf32>
    %97 = arith.mulf %95, %96 : vector<32x128xf32>
    %98 = arith.addf %93, %97 : vector<32x128xf32>
    %99 = vector.extract_strided_slice %72 {offsets = [2, 0, 0], sizes = [1, 32, 128], strides = [1, 1, 1]} : vector<3x32x128xf32> to vector<1x32x128xf32>
    %100 = vector.shape_cast %99 : vector<1x32x128xf32> to vector<32x128xf32>
    %cst_27 = arith.constant 0.0403910428 : f32
    %101 = vector.broadcast %cst_27 : f32 to vector<32x128xf32>
    %102 = arith.mulf %100, %101 : vector<32x128xf32>
    %103 = arith.addf %98, %102 : vector<32x128xf32>
    %c1 = arith.constant 1 : index
    %c0_28 = arith.constant 0 : index
    %c0_29 = arith.constant 0 : index
    %104 = vector.load %arg4[%c1, %c0_28, %c0_29] : memref<3x32x128xf32, #tpu.memory_space<vmem>>, vector<1x32x128xf32>
    %105 = vector.shape_cast %104 : vector<1x32x128xf32> to vector<32x128xf32>
    %106 = vector.shape_cast %103 : vector<32x128xf32> to vector<1x32x128xf32>
    tpu.vector_store %arg4[%c1, %c0_28, %c0_29], %106 {strides = array<i32>} : memref<3x32x128xf32, #tpu.memory_space<vmem>>, vector<1x32x128xf32>,
    %107 = vector.extract_strided_slice %72 {offsets = [0, 0, 0], sizes = [1, 32, 128], strides = [1, 1, 1]} : vector<3x32x128xf32> to vector<1x32x128xf32>
    %108 = vector.shape_cast %107 : vector<1x32x128xf32> to vector<32x128xf32>
    %cst_30 = arith.constant 3.42560634E-6 : f32
    %109 = vector.broadcast %cst_30 : f32 to vector<32x128xf32>
    %110 = arith.mulf %108, %109 : vector<32x128xf32>
    %111 = vector.extract_strided_slice %72 {offsets = [1, 0, 0], sizes = [1, 32, 128], strides = [1, 1, 1]} : vector<3x32x128xf32> to vector<1x32x128xf32>
    %112 = vector.shape_cast %111 : vector<1x32x128xf32> to vector<32x128xf32>
    %cst_31 = arith.constant 0.0403876156 : f32
    %113 = vector.broadcast %cst_31 : f32 to vector<32x128xf32>
    %114 = arith.mulf %112, %113 : vector<32x128xf32>
    %115 = arith.addf %110, %114 : vector<32x128xf32>
    %116 = vector.extract_strided_slice %72 {offsets = [2, 0, 0], sizes = [1, 32, 128], strides = [1, 1, 1]} : vector<3x32x128xf32> to vector<1x32x128xf32>
    %117 = vector.shape_cast %116 : vector<1x32x128xf32> to vector<32x128xf32>
    %cst_32 = arith.constant 0.959608972 : f32
    %118 = vector.broadcast %cst_32 : f32 to vector<32x128xf32>
    %119 = arith.mulf %117, %118 : vector<32x128xf32>
    %120 = arith.addf %115, %119 : vector<32x128xf32>
    %c2 = arith.constant 2 : index
    %c0_33 = arith.constant 0 : index
    %c0_34 = arith.constant 0 : index
    %121 = vector.load %arg4[%c2, %c0_33, %c0_34] : memref<3x32x128xf32, #tpu.memory_space<vmem>>, vector<1x32x128xf32>
    %122 = vector.shape_cast %121 : vector<1x32x128xf32> to vector<32x128xf32>
    %123 = vector.shape_cast %120 : vector<32x128xf32> to vector<1x32x128xf32>
    tpu.vector_store %arg4[%c2, %c0_33, %c0_34], %123 {strides = array<i32>} : memref<3x32x128xf32, #tpu.memory_space<vmem>>, vector<1x32x128xf32>,
    return
  }
  func.func @transform_0(%arg0: i32) -> (i32, i32, i32) {
    %c0_i32 = arith.constant 0 : i32
    %c0_i32_0 = arith.constant 0 : i32
    %c0_i32_1 = arith.constant 0 : i32
    return %c0_i32, %arg0, %c0_i32_0 : i32, i32, i32
  }
  func.func @transform_1(%arg0: i32) -> (i32, i32, i32) {
    %c4_i32 = arith.constant 4 : i32
    %0 = arith.muli %arg0, %c4_i32 : i32
    %c1_i32 = arith.constant 1 : i32
    %1 = arith.subi %0, %c1_i32 : i32
    %c0_i32 = arith.constant 0 : i32
    %2 = arith.maxsi %1, %c0_i32 : i32
    %c0_i32_0 = arith.constant 0 : i32
    %c0_i32_1 = arith.constant 0 : i32
    %c0_i32_2 = arith.constant 0 : i32
    return %c0_i32_0, %2, %c0_i32_1 : i32, i32, i32
  }
  func.func @transform_2(%arg0: i32) -> (i32, i32, i32) {
    %c1_i32 = arith.constant 1 : i32
    %0 = arith.addi %arg0, %c1_i32 : i32
    %c4_i32 = arith.constant 4 : i32
    %1 = arith.muli %0, %c4_i32 : i32
    %c7_i32 = arith.constant 7 : i32
    %2 = arith.minsi %1, %c7_i32 : i32
    %c0_i32 = arith.constant 0 : i32
    %c0_i32_0 = arith.constant 0 : i32
    %c0_i32_1 = arith.constant 0 : i32
    return %c0_i32, %2, %c0_i32_0 : i32, i32, i32
  }
  func.func @transform_3(%arg0: i32) -> (i32, i32, i32) {
    %c0_i32 = arith.constant 0 : i32
    %c0_i32_0 = arith.constant 0 : i32
    %c0_i32_1 = arith.constant 0 : i32
    return %c0_i32, %arg0, %c0_i32_0 : i32, i32, i32
  }
}

module attributes {stable_mosaic.version = 11 : i64} {
  func.func @_blur_kernel(%arg0: i32, %arg1: memref<3x32x128xf32, #tpu.memory_space<vmem>>, %arg2: memref<3x8x128xf32, #tpu.memory_space<vmem>>, %arg3: memref<3x8x128xf32, #tpu.memory_space<vmem>>, %arg4: memref<3x32x128xf32, #tpu.memory_space<vmem>>) attributes {dimension_semantics = [#tpu.dimension_semantics<parallel>], iteration_bounds = array<i64: 2>, scalar_prefetch = 0 : i64, scratch_operands = 0 : i64, tpu.core_type = #tpu.core_type<tc>, window_params = [{transform_indices = @transform_0, window_bounds = array<i64: 3, 32, 128>}, {transform_indices = @transform_1, window_bounds = array<i64: 3, 8, 128>}, {transform_indices = @transform_2, window_bounds = array<i64: 3, 8, 128>}, {transform_indices = @transform_3, window_bounds = array<i64: 3, 32, 128>}]} {
    %c0 = arith.constant 0 : index
    %c0_0 = arith.constant 0 : index
    %c0_1 = arith.constant 0 : index
    %0 = vector.load %arg1[%c0, %c0_0, %c0_1] : memref<3x32x128xf32, #tpu.memory_space<vmem>>, vector<3x32x128xf32>
    %c0_i32 = arith.constant 0 : i32
    %1 = arith.cmpi eq, %arg0, %c0_i32 : i32
    %2 = arith.extui %1 : i1 to i32
    %3 = arith.sitofp %2 : i32 to f32
    %c1_i32 = arith.constant 1 : i32
    %4 = arith.cmpi eq, %arg0, %c1_i32 : i32
    %5 = arith.extui %4 : i1 to i32
    %6 = arith.sitofp %5 : i32 to f32
    %7 = vector.extract_strided_slice %0 {offsets = [0, 0, 0], sizes = [3, 1, 128], strides = [1, 1, 1]} : vector<3x32x128xf32> to vector<3x1x128xf32>
    %8 = vector.shape_cast %7 : vector<3x1x128xf32> to vector<3x1x128xf32>
    %9 = vector.broadcast %8 : vector<3x1x128xf32> to vector<3x8x128xf32>
    %10 = vector.extract_strided_slice %0 {offsets = [0, 31, 0], sizes = [3, 1, 128], strides = [1, 1, 1]} : vector<3x32x128xf32> to vector<3x1x128xf32>
    %11 = vector.shape_cast %10 : vector<3x1x128xf32> to vector<3x1x128xf32>
    %12 = vector.broadcast %11 : vector<3x1x128xf32> to vector<3x8x128xf32>
    %13 = vector.broadcast %3 : f32 to vector<3x8x128xf32>
    %14 = arith.mulf %13, %9 : vector<3x8x128xf32>
    %cst = arith.constant 1.000000e+00 : f32
    %15 = arith.subf %cst, %3 : f32
    %c0_2 = arith.constant 0 : index
    %c0_3 = arith.constant 0 : index
    %c0_4 = arith.constant 0 : index
    %16 = vector.load %arg2[%c0_2, %c0_3, %c0_4] : memref<3x8x128xf32, #tpu.memory_space<vmem>>, vector<3x8x128xf32>
    %17 = vector.broadcast %15 : f32 to vector<3x8x128xf32>
    %18 = arith.mulf %17, %16 : vector<3x8x128xf32>
    %19 = arith.addf %14, %18 : vector<3x8x128xf32>
    %20 = vector.broadcast %6 : f32 to vector<3x8x128xf32>
    %21 = arith.mulf %20, %12 : vector<3x8x128xf32>
    %cst_5 = arith.constant 1.000000e+00 : f32
    %22 = arith.subf %cst_5, %6 : f32
    %c0_6 = arith.constant 0 : index
    %c0_7 = arith.constant 0 : index
    %c0_8 = arith.constant 0 : index
    %23 = vector.load %arg3[%c0_6, %c0_7, %c0_8] : memref<3x8x128xf32, #tpu.memory_space<vmem>>, vector<3x8x128xf32>
    %24 = vector.broadcast %22 : f32 to vector<3x8x128xf32>
    %25 = arith.mulf %24, %23 : vector<3x8x128xf32>
    %26 = arith.addf %21, %25 : vector<3x8x128xf32>
    %27 = tpu.concatenate %19, %0, %26 in 1 : vector<3x8x128xf32>, vector<3x32x128xf32>, vector<3x8x128xf32> -> vector<3x48x128xf32>
    %28 = vector.extract_strided_slice %27 {offsets = [0, 6, 0], sizes = [3, 32, 128], strides = [1, 1, 1]} : vector<3x48x128xf32> to vector<3x32x128xf32>
    %cst_9 = arith.constant 3.42560634E-6 : f32
    %29 = vector.broadcast %cst_9 : f32 to vector<3x32x128xf32>
    %30 = arith.mulf %28, %29 : vector<3x32x128xf32>
    %31 = vector.extract_strided_slice %27 {offsets = [0, 7, 0], sizes = [3, 32, 128], strides = [1, 1, 1]} : vector<3x48x128xf32> to vector<3x32x128xf32>
    %cst_10 = arith.constant 0.0403876156 : f32
    %32 = vector.broadcast %cst_10 : f32 to vector<3x32x128xf32>
    %33 = arith.mulf %31, %32 : vector<3x32x128xf32>
    %34 = arith.addf %30, %33 : vector<3x32x128xf32>
    %35 = vector.extract_strided_slice %27 {offsets = [0, 8, 0], sizes = [3, 32, 128], strides = [1, 1, 1]} : vector<3x48x128xf32> to vector<3x32x128xf32>
    %cst_11 = arith.constant 0.919217944 : f32
    %36 = vector.broadcast %cst_11 : f32 to vector<3x32x128xf32>
    %37 = arith.mulf %35, %36 : vector<3x32x128xf32>
    %38 = arith.addf %34, %37 : vector<3x32x128xf32>
    %39 = vector.extract_strided_slice %27 {offsets = [0, 9, 0], sizes = [3, 32, 128], strides = [1, 1, 1]} : vector<3x48x128xf32> to vector<3x32x128xf32>
    %cst_12 = arith.constant 0.0403876156 : f32
    %40 = vector.broadcast %cst_12 : f32 to vector<3x32x128xf32>
    %41 = arith.mulf %39, %40 : vector<3x32x128xf32>
    %42 = arith.addf %38, %41 : vector<3x32x128xf32>
    %43 = vector.extract_strided_slice %27 {offsets = [0, 10, 0], sizes = [3, 32, 128], strides = [1, 1, 1]} : vector<3x48x128xf32> to vector<3x32x128xf32>
    %cst_13 = arith.constant 3.42560634E-6 : f32
    %44 = vector.broadcast %cst_13 : f32 to vector<3x32x128xf32>
    %45 = arith.mulf %43, %44 : vector<3x32x128xf32>
    %46 = arith.addf %42, %45 : vector<3x32x128xf32>
    %47 = vector.extract_strided_slice %46 {offsets = [0, 0, 0], sizes = [3, 32, 1], strides = [1, 1, 1]} : vector<3x32x128xf32> to vector<3x32x1xf32>
    %48 = vector.shape_cast %47 : vector<3x32x1xf32> to vector<3x32x1xf32>
    %49 = vector.broadcast %48 : vector<3x32x1xf32> to vector<3x32x128xf32>
    %50 = vector.extract_strided_slice %46 {offsets = [0, 0, 127], sizes = [3, 32, 1], strides = [1, 1, 1]} : vector<3x32x128xf32> to vector<3x32x1xf32>
    %51 = vector.shape_cast %50 : vector<3x32x1xf32> to vector<3x32x1xf32>
    %52 = vector.broadcast %51 : vector<3x32x1xf32> to vector<3x32x128xf32>
    %53 = tpu.concatenate %49, %46, %52 in 2 : vector<3x32x128xf32>, vector<3x32x128xf32>, vector<3x32x128xf32> -> vector<3x32x384xf32>
    %54 = vector.extract_strided_slice %53 {offsets = [0, 0, 126], sizes = [3, 32, 128], strides = [1, 1, 1]} : vector<3x32x384xf32> to vector<3x32x128xf32>
    %cst_14 = arith.constant 3.42560634E-6 : f32
    %55 = vector.broadcast %cst_14 : f32 to vector<3x32x128xf32>
    %56 = arith.mulf %54, %55 : vector<3x32x128xf32>
    %57 = vector.extract_strided_slice %53 {offsets = [0, 0, 127], sizes = [3, 32, 128], strides = [1, 1, 1]} : vector<3x32x384xf32> to vector<3x32x128xf32>
    %cst_15 = arith.constant 0.0403876156 : f32
    %58 = vector.broadcast %cst_15 : f32 to vector<3x32x128xf32>
    %59 = arith.mulf %57, %58 : vector<3x32x128xf32>
    %60 = arith.addf %56, %59 : vector<3x32x128xf32>
    %61 = vector.extract_strided_slice %53 {offsets = [0, 0, 128], sizes = [3, 32, 128], strides = [1, 1, 1]} : vector<3x32x384xf32> to vector<3x32x128xf32>
    %cst_16 = arith.constant 0.919217944 : f32
    %62 = vector.broadcast %cst_16 : f32 to vector<3x32x128xf32>
    %63 = arith.mulf %61, %62 : vector<3x32x128xf32>
    %64 = arith.addf %60, %63 : vector<3x32x128xf32>
    %65 = vector.extract_strided_slice %53 {offsets = [0, 0, 129], sizes = [3, 32, 128], strides = [1, 1, 1]} : vector<3x32x384xf32> to vector<3x32x128xf32>
    %cst_17 = arith.constant 0.0403876156 : f32
    %66 = vector.broadcast %cst_17 : f32 to vector<3x32x128xf32>
    %67 = arith.mulf %65, %66 : vector<3x32x128xf32>
    %68 = arith.addf %64, %67 : vector<3x32x128xf32>
    %69 = vector.extract_strided_slice %53 {offsets = [0, 0, 130], sizes = [3, 32, 128], strides = [1, 1, 1]} : vector<3x32x384xf32> to vector<3x32x128xf32>
    %cst_18 = arith.constant 3.42560634E-6 : f32
    %70 = vector.broadcast %cst_18 : f32 to vector<3x32x128xf32>
    %71 = arith.mulf %69, %70 : vector<3x32x128xf32>
    %72 = arith.addf %68, %71 : vector<3x32x128xf32>
    %73 = vector.extract_strided_slice %72 {offsets = [0, 0, 0], sizes = [1, 32, 128], strides = [1, 1, 1]} : vector<3x32x128xf32> to vector<1x32x128xf32>
    %74 = vector.shape_cast %73 : vector<1x32x128xf32> to vector<32x128xf32>
    %cst_19 = arith.constant 0.959608972 : f32
    %75 = vector.broadcast %cst_19 : f32 to vector<32x128xf32>
    %76 = arith.mulf %74, %75 : vector<32x128xf32>
    %77 = vector.extract_strided_slice %72 {offsets = [1, 0, 0], sizes = [1, 32, 128], strides = [1, 1, 1]} : vector<3x32x128xf32> to vector<1x32x128xf32>
    %78 = vector.shape_cast %77 : vector<1x32x128xf32> to vector<32x128xf32>
    %cst_20 = arith.constant 0.0403876156 : f32
    %79 = vector.broadcast %cst_20 : f32 to vector<32x128xf32>
    %80 = arith.mulf %78, %79 : vector<32x128xf32>
    %81 = arith.addf %76, %80 : vector<32x128xf32>
    %82 = vector.extract_strided_slice %72 {offsets = [2, 0, 0], sizes = [1, 32, 128], strides = [1, 1, 1]} : vector<3x32x128xf32> to vector<1x32x128xf32>
    %83 = vector.shape_cast %82 : vector<1x32x128xf32> to vector<32x128xf32>
    %cst_21 = arith.constant 3.42560634E-6 : f32
    %84 = vector.broadcast %cst_21 : f32 to vector<32x128xf32>
    %85 = arith.mulf %83, %84 : vector<32x128xf32>
    %86 = arith.addf %81, %85 : vector<32x128xf32>
    %cst_22 = arith.constant 0.000000e+00 : f32
    %cst_23 = arith.constant 1.000000e+00 : f32
    %87 = vector.broadcast %cst_22 : f32 to vector<32x128xf32>
    %88 = arith.maximumf %87, %86 : vector<32x128xf32>
    %89 = vector.broadcast %cst_23 : f32 to vector<32x128xf32>
    %90 = arith.minimumf %89, %88 : vector<32x128xf32>
    %c0_24 = arith.constant 0 : index
    %c0_25 = arith.constant 0 : index
    %c0_26 = arith.constant 0 : index
    %91 = vector.load %arg4[%c0_24, %c0_25, %c0_26] : memref<3x32x128xf32, #tpu.memory_space<vmem>>, vector<1x32x128xf32>
    %92 = vector.shape_cast %91 : vector<1x32x128xf32> to vector<32x128xf32>
    %93 = vector.shape_cast %90 : vector<32x128xf32> to vector<1x32x128xf32>
    tpu.vector_store %arg4[%c0_24, %c0_25, %c0_26], %93 {strides = array<i32>} : memref<3x32x128xf32, #tpu.memory_space<vmem>>, vector<1x32x128xf32>,
    %94 = vector.extract_strided_slice %72 {offsets = [0, 0, 0], sizes = [1, 32, 128], strides = [1, 1, 1]} : vector<3x32x128xf32> to vector<1x32x128xf32>
    %95 = vector.shape_cast %94 : vector<1x32x128xf32> to vector<32x128xf32>
    %cst_27 = arith.constant 0.0403910428 : f32
    %96 = vector.broadcast %cst_27 : f32 to vector<32x128xf32>
    %97 = arith.mulf %95, %96 : vector<32x128xf32>
    %98 = vector.extract_strided_slice %72 {offsets = [1, 0, 0], sizes = [1, 32, 128], strides = [1, 1, 1]} : vector<3x32x128xf32> to vector<1x32x128xf32>
    %99 = vector.shape_cast %98 : vector<1x32x128xf32> to vector<32x128xf32>
    %cst_28 = arith.constant 0.919217944 : f32
    %100 = vector.broadcast %cst_28 : f32 to vector<32x128xf32>
    %101 = arith.mulf %99, %100 : vector<32x128xf32>
    %102 = arith.addf %97, %101 : vector<32x128xf32>
    %103 = vector.extract_strided_slice %72 {offsets = [2, 0, 0], sizes = [1, 32, 128], strides = [1, 1, 1]} : vector<3x32x128xf32> to vector<1x32x128xf32>
    %104 = vector.shape_cast %103 : vector<1x32x128xf32> to vector<32x128xf32>
    %cst_29 = arith.constant 0.0403910428 : f32
    %105 = vector.broadcast %cst_29 : f32 to vector<32x128xf32>
    %106 = arith.mulf %104, %105 : vector<32x128xf32>
    %107 = arith.addf %102, %106 : vector<32x128xf32>
    %cst_30 = arith.constant 0.000000e+00 : f32
    %cst_31 = arith.constant 1.000000e+00 : f32
    %108 = vector.broadcast %cst_30 : f32 to vector<32x128xf32>
    %109 = arith.maximumf %108, %107 : vector<32x128xf32>
    %110 = vector.broadcast %cst_31 : f32 to vector<32x128xf32>
    %111 = arith.minimumf %110, %109 : vector<32x128xf32>
    %c1 = arith.constant 1 : index
    %c0_32 = arith.constant 0 : index
    %c0_33 = arith.constant 0 : index
    %112 = vector.load %arg4[%c1, %c0_32, %c0_33] : memref<3x32x128xf32, #tpu.memory_space<vmem>>, vector<1x32x128xf32>
    %113 = vector.shape_cast %112 : vector<1x32x128xf32> to vector<32x128xf32>
    %114 = vector.shape_cast %111 : vector<32x128xf32> to vector<1x32x128xf32>
    tpu.vector_store %arg4[%c1, %c0_32, %c0_33], %114 {strides = array<i32>} : memref<3x32x128xf32, #tpu.memory_space<vmem>>, vector<1x32x128xf32>,
    %115 = vector.extract_strided_slice %72 {offsets = [0, 0, 0], sizes = [1, 32, 128], strides = [1, 1, 1]} : vector<3x32x128xf32> to vector<1x32x128xf32>
    %116 = vector.shape_cast %115 : vector<1x32x128xf32> to vector<32x128xf32>
    %cst_34 = arith.constant 3.42560634E-6 : f32
    %117 = vector.broadcast %cst_34 : f32 to vector<32x128xf32>
    %118 = arith.mulf %116, %117 : vector<32x128xf32>
    %119 = vector.extract_strided_slice %72 {offsets = [1, 0, 0], sizes = [1, 32, 128], strides = [1, 1, 1]} : vector<3x32x128xf32> to vector<1x32x128xf32>
    %120 = vector.shape_cast %119 : vector<1x32x128xf32> to vector<32x128xf32>
    %cst_35 = arith.constant 0.0403876156 : f32
    %121 = vector.broadcast %cst_35 : f32 to vector<32x128xf32>
    %122 = arith.mulf %120, %121 : vector<32x128xf32>
    %123 = arith.addf %118, %122 : vector<32x128xf32>
    %124 = vector.extract_strided_slice %72 {offsets = [2, 0, 0], sizes = [1, 32, 128], strides = [1, 1, 1]} : vector<3x32x128xf32> to vector<1x32x128xf32>
    %125 = vector.shape_cast %124 : vector<1x32x128xf32> to vector<32x128xf32>
    %cst_36 = arith.constant 0.959608972 : f32
    %126 = vector.broadcast %cst_36 : f32 to vector<32x128xf32>
    %127 = arith.mulf %125, %126 : vector<32x128xf32>
    %128 = arith.addf %123, %127 : vector<32x128xf32>
    %cst_37 = arith.constant 0.000000e+00 : f32
    %cst_38 = arith.constant 1.000000e+00 : f32
    %129 = vector.broadcast %cst_37 : f32 to vector<32x128xf32>
    %130 = arith.maximumf %129, %128 : vector<32x128xf32>
    %131 = vector.broadcast %cst_38 : f32 to vector<32x128xf32>
    %132 = arith.minimumf %131, %130 : vector<32x128xf32>
    %c2 = arith.constant 2 : index
    %c0_39 = arith.constant 0 : index
    %c0_40 = arith.constant 0 : index
    %133 = vector.load %arg4[%c2, %c0_39, %c0_40] : memref<3x32x128xf32, #tpu.memory_space<vmem>>, vector<1x32x128xf32>
    %134 = vector.shape_cast %133 : vector<1x32x128xf32> to vector<32x128xf32>
    %135 = vector.shape_cast %132 : vector<32x128xf32> to vector<1x32x128xf32>
    tpu.vector_store %arg4[%c2, %c0_39, %c0_40], %135 {strides = array<i32>} : memref<3x32x128xf32, #tpu.memory_space<vmem>>, vector<1x32x128xf32>,
    return
  }
  func.func @transform_0(%arg0: i32) -> (i32, i32, i32) {
    %c0_i32 = arith.constant 0 : i32
    %c0_i32_0 = arith.constant 0 : i32
    %c0_i32_1 = arith.constant 0 : i32
    return %c0_i32, %arg0, %c0_i32_0 : i32, i32, i32
  }
  func.func @transform_1(%arg0: i32) -> (i32, i32, i32) {
    %c4_i32 = arith.constant 4 : i32
    %0 = arith.muli %arg0, %c4_i32 : i32
    %c1_i32 = arith.constant 1 : i32
    %1 = arith.subi %0, %c1_i32 : i32
    %c0_i32 = arith.constant 0 : i32
    %2 = arith.maxsi %1, %c0_i32 : i32
    %c0_i32_0 = arith.constant 0 : i32
    %c0_i32_1 = arith.constant 0 : i32
    %c0_i32_2 = arith.constant 0 : i32
    return %c0_i32_0, %2, %c0_i32_1 : i32, i32, i32
  }
  func.func @transform_2(%arg0: i32) -> (i32, i32, i32) {
    %c1_i32 = arith.constant 1 : i32
    %0 = arith.addi %arg0, %c1_i32 : i32
    %c4_i32 = arith.constant 4 : i32
    %1 = arith.muli %0, %c4_i32 : i32
    %c7_i32 = arith.constant 7 : i32
    %2 = arith.minsi %1, %c7_i32 : i32
    %c0_i32 = arith.constant 0 : i32
    %c0_i32_0 = arith.constant 0 : i32
    %c0_i32_1 = arith.constant 0 : i32
    return %c0_i32, %2, %c0_i32_0 : i32, i32, i32
  }
  func.func @transform_3(%arg0: i32) -> (i32, i32, i32) {
    %c0_i32 = arith.constant 0 : i32
    %c0_i32_0 = arith.constant 0 : i32
    %c0_i32_1 = arith.constant 0 : i32
    return %c0_i32, %arg0, %c0_i32_0 : i32, i32, i32
  }
}

</mosaic_0001>

<llo_original>
// kernel: glass_blur.2
$region0: #{glass_blur.2}
  #allocation0 [shape = 'u32[]', space=smem, size = 0x4, offset = 0x4, fixed_abs, tag = 'smem constant byte address 0x4 - core index']
  #allocation1 [shape = 'u32[144,128]{1,0:T(1,128)}', space=vmem, size = 0x12000, scoped, tag = 'internal scratch']
  #allocation8 [shape = 's32[]', space=sflag, size = 0x4, offset = 0, fixed_abs, tag = 'sflag constant byte address 0x0 - dummy sync flag']
  %s0 = inlined_call_operand.hbm [shape: f32[3,64,128], index: 0, kind: input, shape index: {}, may-alias: {0,1,2}]
  %s1 = inlined_call_operand.hbm [shape: f32[3,64,128], index: 1, kind: input, shape index: {}, may-alias: {0,1,2}]
  %s2 = inlined_call_operand.hbm [shape: f32[3,64,128], index: 2, kind: input, shape index: {}, may-alias: {0,1,2}]
  %s3 = inlined_call_operand.vmem [shape: f32[3,64,128], index: 3, kind: output, shape index: {}]
  %s4 = sld [smem:[#allocation0]]
  $region91: #{glass_blur.2} parent=0
    _
  %s6 = ssub.s32 1, %s4
  %s7 = scalar_select 0, %s6, %s4
  $region1: #{glass_blur.2} parent=0
    #allocation2 [shape = 'u8[98304]{0}', space=vmem, size = 0x18000, scoped, tag = 'input window, operand 0']
    #allocation3 [shape = 's32[2]{0}', space=sflag, size = 0x8, scoped, tag = 'scoped memory for glass_blur.2']
    #allocation4 [shape = 'u8[24576]{0}', space=vmem, size = 0x6000, scoped, tag = 'input window, operand 1']
    #allocation5 [shape = 's32[2]{0}', space=sflag, size = 0x8, scoped, tag = 'scoped memory for glass_blur.2']
    #allocation6 [shape = 'u8[24576]{0}', space=vmem, size = 0x6000, scoped, tag = 'input window, operand 2']
    #allocation7 [shape = 'u8[98304]{0}', space=vmem, size = 0x18000, scoped, tag = 'output window, operand 0']
    %8 = vsyncpa [#allocation3], 0
    %s9 = scalar_lea.sflag [#allocation3], 1
    %10 = vsyncpa %s9, 0
    %11 = vsyncpa [#allocation5], 0
    %s12 = scalar_lea.sflag [#allocation5], 1
    %13 = vsyncpa %s12, 0
    loop: start=0, step=1, limit=4
    $region2: #{glass_blur.2} parent=1 // loop_pre_header
      _
    $region3: #{glass_blur.2} parent=1 // loop_header
      %s15 = sphi 0, %s19
      %p16 = scmp.ge.s32.totalorder %s15, 4
      %s25 = sphi 0, %s27
      %s28 = sphi 0, %s25
      %s29 = sphi 0, %s28
      %s45 = sphi 0, %s29
      %s59 = sphi 0, %s61
      %s62 = sphi 0, %s59
      %s63 = sphi 0, %s62
      %s79 = sphi 0, %s63
      %s93 = sphi 0, %s95
      %s96 = sphi 0, %s93
      %s97 = sphi 0, %s96
      %s113 = sphi 0, %s97
      %s119 = sphi 0, %s121
      %s122 = sphi 0, %s119
      %s123 = sphi 0, %s122
      %s139 = sphi 0, %s123
    $region4: #{glass_blur.2} parent=1 // loop_header_branch
      %18 = sbr.rel (%p16) target = $region8
    $region5: #{glass_blur.2} parent=1 // loop_body
      %s20 = ssub.s32 %s15, 1
      %s21 = ssub.s32 %s15, 2
      %s22 = sadd.s32 %s15, 1
      %s23 = ssub.s32 %s15, %s22
      %p24 = scmp.eq.s32.totalorder %s23, 0
      %s26 = sadd.s32 %s25, 1
      %s27 = scalar_select %p24, %s25, %s26
      %p30 = pneg %p24
      %p31 = scmp.eq.s32.totalorder %s15, 1
      %p32 = por %p30, %p31
      %p33 = scmp.ne.s32.totalorder %s25, %s28
      %p34 = scmp.eq.s32.totalorder %s15, 0
      %p35 = por %p33, %p34
      %p36 = scmp.ne.s32.totalorder %s25, %s28
      %p37 = scmp.eq.s32.totalorder %s20, 1
      %p38 = por %p36, %p37
      %p39 = scmp.ne.s32.totalorder %s28, %s29
      %p40 = scmp.eq.s32.totalorder %s20, 0
      %p41 = por %p39, %p40
      %p42 = scmp.ne.s32.totalorder %s28, %s29
      %p43 = scmp.eq.s32.totalorder %s21, 1
      %p44 = por %p42, %p43
      %p46 = scmp.ne.s32.totalorder %s29, %s45
      %p47 = scmp.eq.s32.totalorder %s21, 0
      %p48 = por %p46, %p47
      %s49 = smul.u32 %s15, 4
      %s50 = ssub.s32 %s49, 1
      %p51 = scmp.gt.s32.totalorder %s50, 0
      %s52 = scalar_select %p51, %s50, 0
      %s53 = smul.u32 %s22, 4
      %s54 = ssub.s32 %s53, 1
      %p55 = scmp.gt.s32.totalorder %s54, 0
      %s56 = scalar_select %p55, %s54, 0
      %s57 = ssub.s32 %s52, %s56
      %p58 = scmp.eq.s32.totalorder %s57, 0
      %s60 = sadd.s32 %s59, 1
      %s61 = scalar_select %p58, %s59, %s60
      %p64 = pneg %p58
      %p65 = scmp.eq.s32.totalorder %s15, 1
      %p66 = por %p64, %p65
      %p67 = scmp.ne.s32.totalorder %s59, %s62
      %p68 = scmp.eq.s32.totalorder %s15, 0
      %p69 = por %p67, %p68
      %p70 = scmp.ne.s32.totalorder %s59, %s62
      %p71 = scmp.eq.s32.totalorder %s20, 1
      %p72 = por %p70, %p71
      %p73 = scmp.ne.s32.totalorder %s62, %s63
      %p74 = scmp.eq.s32.totalorder %s20, 0
      %p75 = por %p73, %p74
      %p76 = scmp.ne.s32.totalorder %s62, %s63
      %p77 = scmp.eq.s32.totalorder %s21, 1
      %p78 = por %p76, %p77
      %p80 = scmp.ne.s32.totalorder %s63, %s79
      %p81 = scmp.eq.s32.totalorder %s21, 0
      %p82 = por %p80, %p81
      %s83 = sadd.s32 %s15, 1
      %s84 = smul.u32 %s83, 4
      %p85 = scmp.lt.s32.totalorder %s84, 7
      %s86 = scalar_select %p85, %s84, 7
      %s87 = sadd.s32 %s22, 1
      %s88 = smul.u32 %s87, 4
      %p89 = scmp.lt.s32.totalorder %s88, 7
      %s90 = scalar_select %p89, %s88, 7
      %s91 = ssub.s32 %s86, %s90
      %p92 = scmp.eq.s32.totalorder %s91, 0
      %s94 = sadd.s32 %s93, 1
      %s95 = scalar_select %p92, %s93, %s94
      %p98 = pneg %p92
      %p99 = scmp.eq.s32.totalorder %s15, 1
      %p100 = por %p98, %p99
      %p101 = scmp.ne.s32.totalorder %s93, %s96
      %p102 = scmp.eq.s32.totalorder %s15, 0
      %p103 = por %p101, %p102
      %p104 = scmp.ne.s32.totalorder %s93, %s96
      %p105 = scmp.eq.s32.totalorder %s20, 1
      %p106 = por %p104, %p105
      %p107 = scmp.ne.s32.totalorder %s96, %s97
      %p108 = scmp.eq.s32.totalorder %s20, 0
      %p109 = por %p107, %p108
      %p110 = scmp.ne.s32.totalorder %s96, %s97
      %p111 = scmp.eq.s32.totalorder %s21, 1
      %p112 = por %p110, %p111
      %p114 = scmp.ne.s32.totalorder %s97, %s113
      %p115 = scmp.eq.s32.totalorder %s21, 0
      %p116 = por %p114, %p115
      %s117 = ssub.s32 %s15, %s22
      %p118 = scmp.eq.s32.totalorder %s117, 0
      %s120 = sadd.s32 %s119, 1
      %s121 = scalar_select %p118, %s119, %s120
      %p124 = pneg %p118
      %p125 = scmp.eq.s32.totalorder %s15, 1
      %p126 = por %p124, %p125
      %p127 = scmp.ne.s32.totalorder %s119, %s122
      %p128 = scmp.eq.s32.totalorder %s15, 0
      %p129 = por %p127, %p128
      %p130 = scmp.ne.s32.totalorder %s119, %s122
      %p131 = scmp.eq.s32.totalorder %s20, 1
      %p132 = por %p130, %p131
      %p133 = scmp.ne.s32.totalorder %s122, %s123
      %p134 = scmp.eq.s32.totalorder %s20, 0
      %p135 = por %p133, %p134
      %p136 = scmp.ne.s32.totalorder %s122, %s123
      %p137 = scmp.eq.s32.totalorder %s21, 1
      %p138 = por %p136, %p137
      %p140 = scmp.ne.s32.totalorder %s123, %s139
      %p141 = scmp.eq.s32.totalorder %s21, 0
      %p142 = por %p140, %p141
      %p143 = scmp.le.s32.totalorder 1, %s15
      %p144 = scmp.lt.s32.totalorder %s15, 3
      %p145 = pnand %p143, %p144
      %p146 = pneg %p145
      // Predicated region
      $region9: #{glass_blur.2} parent=5 // pred_check
        _
      $region10: #{glass_blur.2} parent=5 // pred_check_branch
        %148 = sbr.rel (%p145) target = $region12
      $region11: #{glass_blur.2} parent=5 // pred_region
        %s149 = ssub.s32 %s15, 1
      $region12: #{glass_blur.2} parent=5 // pred_fallthru
        _
      %p150 = scmp.lt.s32.totalorder %s15, 2
      // Predicated region
      $region13: #{glass_blur.2} parent=5 // pred_check
        %p151 = pneg %p150
      $region14: #{glass_blur.2} parent=5 // pred_check_branch
        %153 = sbr.rel (%p151) target = $region16
      $region15: #{glass_blur.2} parent=5 // pred_region
        // Predicated region
        $region17: #{glass_blur.2} parent=15 // pred_check
          %p154 = pneg %p35
        $region18: #{glass_blur.2} parent=15 // pred_check_branch
          %156 = sbr.rel (%p154) target = $region20
        $region19: #{glass_blur.2} parent=15 // pred_region
          #allocation9 [shape = 'u32[6]{0}', space=smem, size = 0x18, scoped, tag = 'DMA stride descriptor']
          %s157 = sand.u32 %s25, 1
          %s158 = scalar_lea.sflag [#allocation3], %s157
          %s159 = sand.u32 %s25, 1
          %s160 = smul.addr %s159, 96
          %s161 = scalar_lea.vmem [#allocation2], %s160
          %s162 = smul.u32 4, %s15
          %s164 = ssub.s32 1536, 1536
          %165 = vsyncadd %s158, %s164
          %s166 = smul.addr %s162, 128
          %s167 = scalar_lea.hbm %s0, %s166
          %s169 = sshll.u32 1, 14
          %s170 = sxor.u32 4294967295, %s169
          %s172 = sld [smem:[#allocation0]]
          %s173 = sadd.s32 2, %s172
          %s175 = sshll.u32 7, 26
          %s176 = sxor.u32 4294967295, %s175
          %s177 = sand.u32 0, %s176
          %s178 = sshll.u32 %s173, 26
          %s179 = sor.u32 %s177, %s178
          %s180 = sshll.u32 %s161, 4
          %s181 = int_to_ptr.vmem [resolvable:$true] %s180
          %187 = sst [smem:[#allocation9]] 1024
          %s188 = scalar_lea.smem [#allocation9], 1
          %189 = sst [smem:[%s188]] 512
          %s190 = scalar_lea.smem [#allocation9], 2
          %191 = sst [smem:[%s190]] 4
          %s192 = scalar_lea.smem [#allocation9], 3
          %193 = sst [smem:[%s192]] 128
          %s194 = scalar_lea.smem [#allocation9], 4
          %195 = sst [smem:[%s194]] 128
          %s196 = scalar_lea.smem [#allocation9], 5
          %197 = sst [smem:[%s196]] 8
          %199 = dma.general %s167, 1536, %s181, %s158, [#allocation8], [#allocation9], %s179, 0
        $region20: #{glass_blur.2} parent=15 // pred_fallthru
          _
        // Predicated region
        $region21: #{glass_blur.2} parent=15 // pred_check
          %p200 = pneg %p69
        $region22: #{glass_blur.2} parent=15 // pred_check_branch
          %202 = sbr.rel (%p200) target = $region24
        $region23: #{glass_blur.2} parent=15 // pred_region
          %s203 = sand.u32 %s15, 1
          %s204 = scalar_lea.sflag [#allocation5], %s203
          %s205 = sand.u32 %s59, 1
          %s206 = smul.addr %s205, 24
          %s207 = scalar_lea.vmem [#allocation4], %s206
          %s208 = smul.u32 %s15, 4
          %s209 = ssub.s32 %s208, 1
          %p210 = scmp.gt.s32.totalorder %s209, 0
          %s211 = scalar_select %p210, %s209, 0
          %s213 = ssub.s32 384, 384
          %214 = vsyncadd %s204, %s213
          %s215 = smul.addr %s211, 128
          %s216 = scalar_lea.hbm %s1, %s215
          %s217 = sshll.u32 %s207, 4
          %s218 = int_to_ptr.vmem [resolvable:$true] %s217
          %223 = dma.hbm_to_vmem [thread:$0]  %s216, 384, %s218, %s204, 1024, 128, 8
        $region24: #{glass_blur.2} parent=15 // pred_fallthru
          _
        // Predicated region
        $region25: #{glass_blur.2} parent=15 // pred_check
          %p224 = pneg %p103
        $region26: #{glass_blur.2} parent=15 // pred_check_branch
          %226 = sbr.rel (%p224) target = $region28
        $region27: #{glass_blur.2} parent=15 // pred_region
          %s227 = sand.u32 %s15, 1
          %s228 = scalar_lea.sflag [#allocation5], %s227
          %s229 = sand.u32 %s93, 1
          %s230 = smul.addr %s229, 24
          %s231 = scalar_lea.vmem [#allocation6], %s230
          %s232 = sadd.s32 %s15, 1
          %s233 = smul.u32 %s232, 4
          %p234 = scmp.lt.s32.totalorder %s233, 7
          %s235 = scalar_select %p234, %s233, 7
          %s237 = ssub.s32 384, 384
          %238 = vsyncadd %s228, %s237
          %s239 = smul.addr %s235, 128
          %s240 = scalar_lea.hbm %s2, %s239
          %s241 = sshll.u32 %s231, 4
          %s242 = int_to_ptr.vmem [resolvable:$true] %s241
          %247 = dma.hbm_to_vmem [thread:$0]  %s240, 384, %s242, %s228, 1024, 128, 8
        $region28: #{glass_blur.2} parent=15 // pred_fallthru
          _
      $region16: #{glass_blur.2} parent=5 // pred_fallthru
        _
      %p248 = scmp.le.s32.totalorder 1, %s15
      %p249 = scmp.lt.s32.totalorder %s15, 3
      %p250 = pnand %p248, %p249
      %p251 = pneg %p250
      // Predicated region
      $region29: #{glass_blur.2} parent=5 // pred_check
        _
      $region30: #{glass_blur.2} parent=5 // pred_check_branch
        %253 = sbr.rel (%p250) target = $region32
      $region31: #{glass_blur.2} parent=5 // pred_region
        %s254 = ssub.s32 %s15, 1
        %s255 = sand.u32 %s28, 1
        %s256 = scalar_lea.sflag [#allocation3], %s255
        %s257 = sand.u32 %s28, 1
        %s258 = smul.addr %s257, 96
        %s259 = scalar_lea.vmem [#allocation2], %s258
        // Predicated region
        $region33: #{glass_blur.2} parent=31 // pred_check
          %p260 = pneg %p41
        $region34: #{glass_blur.2} parent=31 // pred_check_branch
          %262 = sbr.rel (%p260) target = $region36
        $region35: #{glass_blur.2} parent=31 // pred_region
          %263 = dma.done %s256, 1536
        $region36: #{glass_blur.2} parent=31 // pred_fallthru
          _
        %s264 = sand.u32 %s20, 1
        %s265 = scalar_lea.sflag [#allocation5], %s264
        %s266 = sand.u32 %s62, 1
        %s267 = smul.addr %s266, 24
        %s268 = scalar_lea.vmem [#allocation4], %s267
        // Predicated region
        $region37: #{glass_blur.2} parent=31 // pred_check
          %p269 = pneg %p75
        $region38: #{glass_blur.2} parent=31 // pred_check_branch
          %271 = sbr.rel (%p269) target = $region40
        $region39: #{glass_blur.2} parent=31 // pred_region
          %272 = dma.done %s265, 384
        $region40: #{glass_blur.2} parent=31 // pred_fallthru
          _
        %s273 = sand.u32 %s20, 1
        %s274 = scalar_lea.sflag [#allocation5], %s273
        %s275 = sand.u32 %s96, 1
        %s276 = smul.addr %s275, 24
        %s277 = scalar_lea.vmem [#allocation6], %s276
        // Predicated region
        $region41: #{glass_blur.2} parent=31 // pred_check
          %p278 = pneg %p109
        $region42: #{glass_blur.2} parent=31 // pred_check_branch
          %280 = sbr.rel (%p278) target = $region44
        $region43: #{glass_blur.2} parent=31 // pred_region
          %281 = dma.done %s274, 384
        $region44: #{glass_blur.2} parent=31 // pred_fallthru
          _
        %s282 = sand.u32 %s28, 1
        %s283 = scalar_lea.sflag [#allocation3], %s282
        %s284 = sand.u32 %s28, 1
        %s285 = smul.addr %s284, 96
        %s286 = scalar_lea.vmem [#allocation2], %s285
        %p287 = pneg %p41
        %p288 = pneg %p38
        %s289 = sand.u32 %s20, 1
        %s290 = scalar_lea.sflag [#allocation5], %s289
        %s291 = sand.u32 %s62, 1
        %s292 = smul.addr %s291, 24
        %s293 = scalar_lea.vmem [#allocation4], %s292
        %p294 = pneg %p75
        %p295 = pneg %p72
        %s296 = sand.u32 %s20, 1
        %s297 = scalar_lea.sflag [#allocation5], %s296
        %s298 = sand.u32 %s96, 1
        %s299 = smul.addr %s298, 24
        %s300 = scalar_lea.vmem [#allocation6], %s299
        %p301 = pneg %p109
        %p302 = pneg %p106
        %p303 = pneg %p135
        %p304 = pneg %p132
        %s305 = sand.u32 %s122, 1
        %s306 = sand.u32 %s122, 1
        %s307 = smul.addr %s306, 96
        %s308 = scalar_lea.vmem [#allocation7], %s307
        %s309 = smul.u32 4, %s20
        %s310 = smul.u32 %s20, 4
        %s311 = ssub.s32 %s310, 1
        %p312 = scmp.gt.s32.totalorder %s311, 0
        %s313 = scalar_select %p312, %s311, 0
        %s314 = sadd.s32 %s20, 1
        %s315 = smul.u32 %s314, 4
        %p316 = scmp.lt.s32.totalorder %s315, 7
        %s317 = scalar_select %p316, %s315, 7
        %s318 = smul.u32 4, %s20
        %v319 = vld [vmem:[%s259] sm:$0xff]
        %v320 = vld [vmem:[%s259 + $0x8] sm:$0xff]
        %v321 = vld [vmem:[%s259 + $0x10] sm:$0xff]
        %v322 = vld [vmem:[%s259 + $0x18] sm:$0xff]
        %v323 = vld [vmem:[%s259 + $0x20] sm:$0xff]
        %v324 = vld [vmem:[%s259 + $0x28] sm:$0xff]
        %v325 = vld [vmem:[%s259 + $0x30] sm:$0xff]
        %v326 = vld [vmem:[%s259 + $0x38] sm:$0xff]
        %v327 = vld [vmem:[%s259 + $0x40] sm:$0xff]
        %v328 = vld [vmem:[%s259 + $0x48] sm:$0xff]
        %v329 = vld [vmem:[%s259 + $0x50] sm:$0xff]
        %v330 = vld [vmem:[%s259 + $0x58] sm:$0xff]
        %p331 = scmp.eq.s32.totalorder %s20, 0
        %s332 = scalar_select %p331, 1, 0
        %s333 = scvt.s32.f32 %s332
        %p334 = scmp.eq.s32.totalorder %s20, 1
        %s335 = scalar_select %p334, 1, 0
        %s336 = scvt.s32.f32 %s335
        %v337 = vlaneseq
        %v338 = vshrl.u32 %v337, 7
        %v339 = vsub.s32 0, %v338
        %v340 = vrot.slane %v319, %v339
        %v341 = vlaneseq
        %v342 = vshrl.u32 %v341, 7
        %v343 = vsub.s32 0, %v342
        %v344 = vrot.slane %v323, %v343
        %v345 = vlaneseq
        %v346 = vshrl.u32 %v345, 7
        %v347 = vsub.s32 0, %v346
        %v348 = vrot.slane %v327, %v347
        %v349 = vlaneseq
        %v350 = vshrl.u32 %v349, 7
        %v351 = vsub.s32 7, %v350
        %v352 = vrot.slane %v322, %v351
        %v353 = vlaneseq
        %v354 = vshrl.u32 %v353, 7
        %v355 = vsub.s32 7, %v354
        %v356 = vrot.slane %v326, %v355
        %v357 = vlaneseq
        %v358 = vshrl.u32 %v357, 7
        %v359 = vsub.s32 7, %v358
        %v360 = vrot.slane %v330, %v359
        %v361 = vstv %s333
        %v362 = vmul.f32 %v361, %v340
        %v363 = vmul.f32 %v361, %v344
        %v364 = vmul.f32 %v361, %v348
        %s365 = ssub.f32 1.0, %s333
        %v366 = vld [vmem:[%s268] sm:$0xff]
        %v367 = vld [vmem:[%s268 + $0x8] sm:$0xff]
        %v368 = vld [vmem:[%s268 + $0x10] sm:$0xff]
        %v369 = vstv %s365
        %v370 = vmul.f32 %v369, %v366
        %v371 = vmul.f32 %v369, %v367
        %v372 = vmul.f32 %v369, %v368
        %v373 = vadd.f32 %v362, %v370
        %v374 = vadd.f32 %v363, %v371
        %v375 = vadd.f32 %v364, %v372
        %v376 = vstv %s336
        %v377 = vmul.f32 %v376, %v352
        %v378 = vmul.f32 %v376, %v356
        %v379 = vmul.f32 %v376, %v360
        %s380 = ssub.f32 1.0, %s336
        %v381 = vld [vmem:[%s277] sm:$0xff]
        %v382 = vld [vmem:[%s277 + $0x8] sm:$0xff]
        %v383 = vld [vmem:[%s277 + $0x10] sm:$0xff]
        %v384 = vstv %s380
        %v385 = vmul.f32 %v384, %v381
        %v386 = vmul.f32 %v384, %v382
        %v387 = vmul.f32 %v384, %v383
        %v388 = vadd.f32 %v377, %v385
        %v389 = vadd.f32 %v378, %v386
        %v390 = vadd.f32 %v379, %v387
        %v391 = vmul.f32 %v373, 3.4256063e-06
        %v392 = vmul.f32 %v319, 3.4256063e-06
        %v393 = vmul.f32 %v320, 3.4256063e-06
        %v394 = vmul.f32 %v321, 3.4256063e-06
        %v395 = vmul.f32 %v322, 3.4256063e-06
        %v396 = vmul.f32 %v374, 3.4256063e-06
        %v397 = vmul.f32 %v323, 3.4256063e-06
        %v398 = vmul.f32 %v324, 3.4256063e-06
        %v399 = vmul.f32 %v325, 3.4256063e-06
        %v400 = vmul.f32 %v326, 3.4256063e-06
        %v401 = vmul.f32 %v375, 3.4256063e-06
        %v402 = vmul.f32 %v327, 3.4256063e-06
        %v403 = vmul.f32 %v328, 3.4256063e-06
        %v404 = vmul.f32 %v329, 3.4256063e-06
        %v405 = vmul.f32 %v330, 3.4256063e-06
        %v406 = vmul.f32 %v373, 0.040387616
        %v407 = vmul.f32 %v319, 0.040387616
        %v408 = vmul.f32 %v320, 0.040387616
        %v409 = vmul.f32 %v321, 0.040387616
        %v410 = vmul.f32 %v322, 0.040387616
        %v411 = vmul.f32 %v374, 0.040387616
        %v412 = vmul.f32 %v323, 0.040387616
        %v413 = vmul.f32 %v324, 0.040387616
        %v414 = vmul.f32 %v325, 0.040387616
        %v415 = vmul.f32 %v326, 0.040387616
        %v416 = vmul.f32 %v375, 0.040387616
        %v417 = vmul.f32 %v327, 0.040387616
        %v418 = vmul.f32 %v328, 0.040387616
        %v419 = vmul.f32 %v329, 0.040387616
        %v420 = vmul.f32 %v330, 0.040387616
        %vm436 = vcmask 1046528
        %v437 = vrot.slane %v406, 1
        %v438 = vrot.slane %v407, 1
        %v439 = vsel %vm436, %v437, %v438
        %v440 = vrot.slane %v408, 1
        %v441 = vsel %vm436, %v438, %v440
        %v442 = vrot.slane %v409, 1
        %v443 = vsel %vm436, %v440, %v442
        %v444 = vrot.slane %v410, 1
        %v445 = vsel %vm436, %v442, %v444
        %v446 = vrot.slane %v411, 1
        %v447 = vrot.slane %v412, 1
        %v448 = vsel %vm436, %v446, %v447
        %v449 = vrot.slane %v413, 1
        %v450 = vsel %vm436, %v447, %v449
        %v451 = vrot.slane %v414, 1
        %v452 = vsel %vm436, %v449, %v451
        %v453 = vrot.slane %v415, 1
        %v454 = vsel %vm436, %v451, %v453
        %v455 = vrot.slane %v416, 1
        %v456 = vrot.slane %v417, 1
        %v457 = vsel %vm436, %v455, %v456
        %v458 = vrot.slane %v418, 1
        %v459 = vsel %vm436, %v456, %v458
        %v460 = vrot.slane %v419, 1
        %v461 = vsel %vm436, %v458, %v460
        %v462 = vrot.slane %v420, 1
        %v463 = vsel %vm436, %v460, %v462
        %v479 = vadd.f32 %v391, %v439
        %v480 = vadd.f32 %v392, %v441
        %v481 = vadd.f32 %v393, %v443
        %v482 = vadd.f32 %v394, %v445
        %v483 = vadd.f32 %v395, %v444
        %v484 = vadd.f32 %v396, %v448
        %v485 = vadd.f32 %v397, %v450
        %v486 = vadd.f32 %v398, %v452
        %v487 = vadd.f32 %v399, %v454
        %v488 = vadd.f32 %v400, %v453
        %v489 = vadd.f32 %v401, %v457
        %v490 = vadd.f32 %v402, %v459
        %v491 = vadd.f32 %v403, %v461
        %v492 = vadd.f32 %v404, %v463
        %v493 = vadd.f32 %v405, %v462
        %v494 = vmul.f32 %v319, 0.91921794
        %v495 = vmul.f32 %v320, 0.91921794
        %v496 = vmul.f32 %v321, 0.91921794
        %v497 = vmul.f32 %v322, 0.91921794
        %v498 = vmul.f32 %v323, 0.91921794
        %v499 = vmul.f32 %v324, 0.91921794
        %v500 = vmul.f32 %v325, 0.91921794
        %v501 = vmul.f32 %v326, 0.91921794
        %v502 = vmul.f32 %v327, 0.91921794
        %v503 = vmul.f32 %v328, 0.91921794
        %v504 = vmul.f32 %v329, 0.91921794
        %v505 = vmul.f32 %v330, 0.91921794
        %vm518 = vcmask 1045504
        %v519 = vrot.slane %v494, 2
        %v520 = vrot.slane %v495, 2
        %v521 = vsel %vm518, %v519, %v520
        %v522 = vrot.slane %v496, 2
        %v523 = vsel %vm518, %v520, %v522
        %v524 = vrot.slane %v497, 2
        %v525 = vsel %vm518, %v522, %v524
        %v526 = vrot.slane %v498, 2
        %v527 = vrot.slane %v499, 2
        %v528 = vsel %vm518, %v526, %v527
        %v529 = vrot.slane %v500, 2
        %v530 = vsel %vm518, %v527, %v529
        %v531 = vrot.slane %v501, 2
        %v532 = vsel %vm518, %v529, %v531
        %v533 = vrot.slane %v502, 2
        %v534 = vrot.slane %v503, 2
        %v535 = vsel %vm518, %v533, %v534
        %v536 = vrot.slane %v504, 2
        %v537 = vsel %vm518, %v534, %v536
        %v538 = vrot.slane %v505, 2
        %v539 = vsel %vm518, %v536, %v538
        %v555 = vadd.f32 %v479, %v519
        %v556 = vadd.f32 %v480, %v521
        %v557 = vadd.f32 %v481, %v523
        %v558 = vadd.f32 %v482, %v525
        %v559 = vadd.f32 %v483, %v524
        %v560 = vadd.f32 %v484, %v526
        %v561 = vadd.f32 %v485, %v528
        %v562 = vadd.f32 %v486, %v530
        %v563 = vadd.f32 %v487, %v532
        %v564 = vadd.f32 %v488, %v531
        %v565 = vadd.f32 %v489, %v533
        %v566 = vadd.f32 %v490, %v535
        %v567 = vadd.f32 %v491, %v537
        %v568 = vadd.f32 %v492, %v539
        %v569 = vadd.f32 %v493, %v538
        %v570 = vmul.f32 %v388, 0.040387616
        %v571 = vmul.f32 %v389, 0.040387616
        %v572 = vmul.f32 %v390, 0.040387616
        %vm576 = vcmask 1044480
        %v577 = vrot.slane %v407, 3
        %v578 = vrot.slane %v408, 3
        %v579 = vsel %vm576, %v577, %v578
        %v580 = vrot.slane %v409, 3
        %v581 = vsel %vm576, %v578, %v580
        %v582 = vrot.slane %v410, 3
        %v583 = vsel %vm576, %v580, %v582
        %v584 = vrot.slane %v570, 3
        %v585 = vsel %vm576, %v582, %v584
        %v586 = vrot.slane %v412, 3
        %v587 = vrot.slane %v413, 3
        %v588 = vsel %vm576, %v586, %v587
        %v589 = vrot.slane %v414, 3
        %v590 = vsel %vm576, %v587, %v589
        %v591 = vrot.slane %v415, 3
        %v592 = vsel %vm576, %v589, %v591
        %v593 = vrot.slane %v571, 3
        %v594 = vsel %vm576, %v591, %v593
        %v595 = vrot.slane %v417, 3
        %v596 = vrot.slane %v418, 3
        %v597 = vsel %vm576, %v595, %v596
        %v598 = vrot.slane %v419, 3
        %v599 = vsel %vm576, %v596, %v598
        %v600 = vrot.slane %v420, 3
        %v601 = vsel %vm576, %v598, %v600
        %v602 = vrot.slane %v572, 3
        %v603 = vsel %vm576, %v600, %v602
        %v619 = vadd.f32 %v555, %v577
        %v620 = vadd.f32 %v556, %v579
        %v621 = vadd.f32 %v557, %v581
        %v622 = vadd.f32 %v558, %v583
        %v623 = vadd.f32 %v559, %v585
        %v624 = vadd.f32 %v560, %v586
        %v625 = vadd.f32 %v561, %v588
        %v626 = vadd.f32 %v562, %v590
        %v627 = vadd.f32 %v563, %v592
        %v628 = vadd.f32 %v564, %v594
        %v629 = vadd.f32 %v565, %v595
        %v630 = vadd.f32 %v566, %v597
        %v631 = vadd.f32 %v567, %v599
        %v632 = vadd.f32 %v568, %v601
        %v633 = vadd.f32 %v569, %v603
        %v634 = vmul.f32 %v388, 3.4256063e-06
        %v635 = vmul.f32 %v389, 3.4256063e-06
        %v636 = vmul.f32 %v390, 3.4256063e-06
        %vm652 = vcmask 1043456
        %v653 = vrot.slane %v392, 4
        %v654 = vrot.slane %v393, 4
        %v655 = vsel %vm652, %v653, %v654
        %v656 = vrot.slane %v394, 4
        %v657 = vsel %vm652, %v654, %v656
        %v658 = vrot.slane %v395, 4
        %v659 = vsel %vm652, %v656, %v658
        %v660 = vrot.slane %v634, 4
        %v661 = vsel %vm652, %v658, %v660
        %v662 = vrot.slane %v397, 4
        %v663 = vrot.slane %v398, 4
        %v664 = vsel %vm652, %v662, %v663
        %v665 = vrot.slane %v399, 4
        %v666 = vsel %vm652, %v663, %v665
        %v667 = vrot.slane %v400, 4
        %v668 = vsel %vm652, %v665, %v667
        %v669 = vrot.slane %v635, 4
        %v670 = vsel %vm652, %v667, %v669
        %v671 = vrot.slane %v402, 4
        %v672 = vrot.slane %v403, 4
        %v673 = vsel %vm652, %v671, %v672
        %v674 = vrot.slane %v404, 4
        %v675 = vsel %vm652, %v672, %v674
        %v676 = vrot.slane %v405, 4
        %v677 = vsel %vm652, %v674, %v676
        %v678 = vrot.slane %v636, 4
        %v679 = vsel %vm652, %v676, %v678
        %v695 = vadd.f32 %v619, %v653
        %v696 = vadd.f32 %v620, %v655
        %v697 = vadd.f32 %v621, %v657
        %v698 = vadd.f32 %v622, %v659
        %v699 = vadd.f32 %v623, %v661
        %v700 = vadd.f32 %v624, %v662
        %v701 = vadd.f32 %v625, %v664
        %v702 = vadd.f32 %v626, %v666
        %v703 = vadd.f32 %v627, %v668
        %v704 = vadd.f32 %v628, %v670
        %v705 = vadd.f32 %v629, %v671
        %v706 = vadd.f32 %v630, %v673
        %v707 = vadd.f32 %v631, %v675
        %v708 = vadd.f32 %v632, %v677
        %v709 = vadd.f32 %v633, %v679
        %711 = vset.pattern.permute.xlu0 0
        %712 = vperm.xlu0 %711, %v695
        %v713 = vpop.permute.xlu0 %712
        %716 = vset.pattern.permute.xlu0 0
        %717 = vperm.xlu0 %716, %v696
        %v718 = vpop.permute.xlu0 %717
        %721 = vset.pattern.permute.xlu0 0
        %722 = vperm.xlu0 %721, %v697
        %v723 = vpop.permute.xlu0 %722
        %726 = vset.pattern.permute.xlu0 0
        %727 = vperm.xlu0 %726, %v698
        %v728 = vpop.permute.xlu0 %727
        %731 = vset.pattern.permute.xlu0 0
        %732 = vperm.xlu0 %731, %v699
        %v733 = vpop.permute.xlu0 %732
        %736 = vset.pattern.permute.xlu0 0
        %737 = vperm.xlu0 %736, %v700
        %v738 = vpop.permute.xlu0 %737
        %741 = vset.pattern.permute.xlu0 0
        %742 = vperm.xlu0 %741, %v701
        %v743 = vpop.permute.xlu0 %742
        %746 = vset.pattern.permute.xlu0 0
        %747 = vperm.xlu0 %746, %v702
        %v748 = vpop.permute.xlu0 %747
        %751 = vset.pattern.permute.xlu0 0
        %752 = vperm.xlu0 %751, %v703
        %v753 = vpop.permute.xlu0 %752
        %756 = vset.pattern.permute.xlu0 0
        %757 = vperm.xlu0 %756, %v704
        %v758 = vpop.permute.xlu0 %757
        %761 = vset.pattern.permute.xlu0 0
        %762 = vperm.xlu0 %761, %v705
        %v763 = vpop.permute.xlu0 %762
        %766 = vset.pattern.permute.xlu0 0
        %767 = vperm.xlu0 %766, %v706
        %v768 = vpop.permute.xlu0 %767
        %771 = vset.pattern.permute.xlu0 0
        %772 = vperm.xlu0 %771, %v707
        %v773 = vpop.permute.xlu0 %772
        %776 = vset.pattern.permute.xlu0 0
        %777 = vperm.xlu0 %776, %v708
        %v778 = vpop.permute.xlu0 %777
        %781 = vset.pattern.permute.xlu0 0
        %782 = vperm.xlu0 %781, %v709
        %v783 = vpop.permute.xlu0 %782
        %785 = vset.pattern.permute.xlu0 127
        %786 = vperm.xlu0 %785, %v695
        %v787 = vpop.permute.xlu0 %786
        %789 = vset.pattern.permute.xlu0 127
        %790 = vperm.xlu0 %789, %v696
        %v791 = vpop.permute.xlu0 %790
        %793 = vset.pattern.permute.xlu0 127
        %794 = vperm.xlu0 %793, %v697
        %v795 = vpop.permute.xlu0 %794
        %797 = vset.pattern.permute.xlu0 127
        %798 = vperm.xlu0 %797, %v698
        %v799 = vpop.permute.xlu0 %798
        %801 = vset.pattern.permute.xlu0 127
        %802 = vperm.xlu0 %801, %v699
        %v803 = vpop.permute.xlu0 %802
        %805 = vset.pattern.permute.xlu0 127
        %806 = vperm.xlu0 %805, %v700
        %v807 = vpop.permute.xlu0 %806
        %809 = vset.pattern.permute.xlu0 127
        %810 = vperm.xlu0 %809, %v701
        %v811 = vpop.permute.xlu0 %810
        %813 = vset.pattern.permute.xlu0 127
        %814 = vperm.xlu0 %813, %v702
        %v815 = vpop.permute.xlu0 %814
        %817 = vset.pattern.permute.xlu0 127
        %818 = vperm.xlu0 %817, %v703
        %v819 = vpop.permute.xlu0 %818
        %821 = vset.pattern.permute.xlu0 127
        %822 = vperm.xlu0 %821, %v704
        %v823 = vpop.permute.xlu0 %822
        %825 = vset.pattern.permute.xlu0 127
        %826 = vperm.xlu0 %825, %v705
        %v827 = vpop.permute.xlu0 %826
        %829 = vset.pattern.permute.xlu0 127
        %830 = vperm.xlu0 %829, %v706
        %v831 = vpop.permute.xlu0 %830
        %833 = vset.pattern.permute.xlu0 127
        %834 = vperm.xlu0 %833, %v707
        %v835 = vpop.permute.xlu0 %834
        %837 = vset.pattern.permute.xlu0 127
        %838 = vperm.xlu0 %837, %v708
        %v839 = vpop.permute.xlu0 %838
        %841 = vset.pattern.permute.xlu0 127
        %842 = vperm.xlu0 %841, %v709
        %v843 = vpop.permute.xlu0 %842
        %v845 = vmul.f32 %v713, 3.4256063e-06
        %v846 = vmul.f32 %v695, 3.4256063e-06
        %v847 = vmul.f32 %v718, 3.4256063e-06
        %v848 = vmul.f32 %v696, 3.4256063e-06
        %v849 = vmul.f32 %v723, 3.4256063e-06
        %v850 = vmul.f32 %v697, 3.4256063e-06
        %v851 = vmul.f32 %v728, 3.4256063e-06
        %v852 = vmul.f32 %v698, 3.4256063e-06
        %v853 = vmul.f32 %v733, 3.4256063e-06
        %v854 = vmul.f32 %v699, 3.4256063e-06
        %v855 = vmul.f32 %v738, 3.4256063e-06
        %v856 = vmul.f32 %v700, 3.4256063e-06
        %v857 = vmul.f32 %v743, 3.4256063e-06
        %v858 = vmul.f32 %v701, 3.4256063e-06
        %v859 = vmul.f32 %v748, 3.4256063e-06
        %v860 = vmul.f32 %v702, 3.4256063e-06
        %v861 = vmul.f32 %v753, 3.4256063e-06
        %v862 = vmul.f32 %v703, 3.4256063e-06
        %v863 = vmul.f32 %v758, 3.4256063e-06
        %v864 = vmul.f32 %v704, 3.4256063e-06
        %v865 = vmul.f32 %v763, 3.4256063e-06
        %v866 = vmul.f32 %v705, 3.4256063e-06
        %v867 = vmul.f32 %v768, 3.4256063e-06
        %v868 = vmul.f32 %v706, 3.4256063e-06
        %v869 = vmul.f32 %v773, 3.4256063e-06
        %v870 = vmul.f32 %v707, 3.4256063e-06
        %v871 = vmul.f32 %v778, 3.4256063e-06
        %v872 = vmul.f32 %v708, 3.4256063e-06
        %v873 = vmul.f32 %v783, 3.4256063e-06
        %v874 = vmul.f32 %v709, 3.4256063e-06
        %v875 = vmul.f32 %v713, 0.040387616
        %v876 = vmul.f32 %v695, 0.040387616
        %v877 = vmul.f32 %v718, 0.040387616
        %v878 = vmul.f32 %v696, 0.040387616
        %v879 = vmul.f32 %v723, 0.040387616
        %v880 = vmul.f32 %v697, 0.040387616
        %v881 = vmul.f32 %v728, 0.040387616
        %v882 = vmul.f32 %v698, 0.040387616
        %v883 = vmul.f32 %v733, 0.040387616
        %v884 = vmul.f32 %v699, 0.040387616
        %v885 = vmul.f32 %v738, 0.040387616
        %v886 = vmul.f32 %v700, 0.040387616
        %v887 = vmul.f32 %v743, 0.040387616
        %v888 = vmul.f32 %v701, 0.040387616
        %v889 = vmul.f32 %v748, 0.040387616
        %v890 = vmul.f32 %v702, 0.040387616
        %v891 = vmul.f32 %v753, 0.040387616
        %v892 = vmul.f32 %v703, 0.040387616
        %v893 = vmul.f32 %v758, 0.040387616
        %v894 = vmul.f32 %v704, 0.040387616
        %v895 = vmul.f32 %v763, 0.040387616
        %v896 = vmul.f32 %v705, 0.040387616
        %v897 = vmul.f32 %v768, 0.040387616
        %v898 = vmul.f32 %v706, 0.040387616
        %v899 = vmul.f32 %v773, 0.040387616
        %v900 = vmul.f32 %v707, 0.040387616
        %v901 = vmul.f32 %v778, 0.040387616
        %v902 = vmul.f32 %v708, 0.040387616
        %v903 = vmul.f32 %v783, 0.040387616
        %v904 = vmul.f32 %v709, 0.040387616
        %935 = vrot.lane.b32.xlu0 %v875, 127
        %v936 = vpop.permute.xlu0 %935
        %937 = vrot.lane.b32.xlu0 %v876, 127
        %v938 = vpop.permute.xlu0 %937
        %939 = vrot.lane.b32.xlu0 %v877, 127
        %v940 = vpop.permute.xlu0 %939
        %941 = vrot.lane.b32.xlu0 %v878, 127
        %v942 = vpop.permute.xlu0 %941
        %943 = vrot.lane.b32.xlu0 %v879, 127
        %v944 = vpop.permute.xlu0 %943
        %945 = vrot.lane.b32.xlu0 %v880, 127
        %v946 = vpop.permute.xlu0 %945
        %947 = vrot.lane.b32.xlu0 %v881, 127
        %v948 = vpop.permute.xlu0 %947
        %949 = vrot.lane.b32.xlu0 %v882, 127
        %v950 = vpop.permute.xlu0 %949
        %951 = vrot.lane.b32.xlu0 %v883, 127
        %v952 = vpop.permute.xlu0 %951
        %953 = vrot.lane.b32.xlu0 %v884, 127
        %v954 = vpop.permute.xlu0 %953
        %955 = vrot.lane.b32.xlu0 %v885, 127
        %v956 = vpop.permute.xlu0 %955
        %957 = vrot.lane.b32.xlu0 %v886, 127
        %v958 = vpop.permute.xlu0 %957
        %959 = vrot.lane.b32.xlu0 %v887, 127
        %v960 = vpop.permute.xlu0 %959
        %961 = vrot.lane.b32.xlu0 %v888, 127
        %v962 = vpop.permute.xlu0 %961
        %963 = vrot.lane.b32.xlu0 %v889, 127
        %v964 = vpop.permute.xlu0 %963
        %965 = vrot.lane.b32.xlu0 %v890, 127
        %v966 = vpop.permute.xlu0 %965
        %967 = vrot.lane.b32.xlu0 %v891, 127
        %v968 = vpop.permute.xlu0 %967
        %969 = vrot.lane.b32.xlu0 %v892, 127
        %v970 = vpop.permute.xlu0 %969
        %971 = vrot.lane.b32.xlu0 %v893, 127
        %v972 = vpop.permute.xlu0 %971
        %973 = vrot.lane.b32.xlu0 %v894, 127
        %v974 = vpop.permute.xlu0 %973
        %975 = vrot.lane.b32.xlu0 %v895, 127
        %v976 = vpop.permute.xlu0 %975
        %977 = vrot.lane.b32.xlu0 %v896, 127
        %v978 = vpop.permute.xlu0 %977
        %979 = vrot.lane.b32.xlu0 %v897, 127
        %v980 = vpop.permute.xlu0 %979
        %981 = vrot.lane.b32.xlu0 %v898, 127
        %v982 = vpop.permute.xlu0 %981
        %983 = vrot.lane.b32.xlu0 %v899, 127
        %v984 = vpop.permute.xlu0 %983
        %985 = vrot.lane.b32.xlu0 %v900, 127
        %v986 = vpop.permute.xlu0 %985
        %987 = vrot.lane.b32.xlu0 %v901, 127
        %v988 = vpop.permute.xlu0 %987
        %989 = vrot.lane.b32.xlu0 %v902, 127
        %v990 = vpop.permute.xlu0 %989
        %991 = vrot.lane.b32.xlu0 %v903, 127
        %v992 = vpop.permute.xlu0 %991
        %993 = vrot.lane.b32.xlu0 %v904, 127
        %v994 = vpop.permute.xlu0 %993
        %vm995 = vcmask 1039360
        %v996 = vsel %vm995, %v936, %v938
        %v997 = vsel %vm995, %v940, %v942
        %v998 = vsel %vm995, %v944, %v946
        %v999 = vsel %vm995, %v948, %v950
        %v1000 = vsel %vm995, %v952, %v954
        %v1001 = vsel %vm995, %v956, %v958
        %v1002 = vsel %vm995, %v960, %v962
        %v1003 = vsel %vm995, %v964, %v966
        %v1004 = vsel %vm995, %v968, %v970
        %v1005 = vsel %vm995, %v972, %v974
        %v1006 = vsel %vm995, %v976, %v978
        %v1007 = vsel %vm995, %v980, %v982
        %v1008 = vsel %vm995, %v984, %v986
        %v1009 = vsel %vm995, %v988, %v990
        %v1010 = vsel %vm995, %v992, %v994
        %v1041 = vadd.f32 %v845, %v996
        %v1042 = vadd.f32 %v846, %v938
        %v1043 = vadd.f32 %v847, %v997
        %v1044 = vadd.f32 %v848, %v942
        %v1045 = vadd.f32 %v849, %v998
        %v1046 = vadd.f32 %v850, %v946
        %v1047 = vadd.f32 %v851, %v999
        %v1048 = vadd.f32 %v852, %v950
        %v1049 = vadd.f32 %v853, %v1000
        %v1050 = vadd.f32 %v854, %v954
        %v1051 = vadd.f32 %v855, %v1001
        %v1052 = vadd.f32 %v856, %v958
        %v1053 = vadd.f32 %v857, %v1002
        %v1054 = vadd.f32 %v858, %v962
        %v1055 = vadd.f32 %v859, %v1003
        %v1056 = vadd.f32 %v860, %v966
        %v1057 = vadd.f32 %v861, %v1004
        %v1058 = vadd.f32 %v862, %v970
        %v1059 = vadd.f32 %v863, %v1005
        %v1060 = vadd.f32 %v864, %v974
        %v1061 = vadd.f32 %v865, %v1006
        %v1062 = vadd.f32 %v866, %v978
        %v1063 = vadd.f32 %v867, %v1007
        %v1064 = vadd.f32 %v868, %v982
        %v1065 = vadd.f32 %v869, %v1008
        %v1066 = vadd.f32 %v870, %v986
        %v1067 = vadd.f32 %v871, %v1009
        %v1068 = vadd.f32 %v872, %v990
        %v1069 = vadd.f32 %v873, %v1010
        %v1070 = vadd.f32 %v874, %v994
        %v1071 = vmul.f32 %v695, 0.91921794
        %v1072 = vmul.f32 %v696, 0.91921794
        %v1073 = vmul.f32 %v697, 0.91921794
        %v1074 = vmul.f32 %v698, 0.91921794
        %v1075 = vmul.f32 %v699, 0.91921794
        %v1076 = vmul.f32 %v700, 0.91921794
        %v1077 = vmul.f32 %v701, 0.91921794
        %v1078 = vmul.f32 %v702, 0.91921794
        %v1079 = vmul.f32 %v703, 0.91921794
        %v1080 = vmul.f32 %v704, 0.91921794
        %v1081 = vmul.f32 %v705, 0.91921794
        %v1082 = vmul.f32 %v706, 0.91921794
        %v1083 = vmul.f32 %v707, 0.91921794
        %v1084 = vmul.f32 %v708, 0.91921794
        %v1085 = vmul.f32 %v709, 0.91921794
        %1101 = vrot.lane.b32.xlu0 %v1071, 126
        %v1102 = vpop.permute.xlu0 %1101
        %1103 = vrot.lane.b32.xlu0 %v1072, 126
        %v1104 = vpop.permute.xlu0 %1103
        %1105 = vrot.lane.b32.xlu0 %v1073, 126
        %v1106 = vpop.permute.xlu0 %1105
        %1107 = vrot.lane.b32.xlu0 %v1074, 126
        %v1108 = vpop.permute.xlu0 %1107
        %1109 = vrot.lane.b32.xlu0 %v1075, 126
        %v1110 = vpop.permute.xlu0 %1109
        %1111 = vrot.lane.b32.xlu0 %v1076, 126
        %v1112 = vpop.permute.xlu0 %1111
        %1113 = vrot.lane.b32.xlu0 %v1077, 126
        %v1114 = vpop.permute.xlu0 %1113
        %1115 = vrot.lane.b32.xlu0 %v1078, 126
        %v1116 = vpop.permute.xlu0 %1115
        %1117 = vrot.lane.b32.xlu0 %v1079, 126
        %v1118 = vpop.permute.xlu0 %1117
        %1119 = vrot.lane.b32.xlu0 %v1080, 126
        %v1120 = vpop.permute.xlu0 %1119
        %1121 = vrot.lane.b32.xlu0 %v1081, 126
        %v1122 = vpop.permute.xlu0 %1121
        %1123 = vrot.lane.b32.xlu0 %v1082, 126
        %v1124 = vpop.permute.xlu0 %1123
        %1125 = vrot.lane.b32.xlu0 %v1083, 126
        %v1126 = vpop.permute.xlu0 %1125
        %1127 = vrot.lane.b32.xlu0 %v1084, 126
        %v1128 = vpop.permute.xlu0 %1127
        %1129 = vrot.lane.b32.xlu0 %v1085, 126
        %v1130 = vpop.permute.xlu0 %1129
        %v1146 = vadd.f32 %v1041, %v1102
        %v1147 = vadd.f32 %v1042, %v1102
        %v1148 = vadd.f32 %v1043, %v1104
        %v1149 = vadd.f32 %v1044, %v1104
        %v1150 = vadd.f32 %v1045, %v1106
        %v1151 = vadd.f32 %v1046, %v1106
        %v1152 = vadd.f32 %v1047, %v1108
        %v1153 = vadd.f32 %v1048, %v1108
        %v1154 = vadd.f32 %v1049, %v1110
        %v1155 = vadd.f32 %v1050, %v1110
        %v1156 = vadd.f32 %v1051, %v1112
        %v1157 = vadd.f32 %v1052, %v1112
        %v1158 = vadd.f32 %v1053, %v1114
        %v1159 = vadd.f32 %v1054, %v1114
        %v1160 = vadd.f32 %v1055, %v1116
        %v1161 = vadd.f32 %v1056, %v1116
        %v1162 = vadd.f32 %v1057, %v1118
        %v1163 = vadd.f32 %v1058, %v1118
        %v1164 = vadd.f32 %v1059, %v1120
        %v1165 = vadd.f32 %v1060, %v1120
        %v1166 = vadd.f32 %v1061, %v1122
        %v1167 = vadd.f32 %v1062, %v1122
        %v1168 = vadd.f32 %v1063, %v1124
        %v1169 = vadd.f32 %v1064, %v1124
        %v1170 = vadd.f32 %v1065, %v1126
        %v1171 = vadd.f32 %v1066, %v1126
        %v1172 = vadd.f32 %v1067, %v1128
        %v1173 = vadd.f32 %v1068, %v1128
        %v1174 = vadd.f32 %v1069, %v1130
        %v1175 = vadd.f32 %v1070, %v1130
        %v1176 = vmul.f32 %v787, 0.040387616
        %v1177 = vmul.f32 %v791, 0.040387616
        %v1178 = vmul.f32 %v795, 0.040387616
        %v1179 = vmul.f32 %v799, 0.040387616
        %v1180 = vmul.f32 %v803, 0.040387616
        %v1181 = vmul.f32 %v807, 0.040387616
        %v1182 = vmul.f32 %v811, 0.040387616
        %v1183 = vmul.f32 %v815, 0.040387616
        %v1184 = vmul.f32 %v819, 0.040387616
        %v1185 = vmul.f32 %v823, 0.040387616
        %v1186 = vmul.f32 %v827, 0.040387616
        %v1187 = vmul.f32 %v831, 0.040387616
        %v1188 = vmul.f32 %v835, 0.040387616
        %v1189 = vmul.f32 %v839, 0.040387616
        %v1190 = vmul.f32 %v843, 0.040387616
        %1206 = vrot.lane.b32.xlu0 %v876, 125
        %v1207 = vpop.permute.xlu0 %1206
        %1208 = vrot.lane.b32.xlu0 %v1176, 125
        %v1209 = vpop.permute.xlu0 %1208
        %1210 = vrot.lane.b32.xlu0 %v878, 125
        %v1211 = vpop.permute.xlu0 %1210
        %1212 = vrot.lane.b32.xlu0 %v1177, 125
        %v1213 = vpop.permute.xlu0 %1212
        %1214 = vrot.lane.b32.xlu0 %v880, 125
        %v1215 = vpop.permute.xlu0 %1214
        %1216 = vrot.lane.b32.xlu0 %v1178, 125
        %v1217 = vpop.permute.xlu0 %1216
        %1218 = vrot.lane.b32.xlu0 %v882, 125
        %v1219 = vpop.permute.xlu0 %1218
        %1220 = vrot.lane.b32.xlu0 %v1179, 125
        %v1221 = vpop.permute.xlu0 %1220
        %1222 = vrot.lane.b32.xlu0 %v884, 125
        %v1223 = vpop.permute.xlu0 %1222
        %1224 = vrot.lane.b32.xlu0 %v1180, 125
        %v1225 = vpop.permute.xlu0 %1224
        %1226 = vrot.lane.b32.xlu0 %v886, 125
        %v1227 = vpop.permute.xlu0 %1226
        %1228 = vrot.lane.b32.xlu0 %v1181, 125
        %v1229 = vpop.permute.xlu0 %1228
        %1230 = vrot.lane.b32.xlu0 %v888, 125
        %v1231 = vpop.permute.xlu0 %1230
        %1232 = vrot.lane.b32.xlu0 %v1182, 125
        %v1233 = vpop.permute.xlu0 %1232
        %1234 = vrot.lane.b32.xlu0 %v890, 125
        %v1235 = vpop.permute.xlu0 %1234
        %1236 = vrot.lane.b32.xlu0 %v1183, 125
        %v1237 = vpop.permute.xlu0 %1236
        %1238 = vrot.lane.b32.xlu0 %v892, 125
        %v1239 = vpop.permute.xlu0 %1238
        %1240 = vrot.lane.b32.xlu0 %v1184, 125
        %v1241 = vpop.permute.xlu0 %1240
        %1242 = vrot.lane.b32.xlu0 %v894, 125
        %v1243 = vpop.permute.xlu0 %1242
        %1244 = vrot.lane.b32.xlu0 %v1185, 125
        %v1245 = vpop.permute.xlu0 %1244
        %1246 = vrot.lane.b32.xlu0 %v896, 125
        %v1247 = vpop.permute.xlu0 %1246
        %1248 = vrot.lane.b32.xlu0 %v1186, 125
        %v1249 = vpop.permute.xlu0 %1248
        %1250 = vrot.lane.b32.xlu0 %v898, 125
        %v1251 = vpop.permute.xlu0 %1250
        %1252 = vrot.lane.b32.xlu0 %v1187, 125
        %v1253 = vpop.permute.xlu0 %1252
        %1254 = vrot.lane.b32.xlu0 %v900, 125
        %v1255 = vpop.permute.xlu0 %1254
        %1256 = vrot.lane.b32.xlu0 %v1188, 125
        %v1257 = vpop.permute.xlu0 %1256
        %1258 = vrot.lane.b32.xlu0 %v902, 125
        %v1259 = vpop.permute.xlu0 %1258
        %1260 = vrot.lane.b32.xlu0 %v1189, 125
        %v1261 = vpop.permute.xlu0 %1260
        %1262 = vrot.lane.b32.xlu0 %v904, 125
        %v1263 = vpop.permute.xlu0 %1262
        %1264 = vrot.lane.b32.xlu0 %v1190, 125
        %v1265 = vpop.permute.xlu0 %1264
        %vm1266 = vcmask 1022976
        %v1267 = vsel %vm1266, %v1207, %v1209
        %v1268 = vsel %vm1266, %v1211, %v1213
        %v1269 = vsel %vm1266, %v1215, %v1217
        %v1270 = vsel %vm1266, %v1219, %v1221
        %v1271 = vsel %vm1266, %v1223, %v1225
        %v1272 = vsel %vm1266, %v1227, %v1229
        %v1273 = vsel %vm1266, %v1231, %v1233
        %v1274 = vsel %vm1266, %v1235, %v1237
        %v1275 = vsel %vm1266, %v1239, %v1241
        %v1276 = vsel %vm1266, %v1243, %v1245
        %v1277 = vsel %vm1266, %v1247, %v1249
        %v1278 = vsel %vm1266, %v1251, %v1253
        %v1279 = vsel %vm1266, %v1255, %v1257
        %v1280 = vsel %vm1266, %v1259, %v1261
        %v1281 = vsel %vm1266, %v1263, %v1265
        %v1312 = vadd.f32 %v1146, %v1207
        %v1313 = vadd.f32 %v1147, %v1267
        %v1314 = vadd.f32 %v1148, %v1211
        %v1315 = vadd.f32 %v1149, %v1268
        %v1316 = vadd.f32 %v1150, %v1215
        %v1317 = vadd.f32 %v1151, %v1269
        %v1318 = vadd.f32 %v1152, %v1219
        %v1319 = vadd.f32 %v1153, %v1270
        %v1320 = vadd.f32 %v1154, %v1223
        %v1321 = vadd.f32 %v1155, %v1271
        %v1322 = vadd.f32 %v1156, %v1227
        %v1323 = vadd.f32 %v1157, %v1272
        %v1324 = vadd.f32 %v1158, %v1231
        %v1325 = vadd.f32 %v1159, %v1273
        %v1326 = vadd.f32 %v1160, %v1235
        %v1327 = vadd.f32 %v1161, %v1274
        %v1328 = vadd.f32 %v1162, %v1239
        %v1329 = vadd.f32 %v1163, %v1275
        %v1330 = vadd.f32 %v1164, %v1243
        %v1331 = vadd.f32 %v1165, %v1276
        %v1332 = vadd.f32 %v1166, %v1247
        %v1333 = vadd.f32 %v1167, %v1277
        %v1334 = vadd.f32 %v1168, %v1251
        %v1335 = vadd.f32 %v1169, %v1278
        %v1336 = vadd.f32 %v1170, %v1255
        %v1337 = vadd.f32 %v1171, %v1279
        %v1338 = vadd.f32 %v1172, %v1259
        %v1339 = vadd.f32 %v1173, %v1280
        %v1340 = vadd.f32 %v1174, %v1263
        %v1341 = vadd.f32 %v1175, %v1281
        %v1342 = vmul.f32 %v787, 3.4256063e-06
        %v1343 = vmul.f32 %v791, 3.4256063e-06
        %v1344 = vmul.f32 %v795, 3.4256063e-06
        %v1345 = vmul.f32 %v799, 3.4256063e-06
        %v1346 = vmul.f32 %v803, 3.4256063e-06
        %v1347 = vmul.f32 %v807, 3.4256063e-06
        %v1348 = vmul.f32 %v811, 3.4256063e-06
        %v1349 = vmul.f32 %v815, 3.4256063e-06
        %v1350 = vmul.f32 %v819, 3.4256063e-06
        %v1351 = vmul.f32 %v823, 3.4256063e-06
        %v1352 = vmul.f32 %v827, 3.4256063e-06
        %v1353 = vmul.f32 %v831, 3.4256063e-06
        %v1354 = vmul.f32 %v835, 3.4256063e-06
        %v1355 = vmul.f32 %v839, 3.4256063e-06
        %v1356 = vmul.f32 %v843, 3.4256063e-06
        %1387 = vrot.lane.b32.xlu0 %v846, 124
        %v1388 = vpop.permute.xlu0 %1387
        %1389 = vrot.lane.b32.xlu0 %v1342, 124
        %v1390 = vpop.permute.xlu0 %1389
        %1391 = vrot.lane.b32.xlu0 %v848, 124
        %v1392 = vpop.permute.xlu0 %1391
        %1393 = vrot.lane.b32.xlu0 %v1343, 124
        %v1394 = vpop.permute.xlu0 %1393
        %1395 = vrot.lane.b32.xlu0 %v850, 124
        %v1396 = vpop.permute.xlu0 %1395
        %1397 = vrot.lane.b32.xlu0 %v1344, 124
        %v1398 = vpop.permute.xlu0 %1397
        %1399 = vrot.lane.b32.xlu0 %v852, 124
        %v1400 = vpop.permute.xlu0 %1399
        %1401 = vrot.lane.b32.xlu0 %v1345, 124
        %v1402 = vpop.permute.xlu0 %1401
        %1403 = vrot.lane.b32.xlu0 %v854, 124
        %v1404 = vpop.permute.xlu0 %1403
        %1405 = vrot.lane.b32.xlu0 %v1346, 124
        %v1406 = vpop.permute.xlu0 %1405
        %1407 = vrot.lane.b32.xlu0 %v856, 124
        %v1408 = vpop.permute.xlu0 %1407
        %1409 = vrot.lane.b32.xlu0 %v1347, 124
        %v1410 = vpop.permute.xlu0 %1409
        %1411 = vrot.lane.b32.xlu0 %v858, 124
        %v1412 = vpop.permute.xlu0 %1411
        %1413 = vrot.lane.b32.xlu0 %v1348, 124
        %v1414 = vpop.permute.xlu0 %1413
        %1415 = vrot.lane.b32.xlu0 %v860, 124
        %v1416 = vpop.permute.xlu0 %1415
        %1417 = vrot.lane.b32.xlu0 %v1349, 124
        %v1418 = vpop.permute.xlu0 %1417
        %1419 = vrot.lane.b32.xlu0 %v862, 124
        %v1420 = vpop.permute.xlu0 %1419
        %1421 = vrot.lane.b32.xlu0 %v1350, 124
        %v1422 = vpop.permute.xlu0 %1421
        %1423 = vrot.lane.b32.xlu0 %v864, 124
        %v1424 = vpop.permute.xlu0 %1423
        %1425 = vrot.lane.b32.xlu0 %v1351, 124
        %v1426 = vpop.permute.xlu0 %1425
        %1427 = vrot.lane.b32.xlu0 %v866, 124
        %v1428 = vpop.permute.xlu0 %1427
        %1429 = vrot.lane.b32.xlu0 %v1352, 124
        %v1430 = vpop.permute.xlu0 %1429
        %1431 = vrot.lane.b32.xlu0 %v868, 124
        %v1432 = vpop.permute.xlu0 %1431
        %1433 = vrot.lane.b32.xlu0 %v1353, 124
        %v1434 = vpop.permute.xlu0 %1433
        %1435 = vrot.lane.b32.xlu0 %v870, 124
        %v1436 = vpop.permute.xlu0 %1435
        %1437 = vrot.lane.b32.xlu0 %v1354, 124
        %v1438 = vpop.permute.xlu0 %1437
        %1439 = vrot.lane.b32.xlu0 %v872, 124
        %v1440 = vpop.permute.xlu0 %1439
        %1441 = vrot.lane.b32.xlu0 %v1355, 124
        %v1442 = vpop.permute.xlu0 %1441
        %1443 = vrot.lane.b32.xlu0 %v874, 124
        %v1444 = vpop.permute.xlu0 %1443
        %1445 = vrot.lane.b32.xlu0 %v1356, 124
        %v1446 = vpop.permute.xlu0 %1445
        %vm1447 = vcmask 1014784
        %v1448 = vsel %vm1447, %v1388, %v1390
        %v1449 = vsel %vm1447, %v1392, %v1394
        %v1450 = vsel %vm1447, %v1396, %v1398
        %v1451 = vsel %vm1447, %v1400, %v1402
        %v1452 = vsel %vm1447, %v1404, %v1406
        %v1453 = vsel %vm1447, %v1408, %v1410
        %v1454 = vsel %vm1447, %v1412, %v1414
        %v1455 = vsel %vm1447, %v1416, %v1418
        %v1456 = vsel %vm1447, %v1420, %v1422
        %v1457 = vsel %vm1447, %v1424, %v1426
        %v1458 = vsel %vm1447, %v1428, %v1430
        %v1459 = vsel %vm1447, %v1432, %v1434
        %v1460 = vsel %vm1447, %v1436, %v1438
        %v1461 = vsel %vm1447, %v1440, %v1442
        %v1462 = vsel %vm1447, %v1444, %v1446
        %v1493 = vadd.f32 %v1312, %v1388
        %v1494 = vadd.f32 %v1313, %v1448
        %v1495 = vadd.f32 %v1314, %v1392
        %v1496 = vadd.f32 %v1315, %v1449
        %v1497 = vadd.f32 %v1316, %v1396
        %v1498 = vadd.f32 %v1317, %v1450
        %v1499 = vadd.f32 %v1318, %v1400
        %v1500 = vadd.f32 %v1319, %v1451
        %v1501 = vadd.f32 %v1320, %v1404
        %v1502 = vadd.f32 %v1321, %v1452
        %v1503 = vadd.f32 %v1322, %v1408
        %v1504 = vadd.f32 %v1323, %v1453
        %v1505 = vadd.f32 %v1324, %v1412
        %v1506 = vadd.f32 %v1325, %v1454
        %v1507 = vadd.f32 %v1326, %v1416
        %v1508 = vadd.f32 %v1327, %v1455
        %v1509 = vadd.f32 %v1328, %v1420
        %v1510 = vadd.f32 %v1329, %v1456
        %v1511 = vadd.f32 %v1330, %v1424
        %v1512 = vadd.f32 %v1331, %v1457
        %v1513 = vadd.f32 %v1332, %v1428
        %v1514 = vadd.f32 %v1333, %v1458
        %v1515 = vadd.f32 %v1334, %v1432
        %v1516 = vadd.f32 %v1335, %v1459
        %v1517 = vadd.f32 %v1336, %v1436
        %v1518 = vadd.f32 %v1337, %v1460
        %v1519 = vadd.f32 %v1338, %v1440
        %v1520 = vadd.f32 %v1339, %v1461
        %v1521 = vadd.f32 %v1340, %v1444
        %v1522 = vadd.f32 %v1341, %v1462
        %v1523 = vmul.f32 %v1493, 0.959609
        %v1524 = vmul.f32 %v1494, 0.959609
        %v1525 = vmul.f32 %v1495, 0.959609
        %v1526 = vmul.f32 %v1496, 0.959609
        %v1527 = vmul.f32 %v1497, 0.959609
        %v1528 = vmul.f32 %v1498, 0.959609
        %v1529 = vmul.f32 %v1499, 0.959609
        %v1530 = vmul.f32 %v1500, 0.959609
        %v1531 = vmul.f32 %v1501, 0.959609
        %v1532 = vmul.f32 %v1502, 0.959609
        %v1533 = vmul.f32 %v1503, 0.040387616
        %v1534 = vmul.f32 %v1504, 0.040387616
        %v1535 = vmul.f32 %v1505, 0.040387616
        %v1536 = vmul.f32 %v1506, 0.040387616
        %v1537 = vmul.f32 %v1507, 0.040387616
        %v1538 = vmul.f32 %v1508, 0.040387616
        %v1539 = vmul.f32 %v1509, 0.040387616
        %v1540 = vmul.f32 %v1510, 0.040387616
        %v1541 = vmul.f32 %v1511, 0.040387616
        %v1542 = vmul.f32 %v1512, 0.040387616
        %v1543 = vadd.f32 %v1523, %v1533
        %v1544 = vadd.f32 %v1524, %v1534
        %v1545 = vadd.f32 %v1525, %v1535
        %v1546 = vadd.f32 %v1526, %v1536
        %v1547 = vadd.f32 %v1527, %v1537
        %v1548 = vadd.f32 %v1528, %v1538
        %v1549 = vadd.f32 %v1529, %v1539
        %v1550 = vadd.f32 %v1530, %v1540
        %v1551 = vadd.f32 %v1531, %v1541
        %v1552 = vadd.f32 %v1532, %v1542
        %v1553 = vmul.f32 %v1513, 3.4256063e-06
        %v1554 = vmul.f32 %v1514, 3.4256063e-06
        %v1555 = vmul.f32 %v1515, 3.4256063e-06
        %v1556 = vmul.f32 %v1516, 3.4256063e-06
        %v1557 = vmul.f32 %v1517, 3.4256063e-06
        %v1558 = vmul.f32 %v1518, 3.4256063e-06
        %v1559 = vmul.f32 %v1519, 3.4256063e-06
        %v1560 = vmul.f32 %v1520, 3.4256063e-06
        %v1561 = vmul.f32 %v1521, 3.4256063e-06
        %v1562 = vmul.f32 %v1522, 3.4256063e-06
        %v1563 = vadd.f32 %v1543, %v1553
        %v1564 = vadd.f32 %v1544, %v1554
        %v1565 = vadd.f32 %v1545, %v1555
        %v1566 = vadd.f32 %v1546, %v1556
        %v1567 = vadd.f32 %v1547, %v1557
        %v1568 = vadd.f32 %v1548, %v1558
        %v1569 = vadd.f32 %v1549, %v1559
        %v1570 = vadd.f32 %v1550, %v1560
        %v1571 = vadd.f32 %v1551, %v1561
        %v1572 = vadd.f32 %v1552, %v1562
        %1583 = vrot.lane.b32.xlu0 %v1563, 2
        %v1584 = vpop.permute.xlu0 %1583
        %1585 = vrot.lane.b32.xlu0 %v1564, 2
        %v1586 = vpop.permute.xlu0 %1585
        %1587 = vrot.lane.b32.xlu0 %v1565, 2
        %v1588 = vpop.permute.xlu0 %1587
        %1589 = vrot.lane.b32.xlu0 %v1566, 2
        %v1590 = vpop.permute.xlu0 %1589
        %1591 = vrot.lane.b32.xlu0 %v1567, 2
        %v1592 = vpop.permute.xlu0 %1591
        %1593 = vrot.lane.b32.xlu0 %v1568, 2
        %v1594 = vpop.permute.xlu0 %1593
        %1595 = vrot.lane.b32.xlu0 %v1569, 2
        %v1596 = vpop.permute.xlu0 %1595
        %1597 = vrot.lane.b32.xlu0 %v1570, 2
        %v1598 = vpop.permute.xlu0 %1597
        %1599 = vrot.lane.b32.xlu0 %v1571, 2
        %v1600 = vpop.permute.xlu0 %1599
        %1601 = vrot.lane.b32.xlu0 %v1572, 2
        %v1602 = vpop.permute.xlu0 %1601
        %vm1603 = vcmask 15360
        %v1604 = vsel %vm1603, %v1584, %v1586
        %v1605 = vsel %vm1603, %v1588, %v1590
        %v1606 = vsel %vm1603, %v1592, %v1594
        %v1607 = vsel %vm1603, %v1596, %v1598
        %v1608 = vsel %vm1603, %v1600, %v1602
        %1614 = vst [vmem:[%s308 - $0x6] sm:$0xc0] %v1604
        %1615 = vst [vmem:[%s308 + $0x2] sm:$0xff] %v1605
        %1616 = vst [vmem:[%s308 + $0xa] sm:$0xff] %v1606
        %1617 = vst [vmem:[%s308 + $0x12] sm:$0xff] %v1607
        %1618 = vst [vmem:[%s308 + $0x1a] sm:$0x3f] %v1608
        %v1619 = vmul.f32 %v1493, 0.040391043
        %v1620 = vmul.f32 %v1494, 0.040391043
        %v1621 = vmul.f32 %v1495, 0.040391043
        %v1622 = vmul.f32 %v1496, 0.040391043
        %v1623 = vmul.f32 %v1497, 0.040391043
        %v1624 = vmul.f32 %v1498, 0.040391043
        %v1625 = vmul.f32 %v1499, 0.040391043
        %v1626 = vmul.f32 %v1500, 0.040391043
        %v1627 = vmul.f32 %v1501, 0.040391043
        %v1628 = vmul.f32 %v1502, 0.040391043
        %v1629 = vmul.f32 %v1503, 0.91921794
        %v1630 = vmul.f32 %v1504, 0.91921794
        %v1631 = vmul.f32 %v1505, 0.91921794
        %v1632 = vmul.f32 %v1506, 0.91921794
        %v1633 = vmul.f32 %v1507, 0.91921794
        %v1634 = vmul.f32 %v1508, 0.91921794
        %v1635 = vmul.f32 %v1509, 0.91921794
        %v1636 = vmul.f32 %v1510, 0.91921794
        %v1637 = vmul.f32 %v1511, 0.91921794
        %v1638 = vmul.f32 %v1512, 0.91921794
        %v1639 = vadd.f32 %v1619, %v1629
        %v1640 = vadd.f32 %v1620, %v1630
        %v1641 = vadd.f32 %v1621, %v1631
        %v1642 = vadd.f32 %v1622, %v1632
        %v1643 = vadd.f32 %v1623, %v1633
        %v1644 = vadd.f32 %v1624, %v1634
        %v1645 = vadd.f32 %v1625, %v1635
        %v1646 = vadd.f32 %v1626, %v1636
        %v1647 = vadd.f32 %v1627, %v1637
        %v1648 = vadd.f32 %v1628, %v1638
        %v1649 = vmul.f32 %v1513, 0.040391043
        %v1650 = vmul.f32 %v1514, 0.040391043
        %v1651 = vmul.f32 %v1515, 0.040391043
        %v1652 = vmul.f32 %v1516, 0.040391043
        %v1653 = vmul.f32 %v1517, 0.040391043
        %v1654 = vmul.f32 %v1518, 0.040391043
        %v1655 = vmul.f32 %v1519, 0.040391043
        %v1656 = vmul.f32 %v1520, 0.040391043
        %v1657 = vmul.f32 %v1521, 0.040391043
        %v1658 = vmul.f32 %v1522, 0.040391043
        %v1659 = vadd.f32 %v1639, %v1649
        %v1660 = vadd.f32 %v1640, %v1650
        %v1661 = vadd.f32 %v1641, %v1651
        %v1662 = vadd.f32 %v1642, %v1652
        %v1663 = vadd.f32 %v1643, %v1653
        %v1664 = vadd.f32 %v1644, %v1654
        %v1665 = vadd.f32 %v1645, %v1655
        %v1666 = vadd.f32 %v1646, %v1656
        %v1667 = vadd.f32 %v1647, %v1657
        %v1668 = vadd.f32 %v1648, %v1658
        %1679 = vrot.lane.b32.xlu0 %v1659, 2
        %v1680 = vpop.permute.xlu0 %1679
        %1681 = vrot.lane.b32.xlu0 %v1660, 2
        %v1682 = vpop.permute.xlu0 %1681
        %1683 = vrot.lane.b32.xlu0 %v1661, 2
        %v1684 = vpop.permute.xlu0 %1683
        %1685 = vrot.lane.b32.xlu0 %v1662, 2
        %v1686 = vpop.permute.xlu0 %1685
        %1687 = vrot.lane.b32.xlu0 %v1663, 2
        %v1688 = vpop.permute.xlu0 %1687
        %1689 = vrot.lane.b32.xlu0 %v1664, 2
        %v1690 = vpop.permute.xlu0 %1689
        %1691 = vrot.lane.b32.xlu0 %v1665, 2
        %v1692 = vpop.permute.xlu0 %1691
        %1693 = vrot.lane.b32.xlu0 %v1666, 2
        %v1694 = vpop.permute.xlu0 %1693
        %1695 = vrot.lane.b32.xlu0 %v1667, 2
        %v1696 = vpop.permute.xlu0 %1695
        %1697 = vrot.lane.b32.xlu0 %v1668, 2
        %v1698 = vpop.permute.xlu0 %1697
        %v1699 = vsel %vm1603, %v1680, %v1682
        %v1700 = vsel %vm1603, %v1684, %v1686
        %v1701 = vsel %vm1603, %v1688, %v1690
        %v1702 = vsel %vm1603, %v1692, %v1694
        %v1703 = vsel %vm1603, %v1696, %v1698
        %s1709 = scalar_lea.vmem %s308, 32 [#allocation7]
        %1710 = vst [vmem:[%s1709 - $0x6] sm:$0xc0] %v1699
        %1711 = vst [vmem:[%s1709 + $0x2] sm:$0xff] %v1700
        %1712 = vst [vmem:[%s1709 + $0xa] sm:$0xff] %v1701
        %1713 = vst [vmem:[%s1709 + $0x12] sm:$0xff] %v1702
        %1714 = vst [vmem:[%s1709 + $0x1a] sm:$0x3f] %v1703
        %v1715 = vmul.f32 %v1493, 3.4256063e-06
        %v1716 = vmul.f32 %v1494, 3.4256063e-06
        %v1717 = vmul.f32 %v1495, 3.4256063e-06
        %v1718 = vmul.f32 %v1496, 3.4256063e-06
        %v1719 = vmul.f32 %v1497, 3.4256063e-06
        %v1720 = vmul.f32 %v1498, 3.4256063e-06
        %v1721 = vmul.f32 %v1499, 3.4256063e-06
        %v1722 = vmul.f32 %v1500, 3.4256063e-06
        %v1723 = vmul.f32 %v1501, 3.4256063e-06
        %v1724 = vmul.f32 %v1502, 3.4256063e-06
        %v1725 = vadd.f32 %v1715, %v1533
        %v1726 = vadd.f32 %v1716, %v1534
        %v1727 = vadd.f32 %v1717, %v1535
        %v1728 = vadd.f32 %v1718, %v1536
        %v1729 = vadd.f32 %v1719, %v1537
        %v1730 = vadd.f32 %v1720, %v1538
        %v1731 = vadd.f32 %v1721, %v1539
        %v1732 = vadd.f32 %v1722, %v1540
        %v1733 = vadd.f32 %v1723, %v1541
        %v1734 = vadd.f32 %v1724, %v1542
        %v1735 = vmul.f32 %v1513, 0.959609
        %v1736 = vmul.f32 %v1514, 0.959609
        %v1737 = vmul.f32 %v1515, 0.959609
        %v1738 = vmul.f32 %v1516, 0.959609
        %v1739 = vmul.f32 %v1517, 0.959609
        %v1740 = vmul.f32 %v1518, 0.959609
        %v1741 = vmul.f32 %v1519, 0.959609
        %v1742 = vmul.f32 %v1520, 0.959609
        %v1743 = vmul.f32 %v1521, 0.959609
        %v1744 = vmul.f32 %v1522, 0.959609
        %v1745 = vadd.f32 %v1725, %v1735
        %v1746 = vadd.f32 %v1726, %v1736
        %v1747 = vadd.f32 %v1727, %v1737
        %v1748 = vadd.f32 %v1728, %v1738
        %v1749 = vadd.f32 %v1729, %v1739
        %v1750 = vadd.f32 %v1730, %v1740
        %v1751 = vadd.f32 %v1731, %v1741
        %v1752 = vadd.f32 %v1732, %v1742
        %v1753 = vadd.f32 %v1733, %v1743
        %v1754 = vadd.f32 %v1734, %v1744
        %1765 = vrot.lane.b32.xlu0 %v1745, 2
        %v1766 = vpop.permute.xlu0 %1765
        %1767 = vrot.lane.b32.xlu0 %v1746, 2
        %v1768 = vpop.permute.xlu0 %1767
        %1769 = vrot.lane.b32.xlu0 %v1747, 2
        %v1770 = vpop.permute.xlu0 %1769
        %1771 = vrot.lane.b32.xlu0 %v1748, 2
        %v1772 = vpop.permute.xlu0 %1771
        %1773 = vrot.lane.b32.xlu0 %v1749, 2
        %v1774 = vpop.permute.xlu0 %1773
        %1775 = vrot.lane.b32.xlu0 %v1750, 2
        %v1776 = vpop.permute.xlu0 %1775
        %1777 = vrot.lane.b32.xlu0 %v1751, 2
        %v1778 = vpop.permute.xlu0 %1777
        %1779 = vrot.lane.b32.xlu0 %v1752, 2
        %v1780 = vpop.permute.xlu0 %1779
        %1781 = vrot.lane.b32.xlu0 %v1753, 2
        %v1782 = vpop.permute.xlu0 %1781
        %1783 = vrot.lane.b32.xlu0 %v1754, 2
        %v1784 = vpop.permute.xlu0 %1783
        %v1785 = vsel %vm1603, %v1766, %v1768
        %v1786 = vsel %vm1603, %v1770, %v1772
        %v1787 = vsel %vm1603, %v1774, %v1776
        %v1788 = vsel %vm1603, %v1778, %v1780
        %v1789 = vsel %vm1603, %v1782, %v1784
        %s1795 = scalar_lea.vmem %s308, 64 [#allocation7]
        %1796 = vst [vmem:[%s1795 - $0x6] sm:$0xc0] %v1785
        %1797 = vst [vmem:[%s1795 + $0x2] sm:$0xff] %v1786
        %1798 = vst [vmem:[%s1795 + $0xa] sm:$0xff] %v1787
        %1799 = vst [vmem:[%s1795 + $0x12] sm:$0xff] %v1788
        %1800 = vst [vmem:[%s1795 + $0x1a] sm:$0x3f] %v1789
        %s1801 = sand.u32 %s122, 1
        %s1802 = sand.u32 %s122, 1
        %s1803 = smul.addr %s1802, 96
        %s1804 = scalar_lea.vmem [#allocation7], %s1803
        // Predicated region
        $region45: #{glass_blur.2} parent=31 // pred_check
          %p1805 = pneg %p132
        $region46: #{glass_blur.2} parent=31 // pred_check_branch
          %1807 = sbr.rel (%p1805) target = $region48
        $region47: #{glass_blur.2} parent=31 // pred_region
          %s1808 = smul.u32 4, %s20
          %s1809 = smul.addr %s1808, 8
          %s1810 = scalar_lea.vmem %s3, %s1809
          // Predicated region
          $region49: #{glass_blur.2} parent=47 // pred_check
            _
          $region50: #{glass_blur.2} parent=47 // pred_check_branch
            %1812 = sbr.rel (0) target = $region52
          $region51: #{glass_blur.2} parent=47 // pred_region
            // Predicated region
            $region53: #{glass_blur.2} parent=51 // pred_check
              _
            $region54: #{glass_blur.2} parent=51 // pred_check_branch
              %1814 = sbr.rel (0) target = $region56
            $region55: #{glass_blur.2} parent=51 // pred_region
              // Predicated region
              $region68: #{glass_blur.2} parent=55 // pred_check
                _
              $region69: #{glass_blur.2} parent=55 // pred_check_branch
                %1851 = sbr.rel (0) target = $region71
              $region70: #{glass_blur.2} parent=55 // pred_region
                loop: start=0, step=1, limit=1
                $region72: #{glass_blur.2} parent=70 // loop_pre_header
                  _
                $region73: #{glass_blur.2} parent=70 // loop_header
                  %s1853 = sphi 0, %s1857
                  %p1854 = scmp.ge.s32.totalorder %s1853, 1
                  %s1858 = sphi %s1804, %s1804
                  %s1859 = sphi %s1810, %s1810
                $region74: #{glass_blur.2} parent=70 // loop_header_branch
                  %1856 = sbr.rel (%p1854) target = $region78
                $region75: #{glass_blur.2} parent=70 // loop_body
                  %v1860 = vld [vmem:[%s1858] sm:$0xff]
                  %1861 = vst [vmem:[%s1859] sm:$0xff] %v1860
                  %v1862 = vld [vmem:[%s1858 + $0x8] sm:$0xff]
                  %1863 = vst [vmem:[%s1859 + $0x8] sm:$0xff] %v1862
                  %v1864 = vld [vmem:[%s1858 + $0x10] sm:$0xff]
                  %1865 = vst [vmem:[%s1859 + $0x10] sm:$0xff] %v1864
                  %v1866 = vld [vmem:[%s1858 + $0x18] sm:$0xff]
                  %1867 = vst [vmem:[%s1859 + $0x18] sm:$0xff] %v1866
                  %v1868 = vld [vmem:[%s1858 + $0x20] sm:$0xff]
                  %1869 = vst [vmem:[%s1859 + $0x40] sm:$0xff] %v1868
                  %v1870 = vld [vmem:[%s1858 + $0x28] sm:$0xff]
                  %1871 = vst [vmem:[%s1859 + $0x48] sm:$0xff] %v1870
                  %v1872 = vld [vmem:[%s1858 + $0x30] sm:$0xff]
                  %1873 = vst [vmem:[%s1859 + $0x50] sm:$0xff] %v1872
                  %v1874 = vld [vmem:[%s1858 + $0x38] sm:$0xff]
                  %1875 = vst [vmem:[%s1859 + $0x58] sm:$0xff] %v1874
                  %v1876 = vld [vmem:[%s1858 + $0x40] sm:$0xff]
                  %1877 = vst [vmem:[%s1859 + $0x80] sm:$0xff] %v1876
                  %v1878 = vld [vmem:[%s1858 + $0x48] sm:$0xff]
                  %1879 = vst [vmem:[%s1859 + $0x88] sm:$0xff] %v1878
                  %v1880 = vld [vmem:[%s1858 + $0x50] sm:$0xff]
                  %1881 = vst [vmem:[%s1859 + $0x90] sm:$0xff] %v1880
                  %v1882 = vld [vmem:[%s1858 + $0x58] sm:$0xff]
                  %1883 = vst [vmem:[%s1859 + $0x98] sm:$0xff] %v1882
                $region76: #{glass_blur.2} parent=70 // loop_footer
                  %s1857 = sadd.s32 1, %s1853
                $region77: #{glass_blur.2} parent=70 // loop_footer_branch
                  %1852 = sbr.rel target = $region73
                $region78: #{glass_blur.2} parent=70 // loop_exit
                  _
              $region71: #{glass_blur.2} parent=55 // pred_fallthru
                _
              // Predicated region
              $region79: #{glass_blur.2} parent=55 // pred_check
                _
              $region80: #{glass_blur.2} parent=55 // pred_check_branch
                %1885 = sbr.rel target = $region82
              $region81: #{glass_blur.2} parent=55 // pred_region
                _
              $region82: #{glass_blur.2} parent=55 // pred_fallthru
                _
            $region56: #{glass_blur.2} parent=51 // pred_fallthru
              _
            // Predicated region
            $region57: #{glass_blur.2} parent=51 // pred_check
              _
            $region58: #{glass_blur.2} parent=51 // pred_check_branch
              %1816 = sbr.rel target = $region60
            $region59: #{glass_blur.2} parent=51 // pred_region
              loop: start=0, step=1, limit=1
              $region61: #{glass_blur.2} parent=59 // loop_pre_header
                _
              $region62: #{glass_blur.2} parent=59 // loop_header
                %s1819 = sphi 0, %s1823
                %p1820 = scmp.ge.s32.totalorder %s1819, 1
                %s1824 = sphi %s1804, %s1804
                %s1825 = sphi %s1810, %s1810
              $region63: #{glass_blur.2} parent=59 // loop_header_branch
                %1822 = sbr.rel (%p1820) target = $region67
              $region64: #{glass_blur.2} parent=59 // loop_body
                %v1826 = vld [vmem:[%s1824] sm:$0xff]
                %1827 = vst [vmem:[%s1825] sm:$0xff] %v1826
                %v1828 = vld [vmem:[%s1824 + $0x8] sm:$0xff]
                %1829 = vst [vmem:[%s1825 + $0x8] sm:$0xff] %v1828
                %v1830 = vld [vmem:[%s1824 + $0x10] sm:$0xff]
                %1831 = vst [vmem:[%s1825 + $0x10] sm:$0xff] %v1830
                %v1832 = vld [vmem:[%s1824 + $0x18] sm:$0xff]
                %1833 = vst [vmem:[%s1825 + $0x18] sm:$0xff] %v1832
                %v1834 = vld [vmem:[%s1824 + $0x20] sm:$0xff]
                %1835 = vst [vmem:[%s1825 + $0x40] sm:$0xff] %v1834
                %v1836 = vld [vmem:[%s1824 + $0x28] sm:$0xff]
                %1837 = vst [vmem:[%s1825 + $0x48] sm:$0xff] %v1836
                %v1838 = vld [vmem:[%s1824 + $0x30] sm:$0xff]
                %1839 = vst [vmem:[%s1825 + $0x50] sm:$0xff] %v1838
                %v1840 = vld [vmem:[%s1824 + $0x38] sm:$0xff]
                %1841 = vst [vmem:[%s1825 + $0x58] sm:$0xff] %v1840
                %v1842 = vld [vmem:[%s1824 + $0x40] sm:$0xff]
                %1843 = vst [vmem:[%s1825 + $0x80] sm:$0xff] %v1842
                %v1844 = vld [vmem:[%s1824 + $0x48] sm:$0xff]
                %1845 = vst [vmem:[%s1825 + $0x88] sm:$0xff] %v1844
                %v1846 = vld [vmem:[%s1824 + $0x50] sm:$0xff]
                %1847 = vst [vmem:[%s1825 + $0x90] sm:$0xff] %v1846
                %v1848 = vld [vmem:[%s1824 + $0x58] sm:$0xff]
                %1849 = vst [vmem:[%s1825 + $0x98] sm:$0xff] %v1848
              $region65: #{glass_blur.2} parent=59 // loop_footer
                %s1823 = sadd.s32 1, %s1819
              $region66: #{glass_blur.2} parent=59 // loop_footer_branch
                %1818 = sbr.rel target = $region62
              $region67: #{glass_blur.2} parent=59 // loop_exit
                _
            $region60: #{glass_blur.2} parent=51 // pred_fallthru
              _
          $region52: #{glass_blur.2} parent=47 // pred_fallthru
            _
          %1886 = vnop
        $region48: #{glass_blur.2} parent=31 // pred_fallthru
          _
      $region32: #{glass_blur.2} parent=5 // pred_fallthru
        _
      %p1887 = scmp.le.s32.totalorder 2, %s15
      // Predicated region
      $region83: #{glass_blur.2} parent=5 // pred_check
        %p1888 = pneg %p1887
      $region84: #{glass_blur.2} parent=5 // pred_check_branch
        %1890 = sbr.rel (%p1888) target = $region86
      $region85: #{glass_blur.2} parent=5 // pred_region
        %s1891 = ssub.s32 %s15, 2
        // Predicated region
        $region87: #{glass_blur.2} parent=85 // pred_check
          %p1892 = pneg %p138
        $region88: #{glass_blur.2} parent=85 // pred_check_branch
          %1894 = sbr.rel (%p1892) target = $region90
        $region89: #{glass_blur.2} parent=85 // pred_region
          %s1895 = sand.u32 %s123, 1
          %s1896 = sand.u32 %s123, 1
          %s1897 = smul.addr %s1896, 96
          %s1898 = scalar_lea.vmem [#allocation7], %s1897
        $region90: #{glass_blur.2} parent=85 // pred_fallthru
          _
      $region86: #{glass_blur.2} parent=5 // pred_fallthru
        _
    $region6: #{glass_blur.2} parent=1 // loop_footer
      %s19 = sadd.s32 1, %s15
    $region7: #{glass_blur.2} parent=1 // loop_footer_branch
      %14 = sbr.rel target = $region3
    $region8: #{glass_blur.2} parent=1 // loop_exit
      _
    %1899 = vsyncpa [#allocation3], 1
    %s1900 = scalar_lea.sflag [#allocation3], 1
    %1901 = vsyncpa %s1900, 1
    %1902 = vsyncpa [#allocation5], 1
    %s1903 = scalar_lea.sflag [#allocation5], 1
    %1904 = vsyncpa %s1903, 1

// kernel: glass_blur.3
$region0: #{glass_blur.3}
  #allocation0 [shape = 'u32[]', space=smem, size = 0x4, offset = 0x4, fixed_abs, tag = 'smem constant byte address 0x4 - core index']
  #allocation1 [shape = 'u32[144,128]{1,0:T(1,128)}', space=vmem, size = 0x12000, scoped, tag = 'internal scratch']
  #allocation7 [shape = 's32[]', space=sflag, size = 0x4, offset = 0, fixed_abs, tag = 'sflag constant byte address 0x0 - dummy sync flag']
  %s0 = inlined_call_operand.vmem [shape: f32[3,64,128], index: 0, kind: input, shape index: {}, may-alias: {0,1,2}]
  %s1 = inlined_call_operand.vmem [shape: f32[3,64,128], index: 1, kind: input, shape index: {}, may-alias: {0,1,2}]
  %s2 = inlined_call_operand.vmem [shape: f32[3,64,128], index: 2, kind: input, shape index: {}, may-alias: {0,1,2}]
  %s3 = inlined_call_operand.hbm [shape: f32[3,64,128], index: 3, kind: output, shape index: {}]
  %s4 = sld [smem:[#allocation0]]
  $region159: #{glass_blur.3} parent=0
    _
  %s6 = ssub.s32 1, %s4
  %s7 = scalar_select 0, %s6, %s4
  $region1: #{glass_blur.3} parent=0
    #allocation2 [shape = 'u8[98304]{0}', space=vmem, size = 0x18000, scoped, tag = 'input window, operand 0']
    #allocation3 [shape = 'u8[24576]{0}', space=vmem, size = 0x6000, scoped, tag = 'input window, operand 1']
    #allocation4 [shape = 'u8[24576]{0}', space=vmem, size = 0x6000, scoped, tag = 'input window, operand 2']
    #allocation5 [shape = 'u8[98304]{0}', space=vmem, size = 0x18000, scoped, tag = 'output window, operand 0']
    #allocation6 [shape = 's32[2]{0}', space=sflag, size = 0x8, scoped, tag = 'scoped memory for glass_blur.3']
    %8 = vsyncpa [#allocation6], 0
    %s9 = scalar_lea.sflag [#allocation6], 1
    %10 = vsyncpa %s9, 0
    loop: start=0, step=1, limit=4
    $region2: #{glass_blur.3} parent=1 // loop_pre_header
      _
    $region3: #{glass_blur.3} parent=1 // loop_header
      %s12 = sphi 0, %s16
      %p13 = scmp.ge.s32.totalorder %s12, 4
      %s22 = sphi 0, %s24
      %s25 = sphi 0, %s22
      %s26 = sphi 0, %s25
      %s42 = sphi 0, %s26
      %s56 = sphi 0, %s58
      %s59 = sphi 0, %s56
      %s60 = sphi 0, %s59
      %s76 = sphi 0, %s60
      %s90 = sphi 0, %s92
      %s93 = sphi 0, %s90
      %s94 = sphi 0, %s93
      %s110 = sphi 0, %s94
      %s116 = sphi 0, %s118
      %s119 = sphi 0, %s116
      %s120 = sphi 0, %s119
      %s136 = sphi 0, %s120
    $region4: #{glass_blur.3} parent=1 // loop_header_branch
      %15 = sbr.rel (%p13) target = $region8
    $region5: #{glass_blur.3} parent=1 // loop_body
      %s17 = ssub.s32 %s12, 1
      %s18 = ssub.s32 %s12, 2
      %s19 = sadd.s32 %s12, 1
      %s20 = ssub.s32 %s12, %s19
      %p21 = scmp.eq.s32.totalorder %s20, 0
      %s23 = sadd.s32 %s22, 1
      %s24 = scalar_select %p21, %s22, %s23
      %p27 = pneg %p21
      %p28 = scmp.eq.s32.totalorder %s12, 1
      %p29 = por %p27, %p28
      %p30 = scmp.ne.s32.totalorder %s22, %s25
      %p31 = scmp.eq.s32.totalorder %s12, 0
      %p32 = por %p30, %p31
      %p33 = scmp.ne.s32.totalorder %s22, %s25
      %p34 = scmp.eq.s32.totalorder %s17, 1
      %p35 = por %p33, %p34
      %p36 = scmp.ne.s32.totalorder %s25, %s26
      %p37 = scmp.eq.s32.totalorder %s17, 0
      %p38 = por %p36, %p37
      %p39 = scmp.ne.s32.totalorder %s25, %s26
      %p40 = scmp.eq.s32.totalorder %s18, 1
      %p41 = por %p39, %p40
      %p43 = scmp.ne.s32.totalorder %s26, %s42
      %p44 = scmp.eq.s32.totalorder %s18, 0
      %p45 = por %p43, %p44
      %s46 = smul.u32 %s12, 4
      %s47 = ssub.s32 %s46, 1
      %p48 = scmp.gt.s32.totalorder %s47, 0
      %s49 = scalar_select %p48, %s47, 0
      %s50 = smul.u32 %s19, 4
      %s51 = ssub.s32 %s50, 1
      %p52 = scmp.gt.s32.totalorder %s51, 0
      %s53 = scalar_select %p52, %s51, 0
      %s54 = ssub.s32 %s49, %s53
      %p55 = scmp.eq.s32.totalorder %s54, 0
      %s57 = sadd.s32 %s56, 1
      %s58 = scalar_select %p55, %s56, %s57
      %p61 = pneg %p55
      %p62 = scmp.eq.s32.totalorder %s12, 1
      %p63 = por %p61, %p62
      %p64 = scmp.ne.s32.totalorder %s56, %s59
      %p65 = scmp.eq.s32.totalorder %s12, 0
      %p66 = por %p64, %p65
      %p67 = scmp.ne.s32.totalorder %s56, %s59
      %p68 = scmp.eq.s32.totalorder %s17, 1
      %p69 = por %p67, %p68
      %p70 = scmp.ne.s32.totalorder %s59, %s60
      %p71 = scmp.eq.s32.totalorder %s17, 0
      %p72 = por %p70, %p71
      %p73 = scmp.ne.s32.totalorder %s59, %s60
      %p74 = scmp.eq.s32.totalorder %s18, 1
      %p75 = por %p73, %p74
      %p77 = scmp.ne.s32.totalorder %s60, %s76
      %p78 = scmp.eq.s32.totalorder %s18, 0
      %p79 = por %p77, %p78
      %s80 = sadd.s32 %s12, 1
      %s81 = smul.u32 %s80, 4
      %p82 = scmp.lt.s32.totalorder %s81, 7
      %s83 = scalar_select %p82, %s81, 7
      %s84 = sadd.s32 %s19, 1
      %s85 = smul.u32 %s84, 4
      %p86 = scmp.lt.s32.totalorder %s85, 7
      %s87 = scalar_select %p86, %s85, 7
      %s88 = ssub.s32 %s83, %s87
      %p89 = scmp.eq.s32.totalorder %s88, 0
      %s91 = sadd.s32 %s90, 1
      %s92 = scalar_select %p89, %s90, %s91
      %p95 = pneg %p89
      %p96 = scmp.eq.s32.totalorder %s12, 1
      %p97 = por %p95, %p96
      %p98 = scmp.ne.s32.totalorder %s90, %s93
      %p99 = scmp.eq.s32.totalorder %s12, 0
      %p100 = por %p98, %p99
      %p101 = scmp.ne.s32.totalorder %s90, %s93
      %p102 = scmp.eq.s32.totalorder %s17, 1
      %p103 = por %p101, %p102
      %p104 = scmp.ne.s32.totalorder %s93, %s94
      %p105 = scmp.eq.s32.totalorder %s17, 0
      %p106 = por %p104, %p105
      %p107 = scmp.ne.s32.totalorder %s93, %s94
      %p108 = scmp.eq.s32.totalorder %s18, 1
      %p109 = por %p107, %p108
      %p111 = scmp.ne.s32.totalorder %s94, %s110
      %p112 = scmp.eq.s32.totalorder %s18, 0
      %p113 = por %p111, %p112
      %s114 = ssub.s32 %s12, %s19
      %p115 = scmp.eq.s32.totalorder %s114, 0
      %s117 = sadd.s32 %s116, 1
      %s118 = scalar_select %p115, %s116, %s117
      %p121 = pneg %p115
      %p122 = scmp.eq.s32.totalorder %s12, 1
      %p123 = por %p121, %p122
      %p124 = scmp.ne.s32.totalorder %s116, %s119
      %p125 = scmp.eq.s32.totalorder %s12, 0
      %p126 = por %p124, %p125
      %p127 = scmp.ne.s32.totalorder %s116, %s119
      %p128 = scmp.eq.s32.totalorder %s17, 1
      %p129 = por %p127, %p128
      %p130 = scmp.ne.s32.totalorder %s119, %s120
      %p131 = scmp.eq.s32.totalorder %s17, 0
      %p132 = por %p130, %p131
      %p133 = scmp.ne.s32.totalorder %s119, %s120
      %p134 = scmp.eq.s32.totalorder %s18, 1
      %p135 = por %p133, %p134
      %p137 = scmp.ne.s32.totalorder %s120, %s136
      %p138 = scmp.eq.s32.totalorder %s18, 0
      %p139 = por %p137, %p138
      %p140 = scmp.le.s32.totalorder 1, %s12
      %p141 = scmp.lt.s32.totalorder %s12, 3
      %p142 = pnand %p140, %p141
      %p143 = pneg %p142
      // Predicated region
      $region9: #{glass_blur.3} parent=5 // pred_check
        _
      $region10: #{glass_blur.3} parent=5 // pred_check_branch
        %145 = sbr.rel (%p142) target = $region12
      $region11: #{glass_blur.3} parent=5 // pred_region
        %s146 = ssub.s32 %s12, 1
      $region12: #{glass_blur.3} parent=5 // pred_fallthru
        _
      %p147 = scmp.lt.s32.totalorder %s12, 2
      // Predicated region
      $region13: #{glass_blur.3} parent=5 // pred_check
        %p148 = pneg %p147
      $region14: #{glass_blur.3} parent=5 // pred_check_branch
        %150 = sbr.rel (%p148) target = $region16
      $region15: #{glass_blur.3} parent=5 // pred_region
        // Predicated region
        $region17: #{glass_blur.3} parent=15 // pred_check
          %p151 = pneg %p32
        $region18: #{glass_blur.3} parent=15 // pred_check_branch
          %153 = sbr.rel (%p151) target = $region20
        $region19: #{glass_blur.3} parent=15 // pred_region
          %s154 = sand.u32 %s22, 1
          %s155 = sand.u32 %s22, 1
          %s156 = smul.addr %s155, 96
          %s157 = scalar_lea.vmem [#allocation2], %s156
          %s158 = smul.u32 4, %s12
          %s159 = smul.addr %s158, 8
          %s160 = scalar_lea.vmem %s0, %s159
          // Predicated region
          $region21: #{glass_blur.3} parent=19 // pred_check
            _
          $region22: #{glass_blur.3} parent=19 // pred_check_branch
            %162 = sbr.rel (0) target = $region24
          $region23: #{glass_blur.3} parent=19 // pred_region
            // Predicated region
            $region25: #{glass_blur.3} parent=23 // pred_check
              _
            $region26: #{glass_blur.3} parent=23 // pred_check_branch
              %164 = sbr.rel (0) target = $region28
            $region27: #{glass_blur.3} parent=23 // pred_region
              // Predicated region
              $region40: #{glass_blur.3} parent=27 // pred_check
                _
              $region41: #{glass_blur.3} parent=27 // pred_check_branch
                %201 = sbr.rel (0) target = $region43
              $region42: #{glass_blur.3} parent=27 // pred_region
                loop: start=0, step=1, limit=1
                $region44: #{glass_blur.3} parent=42 // loop_pre_header
                  _
                $region45: #{glass_blur.3} parent=42 // loop_header
                  %s203 = sphi 0, %s207
                  %p204 = scmp.ge.s32.totalorder %s203, 1
                  %s208 = sphi %s160, %s160
                  %s209 = sphi %s157, %s157
                $region46: #{glass_blur.3} parent=42 // loop_header_branch
                  %206 = sbr.rel (%p204) target = $region50
                $region47: #{glass_blur.3} parent=42 // loop_body
                  %v210 = vld [vmem:[%s208] sm:$0xff]
                  %211 = vst [vmem:[%s209] sm:$0xff] %v210
                  %v212 = vld [vmem:[%s208 + $0x8] sm:$0xff]
                  %213 = vst [vmem:[%s209 + $0x8] sm:$0xff] %v212
                  %v214 = vld [vmem:[%s208 + $0x10] sm:$0xff]
                  %215 = vst [vmem:[%s209 + $0x10] sm:$0xff] %v214
                  %v216 = vld [vmem:[%s208 + $0x18] sm:$0xff]
                  %217 = vst [vmem:[%s209 + $0x18] sm:$0xff] %v216
                  %v218 = vld [vmem:[%s208 + $0x40] sm:$0xff]
                  %219 = vst [vmem:[%s209 + $0x20] sm:$0xff] %v218
                  %v220 = vld [vmem:[%s208 + $0x48] sm:$0xff]
                  %221 = vst [vmem:[%s209 + $0x28] sm:$0xff] %v220
                  %v222 = vld [vmem:[%s208 + $0x50] sm:$0xff]
                  %223 = vst [vmem:[%s209 + $0x30] sm:$0xff] %v222
                  %v224 = vld [vmem:[%s208 + $0x58] sm:$0xff]
                  %225 = vst [vmem:[%s209 + $0x38] sm:$0xff] %v224
                  %v226 = vld [vmem:[%s208 + $0x80] sm:$0xff]
                  %227 = vst [vmem:[%s209 + $0x40] sm:$0xff] %v226
                  %v228 = vld [vmem:[%s208 + $0x88] sm:$0xff]
                  %229 = vst [vmem:[%s209 + $0x48] sm:$0xff] %v228
                  %v230 = vld [vmem:[%s208 + $0x90] sm:$0xff]
                  %231 = vst [vmem:[%s209 + $0x50] sm:$0xff] %v230
                  %v232 = vld [vmem:[%s208 + $0x98] sm:$0xff]
                  %233 = vst [vmem:[%s209 + $0x58] sm:$0xff] %v232
                $region48: #{glass_blur.3} parent=42 // loop_footer
                  %s207 = sadd.s32 1, %s203
                $region49: #{glass_blur.3} parent=42 // loop_footer_branch
                  %202 = sbr.rel target = $region45
                $region50: #{glass_blur.3} parent=42 // loop_exit
                  _
              $region43: #{glass_blur.3} parent=27 // pred_fallthru
                _
              // Predicated region
              $region51: #{glass_blur.3} parent=27 // pred_check
                _
              $region52: #{glass_blur.3} parent=27 // pred_check_branch
                %235 = sbr.rel target = $region54
              $region53: #{glass_blur.3} parent=27 // pred_region
                _
              $region54: #{glass_blur.3} parent=27 // pred_fallthru
                _
            $region28: #{glass_blur.3} parent=23 // pred_fallthru
              _
            // Predicated region
            $region29: #{glass_blur.3} parent=23 // pred_check
              _
            $region30: #{glass_blur.3} parent=23 // pred_check_branch
              %166 = sbr.rel target = $region32
            $region31: #{glass_blur.3} parent=23 // pred_region
              loop: start=0, step=1, limit=1
              $region33: #{glass_blur.3} parent=31 // loop_pre_header
                _
              $region34: #{glass_blur.3} parent=31 // loop_header
                %s169 = sphi 0, %s173
                %p170 = scmp.ge.s32.totalorder %s169, 1
                %s174 = sphi %s160, %s160
                %s175 = sphi %s157, %s157
              $region35: #{glass_blur.3} parent=31 // loop_header_branch
                %172 = sbr.rel (%p170) target = $region39
              $region36: #{glass_blur.3} parent=31 // loop_body
                %v176 = vld [vmem:[%s174] sm:$0xff]
                %177 = vst [vmem:[%s175] sm:$0xff] %v176
                %v178 = vld [vmem:[%s174 + $0x8] sm:$0xff]
                %179 = vst [vmem:[%s175 + $0x8] sm:$0xff] %v178
                %v180 = vld [vmem:[%s174 + $0x10] sm:$0xff]
                %181 = vst [vmem:[%s175 + $0x10] sm:$0xff] %v180
                %v182 = vld [vmem:[%s174 + $0x18] sm:$0xff]
                %183 = vst [vmem:[%s175 + $0x18] sm:$0xff] %v182
                %v184 = vld [vmem:[%s174 + $0x40] sm:$0xff]
                %185 = vst [vmem:[%s175 + $0x20] sm:$0xff] %v184
                %v186 = vld [vmem:[%s174 + $0x48] sm:$0xff]
                %187 = vst [vmem:[%s175 + $0x28] sm:$0xff] %v186
                %v188 = vld [vmem:[%s174 + $0x50] sm:$0xff]
                %189 = vst [vmem:[%s175 + $0x30] sm:$0xff] %v188
                %v190 = vld [vmem:[%s174 + $0x58] sm:$0xff]
                %191 = vst [vmem:[%s175 + $0x38] sm:$0xff] %v190
                %v192 = vld [vmem:[%s174 + $0x80] sm:$0xff]
                %193 = vst [vmem:[%s175 + $0x40] sm:$0xff] %v192
                %v194 = vld [vmem:[%s174 + $0x88] sm:$0xff]
                %195 = vst [vmem:[%s175 + $0x48] sm:$0xff] %v194
                %v196 = vld [vmem:[%s174 + $0x90] sm:$0xff]
                %197 = vst [vmem:[%s175 + $0x50] sm:$0xff] %v196
                %v198 = vld [vmem:[%s174 + $0x98] sm:$0xff]
                %199 = vst [vmem:[%s175 + $0x58] sm:$0xff] %v198
              $region37: #{glass_blur.3} parent=31 // loop_footer
                %s173 = sadd.s32 1, %s169
              $region38: #{glass_blur.3} parent=31 // loop_footer_branch
                %168 = sbr.rel target = $region34
              $region39: #{glass_blur.3} parent=31 // loop_exit
                _
            $region32: #{glass_blur.3} parent=23 // pred_fallthru
              _
          $region24: #{glass_blur.3} parent=19 // pred_fallthru
            _
          %236 = vnop
        $region20: #{glass_blur.3} parent=15 // pred_fallthru
          _
        // Predicated region
        $region55: #{glass_blur.3} parent=15 // pred_check
          %p237 = pneg %p66
        $region56: #{glass_blur.3} parent=15 // pred_check_branch
          %239 = sbr.rel (%p237) target = $region58
        $region57: #{glass_blur.3} parent=15 // pred_region
          %s240 = sand.u32 %s56, 1
          %s241 = sand.u32 %s56, 1
          %s242 = smul.addr %s241, 24
          %s243 = scalar_lea.vmem [#allocation3], %s242
          %s244 = smul.u32 %s12, 4
          %s245 = ssub.s32 %s244, 1
          %p246 = scmp.gt.s32.totalorder %s245, 0
          %s247 = scalar_select %p246, %s245, 0
          %s248 = smul.addr %s247, 8
          %s249 = scalar_lea.vmem %s1, %s248
          // Predicated region
          $region59: #{glass_blur.3} parent=57 // pred_check
            _
          $region60: #{glass_blur.3} parent=57 // pred_check_branch
            %251 = sbr.rel (0) target = $region62
          $region61: #{glass_blur.3} parent=57 // pred_region
            // Predicated region
            $region63: #{glass_blur.3} parent=61 // pred_check
              _
            $region64: #{glass_blur.3} parent=61 // pred_check_branch
              %253 = sbr.rel (0) target = $region66
            $region65: #{glass_blur.3} parent=61 // pred_region
              // Predicated region
              $region78: #{glass_blur.3} parent=65 // pred_check
                _
              $region79: #{glass_blur.3} parent=65 // pred_check_branch
                %272 = sbr.rel (0) target = $region81
              $region80: #{glass_blur.3} parent=65 // pred_region
                loop: start=0, step=1, limit=1
                $region82: #{glass_blur.3} parent=80 // loop_pre_header
                  _
                $region83: #{glass_blur.3} parent=80 // loop_header
                  %s274 = sphi 0, %s278
                  %p275 = scmp.ge.s32.totalorder %s274, 1
                  %s279 = sphi %s249, %s249
                  %s280 = sphi %s243, %s243
                $region84: #{glass_blur.3} parent=80 // loop_header_branch
                  %277 = sbr.rel (%p275) target = $region88
                $region85: #{glass_blur.3} parent=80 // loop_body
                  %v281 = vld [vmem:[%s279] sm:$0xff]
                  %282 = vst [vmem:[%s280] sm:$0xff] %v281
                  %v283 = vld [vmem:[%s279 + $0x40] sm:$0xff]
                  %284 = vst [vmem:[%s280 + $0x8] sm:$0xff] %v283
                  %v285 = vld [vmem:[%s279 + $0x80] sm:$0xff]
                  %286 = vst [vmem:[%s280 + $0x10] sm:$0xff] %v285
                $region86: #{glass_blur.3} parent=80 // loop_footer
                  %s278 = sadd.s32 1, %s274
                $region87: #{glass_blur.3} parent=80 // loop_footer_branch
                  %273 = sbr.rel target = $region83
                $region88: #{glass_blur.3} parent=80 // loop_exit
                  _
              $region81: #{glass_blur.3} parent=65 // pred_fallthru
                _
              // Predicated region
              $region89: #{glass_blur.3} parent=65 // pred_check
                _
              $region90: #{glass_blur.3} parent=65 // pred_check_branch
                %288 = sbr.rel target = $region92
              $region91: #{glass_blur.3} parent=65 // pred_region
                _
              $region92: #{glass_blur.3} parent=65 // pred_fallthru
                _
            $region66: #{glass_blur.3} parent=61 // pred_fallthru
              _
            // Predicated region
            $region67: #{glass_blur.3} parent=61 // pred_check
              _
            $region68: #{glass_blur.3} parent=61 // pred_check_branch
              %255 = sbr.rel target = $region70
            $region69: #{glass_blur.3} parent=61 // pred_region
              loop: start=0, step=1, limit=1
              $region71: #{glass_blur.3} parent=69 // loop_pre_header
                _
              $region72: #{glass_blur.3} parent=69 // loop_header
                %s258 = sphi 0, %s262
                %p259 = scmp.ge.s32.totalorder %s258, 1
                %s263 = sphi %s249, %s249
                %s264 = sphi %s243, %s243
              $region73: #{glass_blur.3} parent=69 // loop_header_branch
                %261 = sbr.rel (%p259) target = $region77
              $region74: #{glass_blur.3} parent=69 // loop_body
                %v265 = vld [vmem:[%s263] sm:$0xff]
                %266 = vst [vmem:[%s264] sm:$0xff] %v265
                %v267 = vld [vmem:[%s263 + $0x40] sm:$0xff]
                %268 = vst [vmem:[%s264 + $0x8] sm:$0xff] %v267
                %v269 = vld [vmem:[%s263 + $0x80] sm:$0xff]
                %270 = vst [vmem:[%s264 + $0x10] sm:$0xff] %v269
              $region75: #{glass_blur.3} parent=69 // loop_footer
                %s262 = sadd.s32 1, %s258
              $region76: #{glass_blur.3} parent=69 // loop_footer_branch
                %257 = sbr.rel target = $region72
              $region77: #{glass_blur.3} parent=69 // loop_exit
                _
            $region70: #{glass_blur.3} parent=61 // pred_fallthru
              _
          $region62: #{glass_blur.3} parent=57 // pred_fallthru
            _
          %289 = vnop
        $region58: #{glass_blur.3} parent=15 // pred_fallthru
          _
        // Predicated region
        $region93: #{glass_blur.3} parent=15 // pred_check
          %p290 = pneg %p100
        $region94: #{glass_blur.3} parent=15 // pred_check_branch
          %292 = sbr.rel (%p290) target = $region96
        $region95: #{glass_blur.3} parent=15 // pred_region
          %s293 = sand.u32 %s90, 1
          %s294 = sand.u32 %s90, 1
          %s295 = smul.addr %s294, 24
          %s296 = scalar_lea.vmem [#allocation4], %s295
          %s297 = sadd.s32 %s12, 1
          %s298 = smul.u32 %s297, 4
          %p299 = scmp.lt.s32.totalorder %s298, 7
          %s300 = scalar_select %p299, %s298, 7
          %s301 = smul.addr %s300, 8
          %s302 = scalar_lea.vmem %s2, %s301
          // Predicated region
          $region97: #{glass_blur.3} parent=95 // pred_check
            _
          $region98: #{glass_blur.3} parent=95 // pred_check_branch
            %304 = sbr.rel (0) target = $region100
          $region99: #{glass_blur.3} parent=95 // pred_region
            // Predicated region
            $region101: #{glass_blur.3} parent=99 // pred_check
              _
            $region102: #{glass_blur.3} parent=99 // pred_check_branch
              %306 = sbr.rel (0) target = $region104
            $region103: #{glass_blur.3} parent=99 // pred_region
              // Predicated region
              $region116: #{glass_blur.3} parent=103 // pred_check
                _
              $region117: #{glass_blur.3} parent=103 // pred_check_branch
                %325 = sbr.rel (0) target = $region119
              $region118: #{glass_blur.3} parent=103 // pred_region
                loop: start=0, step=1, limit=1
                $region120: #{glass_blur.3} parent=118 // loop_pre_header
                  _
                $region121: #{glass_blur.3} parent=118 // loop_header
                  %s327 = sphi 0, %s331
                  %p328 = scmp.ge.s32.totalorder %s327, 1
                  %s332 = sphi %s302, %s302
                  %s333 = sphi %s296, %s296
                $region122: #{glass_blur.3} parent=118 // loop_header_branch
                  %330 = sbr.rel (%p328) target = $region126
                $region123: #{glass_blur.3} parent=118 // loop_body
                  %v334 = vld [vmem:[%s332] sm:$0xff]
                  %335 = vst [vmem:[%s333] sm:$0xff] %v334
                  %v336 = vld [vmem:[%s332 + $0x40] sm:$0xff]
                  %337 = vst [vmem:[%s333 + $0x8] sm:$0xff] %v336
                  %v338 = vld [vmem:[%s332 + $0x80] sm:$0xff]
                  %339 = vst [vmem:[%s333 + $0x10] sm:$0xff] %v338
                $region124: #{glass_blur.3} parent=118 // loop_footer
                  %s331 = sadd.s32 1, %s327
                $region125: #{glass_blur.3} parent=118 // loop_footer_branch
                  %326 = sbr.rel target = $region121
                $region126: #{glass_blur.3} parent=118 // loop_exit
                  _
              $region119: #{glass_blur.3} parent=103 // pred_fallthru
                _
              // Predicated region
              $region127: #{glass_blur.3} parent=103 // pred_check
                _
              $region128: #{glass_blur.3} parent=103 // pred_check_branch
                %341 = sbr.rel target = $region130
              $region129: #{glass_blur.3} parent=103 // pred_region
                _
              $region130: #{glass_blur.3} parent=103 // pred_fallthru
                _
            $region104: #{glass_blur.3} parent=99 // pred_fallthru
              _
            // Predicated region
            $region105: #{glass_blur.3} parent=99 // pred_check
              _
            $region106: #{glass_blur.3} parent=99 // pred_check_branch
              %308 = sbr.rel target = $region108
            $region107: #{glass_blur.3} parent=99 // pred_region
              loop: start=0, step=1, limit=1
              $region109: #{glass_blur.3} parent=107 // loop_pre_header
                _
              $region110: #{glass_blur.3} parent=107 // loop_header
                %s311 = sphi 0, %s315
                %p312 = scmp.ge.s32.totalorder %s311, 1
                %s316 = sphi %s302, %s302
                %s317 = sphi %s296, %s296
              $region111: #{glass_blur.3} parent=107 // loop_header_branch
                %314 = sbr.rel (%p312) target = $region115
              $region112: #{glass_blur.3} parent=107 // loop_body
                %v318 = vld [vmem:[%s316] sm:$0xff]
                %319 = vst [vmem:[%s317] sm:$0xff] %v318
                %v320 = vld [vmem:[%s316 + $0x40] sm:$0xff]
                %321 = vst [vmem:[%s317 + $0x8] sm:$0xff] %v320
                %v322 = vld [vmem:[%s316 + $0x80] sm:$0xff]
                %323 = vst [vmem:[%s317 + $0x10] sm:$0xff] %v322
              $region113: #{glass_blur.3} parent=107 // loop_footer
                %s315 = sadd.s32 1, %s311
              $region114: #{glass_blur.3} parent=107 // loop_footer_branch
                %310 = sbr.rel target = $region110
              $region115: #{glass_blur.3} parent=107 // loop_exit
                _
            $region108: #{glass_blur.3} parent=99 // pred_fallthru
              _
          $region100: #{glass_blur.3} parent=95 // pred_fallthru
            _
          %342 = vnop
        $region96: #{glass_blur.3} parent=15 // pred_fallthru
          _
      $region16: #{glass_blur.3} parent=5 // pred_fallthru
        _
      %p343 = scmp.le.s32.totalorder 1, %s12
      %p344 = scmp.lt.s32.totalorder %s12, 3
      %p345 = pnand %p343, %p344
      %p346 = pneg %p345
      // Predicated region
      $region131: #{glass_blur.3} parent=5 // pred_check
        _
      $region132: #{glass_blur.3} parent=5 // pred_check_branch
        %348 = sbr.rel (%p345) target = $region134
      $region133: #{glass_blur.3} parent=5 // pred_region
        %s349 = ssub.s32 %s12, 1
        %s350 = sand.u32 %s25, 1
        %s351 = sand.u32 %s25, 1
        %s352 = smul.addr %s351, 96
        %s353 = scalar_lea.vmem [#allocation2], %s352
        // Predicated region
        $region135: #{glass_blur.3} parent=133 // pred_check
          %p354 = pneg %p38
        $region136: #{glass_blur.3} parent=133 // pred_check_branch
          %356 = sbr.rel (%p354) target = $region138
        $region137: #{glass_blur.3} parent=133 // pred_region
          _
        $region138: #{glass_blur.3} parent=133 // pred_fallthru
          _
        %s357 = sand.u32 %s59, 1
        %s358 = sand.u32 %s59, 1
        %s359 = smul.addr %s358, 24
        %s360 = scalar_lea.vmem [#allocation3], %s359
        // Predicated region
        $region139: #{glass_blur.3} parent=133 // pred_check
          %p361 = pneg %p72
        $region140: #{glass_blur.3} parent=133 // pred_check_branch
          %363 = sbr.rel (%p361) target = $region142
        $region141: #{glass_blur.3} parent=133 // pred_region
          _
        $region142: #{glass_blur.3} parent=133 // pred_fallthru
          _
        %s364 = sand.u32 %s93, 1
        %s365 = sand.u32 %s93, 1
        %s366 = smul.addr %s365, 24
        %s367 = scalar_lea.vmem [#allocation4], %s366
        // Predicated region
        $region143: #{glass_blur.3} parent=133 // pred_check
          %p368 = pneg %p106
        $region144: #{glass_blur.3} parent=133 // pred_check_branch
          %370 = sbr.rel (%p368) target = $region146
        $region145: #{glass_blur.3} parent=133 // pred_region
          _
        $region146: #{glass_blur.3} parent=133 // pred_fallthru
          _
        %s371 = sand.u32 %s25, 1
        %s372 = sand.u32 %s25, 1
        %s373 = smul.addr %s372, 96
        %s374 = scalar_lea.vmem [#allocation2], %s373
        %p375 = pneg %p38
        %p376 = pneg %p35
        %s377 = sand.u32 %s59, 1
        %s378 = sand.u32 %s59, 1
        %s379 = smul.addr %s378, 24
        %s380 = scalar_lea.vmem [#allocation3], %s379
        %p381 = pneg %p72
        %p382 = pneg %p69
        %s383 = sand.u32 %s93, 1
        %s384 = sand.u32 %s93, 1
        %s385 = smul.addr %s384, 24
        %s386 = scalar_lea.vmem [#allocation4], %s385
        %p387 = pneg %p106
        %p388 = pneg %p103
        %p389 = pneg %p132
        %p390 = pneg %p129
        %s391 = sand.u32 %s119, 1
        %s392 = scalar_lea.sflag [#allocation6], %s391
        %s393 = sand.u32 %s119, 1
        %s394 = smul.addr %s393, 96
        %s395 = scalar_lea.vmem [#allocation5], %s394
        %s396 = smul.u32 4, %s17
        %s397 = smul.u32 %s17, 4
        %s398 = ssub.s32 %s397, 1
        %p399 = scmp.gt.s32.totalorder %s398, 0
        %s400 = scalar_select %p399, %s398, 0
        %s401 = sadd.s32 %s17, 1
        %s402 = smul.u32 %s401, 4
        %p403 = scmp.lt.s32.totalorder %s402, 7
        %s404 = scalar_select %p403, %s402, 7
        %s405 = smul.u32 4, %s17
        %v406 = vld [vmem:[%s353] sm:$0xff]
        %v407 = vld [vmem:[%s353 + $0x8] sm:$0xff]
        %v408 = vld [vmem:[%s353 + $0x10] sm:$0xff]
        %v409 = vld [vmem:[%s353 + $0x18] sm:$0xff]
        %v410 = vld [vmem:[%s353 + $0x20] sm:$0xff]
        %v411 = vld [vmem:[%s353 + $0x28] sm:$0xff]
        %v412 = vld [vmem:[%s353 + $0x30] sm:$0xff]
        %v413 = vld [vmem:[%s353 + $0x38] sm:$0xff]
        %v414 = vld [vmem:[%s353 + $0x40] sm:$0xff]
        %v415 = vld [vmem:[%s353 + $0x48] sm:$0xff]
        %v416 = vld [vmem:[%s353 + $0x50] sm:$0xff]
        %v417 = vld [vmem:[%s353 + $0x58] sm:$0xff]
        %p418 = scmp.eq.s32.totalorder %s17, 0
        %s419 = scalar_select %p418, 1, 0
        %s420 = scvt.s32.f32 %s419
        %p421 = scmp.eq.s32.totalorder %s17, 1
        %s422 = scalar_select %p421, 1, 0
        %s423 = scvt.s32.f32 %s422
        %v424 = vlaneseq
        %v425 = vshrl.u32 %v424, 7
        %v426 = vsub.s32 0, %v425
        %v427 = vrot.slane %v406, %v426
        %v428 = vlaneseq
        %v429 = vshrl.u32 %v428, 7
        %v430 = vsub.s32 0, %v429
        %v431 = vrot.slane %v410, %v430
        %v432 = vlaneseq
        %v433 = vshrl.u32 %v432, 7
        %v434 = vsub.s32 0, %v433
        %v435 = vrot.slane %v414, %v434
        %v436 = vlaneseq
        %v437 = vshrl.u32 %v436, 7
        %v438 = vsub.s32 7, %v437
        %v439 = vrot.slane %v409, %v438
        %v440 = vlaneseq
        %v441 = vshrl.u32 %v440, 7
        %v442 = vsub.s32 7, %v441
        %v443 = vrot.slane %v413, %v442
        %v444 = vlaneseq
        %v445 = vshrl.u32 %v444, 7
        %v446 = vsub.s32 7, %v445
        %v447 = vrot.slane %v417, %v446
        %v448 = vstv %s420
        %v449 = vmul.f32 %v448, %v427
        %v450 = vmul.f32 %v448, %v431
        %v451 = vmul.f32 %v448, %v435
        %s452 = ssub.f32 1.0, %s420
        %v453 = vld [vmem:[%s360] sm:$0xff]
        %v454 = vld [vmem:[%s360 + $0x8] sm:$0xff]
        %v455 = vld [vmem:[%s360 + $0x10] sm:$0xff]
        %v456 = vstv %s452
        %v457 = vmul.f32 %v456, %v453
        %v458 = vmul.f32 %v456, %v454
        %v459 = vmul.f32 %v456, %v455
        %v460 = vadd.f32 %v449, %v457
        %v461 = vadd.f32 %v450, %v458
        %v462 = vadd.f32 %v451, %v459
        %v463 = vstv %s423
        %v464 = vmul.f32 %v463, %v439
        %v465 = vmul.f32 %v463, %v443
        %v466 = vmul.f32 %v463, %v447
        %s467 = ssub.f32 1.0, %s423
        %v468 = vld [vmem:[%s367] sm:$0xff]
        %v469 = vld [vmem:[%s367 + $0x8] sm:$0xff]
        %v470 = vld [vmem:[%s367 + $0x10] sm:$0xff]
        %v471 = vstv %s467
        %v472 = vmul.f32 %v471, %v468
        %v473 = vmul.f32 %v471, %v469
        %v474 = vmul.f32 %v471, %v470
        %v475 = vadd.f32 %v464, %v472
        %v476 = vadd.f32 %v465, %v473
        %v477 = vadd.f32 %v466, %v474
        %v478 = vmul.f32 %v460, 3.4256063e-06
        %v479 = vmul.f32 %v406, 3.4256063e-06
        %v480 = vmul.f32 %v407, 3.4256063e-06
        %v481 = vmul.f32 %v408, 3.4256063e-06
        %v482 = vmul.f32 %v409, 3.4256063e-06
        %v483 = vmul.f32 %v461, 3.4256063e-06
        %v484 = vmul.f32 %v410, 3.4256063e-06
        %v485 = vmul.f32 %v411, 3.4256063e-06
        %v486 = vmul.f32 %v412, 3.4256063e-06
        %v487 = vmul.f32 %v413, 3.4256063e-06
        %v488 = vmul.f32 %v462, 3.4256063e-06
        %v489 = vmul.f32 %v414, 3.4256063e-06
        %v490 = vmul.f32 %v415, 3.4256063e-06
        %v491 = vmul.f32 %v416, 3.4256063e-06
        %v492 = vmul.f32 %v417, 3.4256063e-06
        %v493 = vmul.f32 %v460, 0.040387616
        %v494 = vmul.f32 %v406, 0.040387616
        %v495 = vmul.f32 %v407, 0.040387616
        %v496 = vmul.f32 %v408, 0.040387616
        %v497 = vmul.f32 %v409, 0.040387616
        %v498 = vmul.f32 %v461, 0.040387616
        %v499 = vmul.f32 %v410, 0.040387616
        %v500 = vmul.f32 %v411, 0.040387616
        %v501 = vmul.f32 %v412, 0.040387616
        %v502 = vmul.f32 %v413, 0.040387616
        %v503 = vmul.f32 %v462, 0.040387616
        %v504 = vmul.f32 %v414, 0.040387616
        %v505 = vmul.f32 %v415, 0.040387616
        %v506 = vmul.f32 %v416, 0.040387616
        %v507 = vmul.f32 %v417, 0.040387616
        %vm523 = vcmask 1046528
        %v524 = vrot.slane %v493, 1
        %v525 = vrot.slane %v494, 1
        %v526 = vsel %vm523, %v524, %v525
        %v527 = vrot.slane %v495, 1
        %v528 = vsel %vm523, %v525, %v527
        %v529 = vrot.slane %v496, 1
        %v530 = vsel %vm523, %v527, %v529
        %v531 = vrot.slane %v497, 1
        %v532 = vsel %vm523, %v529, %v531
        %v533 = vrot.slane %v498, 1
        %v534 = vrot.slane %v499, 1
        %v535 = vsel %vm523, %v533, %v534
        %v536 = vrot.slane %v500, 1
        %v537 = vsel %vm523, %v534, %v536
        %v538 = vrot.slane %v501, 1
        %v539 = vsel %vm523, %v536, %v538
        %v540 = vrot.slane %v502, 1
        %v541 = vsel %vm523, %v538, %v540
        %v542 = vrot.slane %v503, 1
        %v543 = vrot.slane %v504, 1
        %v544 = vsel %vm523, %v542, %v543
        %v545 = vrot.slane %v505, 1
        %v546 = vsel %vm523, %v543, %v545
        %v547 = vrot.slane %v506, 1
        %v548 = vsel %vm523, %v545, %v547
        %v549 = vrot.slane %v507, 1
        %v550 = vsel %vm523, %v547, %v549
        %v566 = vadd.f32 %v478, %v526
        %v567 = vadd.f32 %v479, %v528
        %v568 = vadd.f32 %v480, %v530
        %v569 = vadd.f32 %v481, %v532
        %v570 = vadd.f32 %v482, %v531
        %v571 = vadd.f32 %v483, %v535
        %v572 = vadd.f32 %v484, %v537
        %v573 = vadd.f32 %v485, %v539
        %v574 = vadd.f32 %v486, %v541
        %v575 = vadd.f32 %v487, %v540
        %v576 = vadd.f32 %v488, %v544
        %v577 = vadd.f32 %v489, %v546
        %v578 = vadd.f32 %v490, %v548
        %v579 = vadd.f32 %v491, %v550
        %v580 = vadd.f32 %v492, %v549
        %v581 = vmul.f32 %v406, 0.91921794
        %v582 = vmul.f32 %v407, 0.91921794
        %v583 = vmul.f32 %v408, 0.91921794
        %v584 = vmul.f32 %v409, 0.91921794
        %v585 = vmul.f32 %v410, 0.91921794
        %v586 = vmul.f32 %v411, 0.91921794
        %v587 = vmul.f32 %v412, 0.91921794
        %v588 = vmul.f32 %v413, 0.91921794
        %v589 = vmul.f32 %v414, 0.91921794
        %v590 = vmul.f32 %v415, 0.91921794
        %v591 = vmul.f32 %v416, 0.91921794
        %v592 = vmul.f32 %v417, 0.91921794
        %vm605 = vcmask 1045504
        %v606 = vrot.slane %v581, 2
        %v607 = vrot.slane %v582, 2
        %v608 = vsel %vm605, %v606, %v607
        %v609 = vrot.slane %v583, 2
        %v610 = vsel %vm605, %v607, %v609
        %v611 = vrot.slane %v584, 2
        %v612 = vsel %vm605, %v609, %v611
        %v613 = vrot.slane %v585, 2
        %v614 = vrot.slane %v586, 2
        %v615 = vsel %vm605, %v613, %v614
        %v616 = vrot.slane %v587, 2
        %v617 = vsel %vm605, %v614, %v616
        %v618 = vrot.slane %v588, 2
        %v619 = vsel %vm605, %v616, %v618
        %v620 = vrot.slane %v589, 2
        %v621 = vrot.slane %v590, 2
        %v622 = vsel %vm605, %v620, %v621
        %v623 = vrot.slane %v591, 2
        %v624 = vsel %vm605, %v621, %v623
        %v625 = vrot.slane %v592, 2
        %v626 = vsel %vm605, %v623, %v625
        %v642 = vadd.f32 %v566, %v606
        %v643 = vadd.f32 %v567, %v608
        %v644 = vadd.f32 %v568, %v610
        %v645 = vadd.f32 %v569, %v612
        %v646 = vadd.f32 %v570, %v611
        %v647 = vadd.f32 %v571, %v613
        %v648 = vadd.f32 %v572, %v615
        %v649 = vadd.f32 %v573, %v617
        %v650 = vadd.f32 %v574, %v619
        %v651 = vadd.f32 %v575, %v618
        %v652 = vadd.f32 %v576, %v620
        %v653 = vadd.f32 %v577, %v622
        %v654 = vadd.f32 %v578, %v624
        %v655 = vadd.f32 %v579, %v626
        %v656 = vadd.f32 %v580, %v625
        %v657 = vmul.f32 %v475, 0.040387616
        %v658 = vmul.f32 %v476, 0.040387616
        %v659 = vmul.f32 %v477, 0.040387616
        %vm663 = vcmask 1044480
        %v664 = vrot.slane %v494, 3
        %v665 = vrot.slane %v495, 3
        %v666 = vsel %vm663, %v664, %v665
        %v667 = vrot.slane %v496, 3
        %v668 = vsel %vm663, %v665, %v667
        %v669 = vrot.slane %v497, 3
        %v670 = vsel %vm663, %v667, %v669
        %v671 = vrot.slane %v657, 3
        %v672 = vsel %vm663, %v669, %v671
        %v673 = vrot.slane %v499, 3
        %v674 = vrot.slane %v500, 3
        %v675 = vsel %vm663, %v673, %v674
        %v676 = vrot.slane %v501, 3
        %v677 = vsel %vm663, %v674, %v676
        %v678 = vrot.slane %v502, 3
        %v679 = vsel %vm663, %v676, %v678
        %v680 = vrot.slane %v658, 3
        %v681 = vsel %vm663, %v678, %v680
        %v682 = vrot.slane %v504, 3
        %v683 = vrot.slane %v505, 3
        %v684 = vsel %vm663, %v682, %v683
        %v685 = vrot.slane %v506, 3
        %v686 = vsel %vm663, %v683, %v685
        %v687 = vrot.slane %v507, 3
        %v688 = vsel %vm663, %v685, %v687
        %v689 = vrot.slane %v659, 3
        %v690 = vsel %vm663, %v687, %v689
        %v706 = vadd.f32 %v642, %v664
        %v707 = vadd.f32 %v643, %v666
        %v708 = vadd.f32 %v644, %v668
        %v709 = vadd.f32 %v645, %v670
        %v710 = vadd.f32 %v646, %v672
        %v711 = vadd.f32 %v647, %v673
        %v712 = vadd.f32 %v648, %v675
        %v713 = vadd.f32 %v649, %v677
        %v714 = vadd.f32 %v650, %v679
        %v715 = vadd.f32 %v651, %v681
        %v716 = vadd.f32 %v652, %v682
        %v717 = vadd.f32 %v653, %v684
        %v718 = vadd.f32 %v654, %v686
        %v719 = vadd.f32 %v655, %v688
        %v720 = vadd.f32 %v656, %v690
        %v721 = vmul.f32 %v475, 3.4256063e-06
        %v722 = vmul.f32 %v476, 3.4256063e-06
        %v723 = vmul.f32 %v477, 3.4256063e-06
        %vm739 = vcmask 1043456
        %v740 = vrot.slane %v479, 4
        %v741 = vrot.slane %v480, 4
        %v742 = vsel %vm739, %v740, %v741
        %v743 = vrot.slane %v481, 4
        %v744 = vsel %vm739, %v741, %v743
        %v745 = vrot.slane %v482, 4
        %v746 = vsel %vm739, %v743, %v745
        %v747 = vrot.slane %v721, 4
        %v748 = vsel %vm739, %v745, %v747
        %v749 = vrot.slane %v484, 4
        %v750 = vrot.slane %v485, 4
        %v751 = vsel %vm739, %v749, %v750
        %v752 = vrot.slane %v486, 4
        %v753 = vsel %vm739, %v750, %v752
        %v754 = vrot.slane %v487, 4
        %v755 = vsel %vm739, %v752, %v754
        %v756 = vrot.slane %v722, 4
        %v757 = vsel %vm739, %v754, %v756
        %v758 = vrot.slane %v489, 4
        %v759 = vrot.slane %v490, 4
        %v760 = vsel %vm739, %v758, %v759
        %v761 = vrot.slane %v491, 4
        %v762 = vsel %vm739, %v759, %v761
        %v763 = vrot.slane %v492, 4
        %v764 = vsel %vm739, %v761, %v763
        %v765 = vrot.slane %v723, 4
        %v766 = vsel %vm739, %v763, %v765
        %v782 = vadd.f32 %v706, %v740
        %v783 = vadd.f32 %v707, %v742
        %v784 = vadd.f32 %v708, %v744
        %v785 = vadd.f32 %v709, %v746
        %v786 = vadd.f32 %v710, %v748
        %v787 = vadd.f32 %v711, %v749
        %v788 = vadd.f32 %v712, %v751
        %v789 = vadd.f32 %v713, %v753
        %v790 = vadd.f32 %v714, %v755
        %v791 = vadd.f32 %v715, %v757
        %v792 = vadd.f32 %v716, %v758
        %v793 = vadd.f32 %v717, %v760
        %v794 = vadd.f32 %v718, %v762
        %v795 = vadd.f32 %v719, %v764
        %v796 = vadd.f32 %v720, %v766
        %798 = vset.pattern.permute.xlu0 0
        %799 = vperm.xlu0 %798, %v782
        %v800 = vpop.permute.xlu0 %799
        %803 = vset.pattern.permute.xlu0 0
        %804 = vperm.xlu0 %803, %v783
        %v805 = vpop.permute.xlu0 %804
        %808 = vset.pattern.permute.xlu0 0
        %809 = vperm.xlu0 %808, %v784
        %v810 = vpop.permute.xlu0 %809
        %813 = vset.pattern.permute.xlu0 0
        %814 = vperm.xlu0 %813, %v785
        %v815 = vpop.permute.xlu0 %814
        %818 = vset.pattern.permute.xlu0 0
        %819 = vperm.xlu0 %818, %v786
        %v820 = vpop.permute.xlu0 %819
        %823 = vset.pattern.permute.xlu0 0
        %824 = vperm.xlu0 %823, %v787
        %v825 = vpop.permute.xlu0 %824
        %828 = vset.pattern.permute.xlu0 0
        %829 = vperm.xlu0 %828, %v788
        %v830 = vpop.permute.xlu0 %829
        %833 = vset.pattern.permute.xlu0 0
        %834 = vperm.xlu0 %833, %v789
        %v835 = vpop.permute.xlu0 %834
        %838 = vset.pattern.permute.xlu0 0
        %839 = vperm.xlu0 %838, %v790
        %v840 = vpop.permute.xlu0 %839
        %843 = vset.pattern.permute.xlu0 0
        %844 = vperm.xlu0 %843, %v791
        %v845 = vpop.permute.xlu0 %844
        %848 = vset.pattern.permute.xlu0 0
        %849 = vperm.xlu0 %848, %v792
        %v850 = vpop.permute.xlu0 %849
        %853 = vset.pattern.permute.xlu0 0
        %854 = vperm.xlu0 %853, %v793
        %v855 = vpop.permute.xlu0 %854
        %858 = vset.pattern.permute.xlu0 0
        %859 = vperm.xlu0 %858, %v794
        %v860 = vpop.permute.xlu0 %859
        %863 = vset.pattern.permute.xlu0 0
        %864 = vperm.xlu0 %863, %v795
        %v865 = vpop.permute.xlu0 %864
        %868 = vset.pattern.permute.xlu0 0
        %869 = vperm.xlu0 %868, %v796
        %v870 = vpop.permute.xlu0 %869
        %872 = vset.pattern.permute.xlu0 127
        %873 = vperm.xlu0 %872, %v782
        %v874 = vpop.permute.xlu0 %873
        %876 = vset.pattern.permute.xlu0 127
        %877 = vperm.xlu0 %876, %v783
        %v878 = vpop.permute.xlu0 %877
        %880 = vset.pattern.permute.xlu0 127
        %881 = vperm.xlu0 %880, %v784
        %v882 = vpop.permute.xlu0 %881
        %884 = vset.pattern.permute.xlu0 127
        %885 = vperm.xlu0 %884, %v785
        %v886 = vpop.permute.xlu0 %885
        %888 = vset.pattern.permute.xlu0 127
        %889 = vperm.xlu0 %888, %v786
        %v890 = vpop.permute.xlu0 %889
        %892 = vset.pattern.permute.xlu0 127
        %893 = vperm.xlu0 %892, %v787
        %v894 = vpop.permute.xlu0 %893
        %896 = vset.pattern.permute.xlu0 127
        %897 = vperm.xlu0 %896, %v788
        %v898 = vpop.permute.xlu0 %897
        %900 = vset.pattern.permute.xlu0 127
        %901 = vperm.xlu0 %900, %v789
        %v902 = vpop.permute.xlu0 %901
        %904 = vset.pattern.permute.xlu0 127
        %905 = vperm.xlu0 %904, %v790
        %v906 = vpop.permute.xlu0 %905
        %908 = vset.pattern.permute.xlu0 127
        %909 = vperm.xlu0 %908, %v791
        %v910 = vpop.permute.xlu0 %909
        %912 = vset.pattern.permute.xlu0 127
        %913 = vperm.xlu0 %912, %v792
        %v914 = vpop.permute.xlu0 %913
        %916 = vset.pattern.permute.xlu0 127
        %917 = vperm.xlu0 %916, %v793
        %v918 = vpop.permute.xlu0 %917
        %920 = vset.pattern.permute.xlu0 127
        %921 = vperm.xlu0 %920, %v794
        %v922 = vpop.permute.xlu0 %921
        %924 = vset.pattern.permute.xlu0 127
        %925 = vperm.xlu0 %924, %v795
        %v926 = vpop.permute.xlu0 %925
        %928 = vset.pattern.permute.xlu0 127
        %929 = vperm.xlu0 %928, %v796
        %v930 = vpop.permute.xlu0 %929
        %v932 = vmul.f32 %v800, 3.4256063e-06
        %v933 = vmul.f32 %v782, 3.4256063e-06
        %v934 = vmul.f32 %v805, 3.4256063e-06
        %v935 = vmul.f32 %v783, 3.4256063e-06
        %v936 = vmul.f32 %v810, 3.4256063e-06
        %v937 = vmul.f32 %v784, 3.4256063e-06
        %v938 = vmul.f32 %v815, 3.4256063e-06
        %v939 = vmul.f32 %v785, 3.4256063e-06
        %v940 = vmul.f32 %v820, 3.4256063e-06
        %v941 = vmul.f32 %v786, 3.4256063e-06
        %v942 = vmul.f32 %v825, 3.4256063e-06
        %v943 = vmul.f32 %v787, 3.4256063e-06
        %v944 = vmul.f32 %v830, 3.4256063e-06
        %v945 = vmul.f32 %v788, 3.4256063e-06
        %v946 = vmul.f32 %v835, 3.4256063e-06
        %v947 = vmul.f32 %v789, 3.4256063e-06
        %v948 = vmul.f32 %v840, 3.4256063e-06
        %v949 = vmul.f32 %v790, 3.4256063e-06
        %v950 = vmul.f32 %v845, 3.4256063e-06
        %v951 = vmul.f32 %v791, 3.4256063e-06
        %v952 = vmul.f32 %v850, 3.4256063e-06
        %v953 = vmul.f32 %v792, 3.4256063e-06
        %v954 = vmul.f32 %v855, 3.4256063e-06
        %v955 = vmul.f32 %v793, 3.4256063e-06
        %v956 = vmul.f32 %v860, 3.4256063e-06
        %v957 = vmul.f32 %v794, 3.4256063e-06
        %v958 = vmul.f32 %v865, 3.4256063e-06
        %v959 = vmul.f32 %v795, 3.4256063e-06
        %v960 = vmul.f32 %v870, 3.4256063e-06
        %v961 = vmul.f32 %v796, 3.4256063e-06
        %v962 = vmul.f32 %v800, 0.040387616
        %v963 = vmul.f32 %v782, 0.040387616
        %v964 = vmul.f32 %v805, 0.040387616
        %v965 = vmul.f32 %v783, 0.040387616
        %v966 = vmul.f32 %v810, 0.040387616
        %v967 = vmul.f32 %v784, 0.040387616
        %v968 = vmul.f32 %v815, 0.040387616
        %v969 = vmul.f32 %v785, 0.040387616
        %v970 = vmul.f32 %v820, 0.040387616
        %v971 = vmul.f32 %v786, 0.040387616
        %v972 = vmul.f32 %v825, 0.040387616
        %v973 = vmul.f32 %v787, 0.040387616
        %v974 = vmul.f32 %v830, 0.040387616
        %v975 = vmul.f32 %v788, 0.040387616
        %v976 = vmul.f32 %v835, 0.040387616
        %v977 = vmul.f32 %v789, 0.040387616
        %v978 = vmul.f32 %v840, 0.040387616
        %v979 = vmul.f32 %v790, 0.040387616
        %v980 = vmul.f32 %v845, 0.040387616
        %v981 = vmul.f32 %v791, 0.040387616
        %v982 = vmul.f32 %v850, 0.040387616
        %v983 = vmul.f32 %v792, 0.040387616
        %v984 = vmul.f32 %v855, 0.040387616
        %v985 = vmul.f32 %v793, 0.040387616
        %v986 = vmul.f32 %v860, 0.040387616
        %v987 = vmul.f32 %v794, 0.040387616
        %v988 = vmul.f32 %v865, 0.040387616
        %v989 = vmul.f32 %v795, 0.040387616
        %v990 = vmul.f32 %v870, 0.040387616
        %v991 = vmul.f32 %v796, 0.040387616
        %1022 = vrot.lane.b32.xlu0 %v962, 127
        %v1023 = vpop.permute.xlu0 %1022
        %1024 = vrot.lane.b32.xlu0 %v963, 127
        %v1025 = vpop.permute.xlu0 %1024
        %1026 = vrot.lane.b32.xlu0 %v964, 127
        %v1027 = vpop.permute.xlu0 %1026
        %1028 = vrot.lane.b32.xlu0 %v965, 127
        %v1029 = vpop.permute.xlu0 %1028
        %1030 = vrot.lane.b32.xlu0 %v966, 127
        %v1031 = vpop.permute.xlu0 %1030
        %1032 = vrot.lane.b32.xlu0 %v967, 127
        %v1033 = vpop.permute.xlu0 %1032
        %1034 = vrot.lane.b32.xlu0 %v968, 127
        %v1035 = vpop.permute.xlu0 %1034
        %1036 = vrot.lane.b32.xlu0 %v969, 127
        %v1037 = vpop.permute.xlu0 %1036
        %1038 = vrot.lane.b32.xlu0 %v970, 127
        %v1039 = vpop.permute.xlu0 %1038
        %1040 = vrot.lane.b32.xlu0 %v971, 127
        %v1041 = vpop.permute.xlu0 %1040
        %1042 = vrot.lane.b32.xlu0 %v972, 127
        %v1043 = vpop.permute.xlu0 %1042
        %1044 = vrot.lane.b32.xlu0 %v973, 127
        %v1045 = vpop.permute.xlu0 %1044
        %1046 = vrot.lane.b32.xlu0 %v974, 127
        %v1047 = vpop.permute.xlu0 %1046
        %1048 = vrot.lane.b32.xlu0 %v975, 127
        %v1049 = vpop.permute.xlu0 %1048
        %1050 = vrot.lane.b32.xlu0 %v976, 127
        %v1051 = vpop.permute.xlu0 %1050
        %1052 = vrot.lane.b32.xlu0 %v977, 127
        %v1053 = vpop.permute.xlu0 %1052
        %1054 = vrot.lane.b32.xlu0 %v978, 127
        %v1055 = vpop.permute.xlu0 %1054
        %1056 = vrot.lane.b32.xlu0 %v979, 127
        %v1057 = vpop.permute.xlu0 %1056
        %1058 = vrot.lane.b32.xlu0 %v980, 127
        %v1059 = vpop.permute.xlu0 %1058
        %1060 = vrot.lane.b32.xlu0 %v981, 127
        %v1061 = vpop.permute.xlu0 %1060
        %1062 = vrot.lane.b32.xlu0 %v982, 127
        %v1063 = vpop.permute.xlu0 %1062
        %1064 = vrot.lane.b32.xlu0 %v983, 127
        %v1065 = vpop.permute.xlu0 %1064
        %1066 = vrot.lane.b32.xlu0 %v984, 127
        %v1067 = vpop.permute.xlu0 %1066
        %1068 = vrot.lane.b32.xlu0 %v985, 127
        %v1069 = vpop.permute.xlu0 %1068
        %1070 = vrot.lane.b32.xlu0 %v986, 127
        %v1071 = vpop.permute.xlu0 %1070
        %1072 = vrot.lane.b32.xlu0 %v987, 127
        %v1073 = vpop.permute.xlu0 %1072
        %1074 = vrot.lane.b32.xlu0 %v988, 127
        %v1075 = vpop.permute.xlu0 %1074
        %1076 = vrot.lane.b32.xlu0 %v989, 127
        %v1077 = vpop.permute.xlu0 %1076
        %1078 = vrot.lane.b32.xlu0 %v990, 127
        %v1079 = vpop.permute.xlu0 %1078
        %1080 = vrot.lane.b32.xlu0 %v991, 127
        %v1081 = vpop.permute.xlu0 %1080
        %vm1082 = vcmask 1039360
        %v1083 = vsel %vm1082, %v1023, %v1025
        %v1084 = vsel %vm1082, %v1027, %v1029
        %v1085 = vsel %vm1082, %v1031, %v1033
        %v1086 = vsel %vm1082, %v1035, %v1037
        %v1087 = vsel %vm1082, %v1039, %v1041
        %v1088 = vsel %vm1082, %v1043, %v1045
        %v1089 = vsel %vm1082, %v1047, %v1049
        %v1090 = vsel %vm1082, %v1051, %v1053
        %v1091 = vsel %vm1082, %v1055, %v1057
        %v1092 = vsel %vm1082, %v1059, %v1061
        %v1093 = vsel %vm1082, %v1063, %v1065
        %v1094 = vsel %vm1082, %v1067, %v1069
        %v1095 = vsel %vm1082, %v1071, %v1073
        %v1096 = vsel %vm1082, %v1075, %v1077
        %v1097 = vsel %vm1082, %v1079, %v1081
        %v1128 = vadd.f32 %v932, %v1083
        %v1129 = vadd.f32 %v933, %v1025
        %v1130 = vadd.f32 %v934, %v1084
        %v1131 = vadd.f32 %v935, %v1029
        %v1132 = vadd.f32 %v936, %v1085
        %v1133 = vadd.f32 %v937, %v1033
        %v1134 = vadd.f32 %v938, %v1086
        %v1135 = vadd.f32 %v939, %v1037
        %v1136 = vadd.f32 %v940, %v1087
        %v1137 = vadd.f32 %v941, %v1041
        %v1138 = vadd.f32 %v942, %v1088
        %v1139 = vadd.f32 %v943, %v1045
        %v1140 = vadd.f32 %v944, %v1089
        %v1141 = vadd.f32 %v945, %v1049
        %v1142 = vadd.f32 %v946, %v1090
        %v1143 = vadd.f32 %v947, %v1053
        %v1144 = vadd.f32 %v948, %v1091
        %v1145 = vadd.f32 %v949, %v1057
        %v1146 = vadd.f32 %v950, %v1092
        %v1147 = vadd.f32 %v951, %v1061
        %v1148 = vadd.f32 %v952, %v1093
        %v1149 = vadd.f32 %v953, %v1065
        %v1150 = vadd.f32 %v954, %v1094
        %v1151 = vadd.f32 %v955, %v1069
        %v1152 = vadd.f32 %v956, %v1095
        %v1153 = vadd.f32 %v957, %v1073
        %v1154 = vadd.f32 %v958, %v1096
        %v1155 = vadd.f32 %v959, %v1077
        %v1156 = vadd.f32 %v960, %v1097
        %v1157 = vadd.f32 %v961, %v1081
        %v1158 = vmul.f32 %v782, 0.91921794
        %v1159 = vmul.f32 %v783, 0.91921794
        %v1160 = vmul.f32 %v784, 0.91921794
        %v1161 = vmul.f32 %v785, 0.91921794
        %v1162 = vmul.f32 %v786, 0.91921794
        %v1163 = vmul.f32 %v787, 0.91921794
        %v1164 = vmul.f32 %v788, 0.91921794
        %v1165 = vmul.f32 %v789, 0.91921794
        %v1166 = vmul.f32 %v790, 0.91921794
        %v1167 = vmul.f32 %v791, 0.91921794
        %v1168 = vmul.f32 %v792, 0.91921794
        %v1169 = vmul.f32 %v793, 0.91921794
        %v1170 = vmul.f32 %v794, 0.91921794
        %v1171 = vmul.f32 %v795, 0.91921794
        %v1172 = vmul.f32 %v796, 0.91921794
        %1188 = vrot.lane.b32.xlu0 %v1158, 126
        %v1189 = vpop.permute.xlu0 %1188
        %1190 = vrot.lane.b32.xlu0 %v1159, 126
        %v1191 = vpop.permute.xlu0 %1190
        %1192 = vrot.lane.b32.xlu0 %v1160, 126
        %v1193 = vpop.permute.xlu0 %1192
        %1194 = vrot.lane.b32.xlu0 %v1161, 126
        %v1195 = vpop.permute.xlu0 %1194
        %1196 = vrot.lane.b32.xlu0 %v1162, 126
        %v1197 = vpop.permute.xlu0 %1196
        %1198 = vrot.lane.b32.xlu0 %v1163, 126
        %v1199 = vpop.permute.xlu0 %1198
        %1200 = vrot.lane.b32.xlu0 %v1164, 126
        %v1201 = vpop.permute.xlu0 %1200
        %1202 = vrot.lane.b32.xlu0 %v1165, 126
        %v1203 = vpop.permute.xlu0 %1202
        %1204 = vrot.lane.b32.xlu0 %v1166, 126
        %v1205 = vpop.permute.xlu0 %1204
        %1206 = vrot.lane.b32.xlu0 %v1167, 126
        %v1207 = vpop.permute.xlu0 %1206
        %1208 = vrot.lane.b32.xlu0 %v1168, 126
        %v1209 = vpop.permute.xlu0 %1208
        %1210 = vrot.lane.b32.xlu0 %v1169, 126
        %v1211 = vpop.permute.xlu0 %1210
        %1212 = vrot.lane.b32.xlu0 %v1170, 126
        %v1213 = vpop.permute.xlu0 %1212
        %1214 = vrot.lane.b32.xlu0 %v1171, 126
        %v1215 = vpop.permute.xlu0 %1214
        %1216 = vrot.lane.b32.xlu0 %v1172, 126
        %v1217 = vpop.permute.xlu0 %1216
        %v1233 = vadd.f32 %v1128, %v1189
        %v1234 = vadd.f32 %v1129, %v1189
        %v1235 = vadd.f32 %v1130, %v1191
        %v1236 = vadd.f32 %v1131, %v1191
        %v1237 = vadd.f32 %v1132, %v1193
        %v1238 = vadd.f32 %v1133, %v1193
        %v1239 = vadd.f32 %v1134, %v1195
        %v1240 = vadd.f32 %v1135, %v1195
        %v1241 = vadd.f32 %v1136, %v1197
        %v1242 = vadd.f32 %v1137, %v1197
        %v1243 = vadd.f32 %v1138, %v1199
        %v1244 = vadd.f32 %v1139, %v1199
        %v1245 = vadd.f32 %v1140, %v1201
        %v1246 = vadd.f32 %v1141, %v1201
        %v1247 = vadd.f32 %v1142, %v1203
        %v1248 = vadd.f32 %v1143, %v1203
        %v1249 = vadd.f32 %v1144, %v1205
        %v1250 = vadd.f32 %v1145, %v1205
        %v1251 = vadd.f32 %v1146, %v1207
        %v1252 = vadd.f32 %v1147, %v1207
        %v1253 = vadd.f32 %v1148, %v1209
        %v1254 = vadd.f32 %v1149, %v1209
        %v1255 = vadd.f32 %v1150, %v1211
        %v1256 = vadd.f32 %v1151, %v1211
        %v1257 = vadd.f32 %v1152, %v1213
        %v1258 = vadd.f32 %v1153, %v1213
        %v1259 = vadd.f32 %v1154, %v1215
        %v1260 = vadd.f32 %v1155, %v1215
        %v1261 = vadd.f32 %v1156, %v1217
        %v1262 = vadd.f32 %v1157, %v1217
        %v1263 = vmul.f32 %v874, 0.040387616
        %v1264 = vmul.f32 %v878, 0.040387616
        %v1265 = vmul.f32 %v882, 0.040387616
        %v1266 = vmul.f32 %v886, 0.040387616
        %v1267 = vmul.f32 %v890, 0.040387616
        %v1268 = vmul.f32 %v894, 0.040387616
        %v1269 = vmul.f32 %v898, 0.040387616
        %v1270 = vmul.f32 %v902, 0.040387616
        %v1271 = vmul.f32 %v906, 0.040387616
        %v1272 = vmul.f32 %v910, 0.040387616
        %v1273 = vmul.f32 %v914, 0.040387616
        %v1274 = vmul.f32 %v918, 0.040387616
        %v1275 = vmul.f32 %v922, 0.040387616
        %v1276 = vmul.f32 %v926, 0.040387616
        %v1277 = vmul.f32 %v930, 0.040387616
        %1293 = vrot.lane.b32.xlu0 %v963, 125
        %v1294 = vpop.permute.xlu0 %1293
        %1295 = vrot.lane.b32.xlu0 %v1263, 125
        %v1296 = vpop.permute.xlu0 %1295
        %1297 = vrot.lane.b32.xlu0 %v965, 125
        %v1298 = vpop.permute.xlu0 %1297
        %1299 = vrot.lane.b32.xlu0 %v1264, 125
        %v1300 = vpop.permute.xlu0 %1299
        %1301 = vrot.lane.b32.xlu0 %v967, 125
        %v1302 = vpop.permute.xlu0 %1301
        %1303 = vrot.lane.b32.xlu0 %v1265, 125
        %v1304 = vpop.permute.xlu0 %1303
        %1305 = vrot.lane.b32.xlu0 %v969, 125
        %v1306 = vpop.permute.xlu0 %1305
        %1307 = vrot.lane.b32.xlu0 %v1266, 125
        %v1308 = vpop.permute.xlu0 %1307
        %1309 = vrot.lane.b32.xlu0 %v971, 125
        %v1310 = vpop.permute.xlu0 %1309
        %1311 = vrot.lane.b32.xlu0 %v1267, 125
        %v1312 = vpop.permute.xlu0 %1311
        %1313 = vrot.lane.b32.xlu0 %v973, 125
        %v1314 = vpop.permute.xlu0 %1313
        %1315 = vrot.lane.b32.xlu0 %v1268, 125
        %v1316 = vpop.permute.xlu0 %1315
        %1317 = vrot.lane.b32.xlu0 %v975, 125
        %v1318 = vpop.permute.xlu0 %1317
        %1319 = vrot.lane.b32.xlu0 %v1269, 125
        %v1320 = vpop.permute.xlu0 %1319
        %1321 = vrot.lane.b32.xlu0 %v977, 125
        %v1322 = vpop.permute.xlu0 %1321
        %1323 = vrot.lane.b32.xlu0 %v1270, 125
        %v1324 = vpop.permute.xlu0 %1323
        %1325 = vrot.lane.b32.xlu0 %v979, 125
        %v1326 = vpop.permute.xlu0 %1325
        %1327 = vrot.lane.b32.xlu0 %v1271, 125
        %v1328 = vpop.permute.xlu0 %1327
        %1329 = vrot.lane.b32.xlu0 %v981, 125
        %v1330 = vpop.permute.xlu0 %1329
        %1331 = vrot.lane.b32.xlu0 %v1272, 125
        %v1332 = vpop.permute.xlu0 %1331
        %1333 = vrot.lane.b32.xlu0 %v983, 125
        %v1334 = vpop.permute.xlu0 %1333
        %1335 = vrot.lane.b32.xlu0 %v1273, 125
        %v1336 = vpop.permute.xlu0 %1335
        %1337 = vrot.lane.b32.xlu0 %v985, 125
        %v1338 = vpop.permute.xlu0 %1337
        %1339 = vrot.lane.b32.xlu0 %v1274, 125
        %v1340 = vpop.permute.xlu0 %1339
        %1341 = vrot.lane.b32.xlu0 %v987, 125
        %v1342 = vpop.permute.xlu0 %1341
        %1343 = vrot.lane.b32.xlu0 %v1275, 125
        %v1344 = vpop.permute.xlu0 %1343
        %1345 = vrot.lane.b32.xlu0 %v989, 125
        %v1346 = vpop.permute.xlu0 %1345
        %1347 = vrot.lane.b32.xlu0 %v1276, 125
        %v1348 = vpop.permute.xlu0 %1347
        %1349 = vrot.lane.b32.xlu0 %v991, 125
        %v1350 = vpop.permute.xlu0 %1349
        %1351 = vrot.lane.b32.xlu0 %v1277, 125
        %v1352 = vpop.permute.xlu0 %1351
        %vm1353 = vcmask 1022976
        %v1354 = vsel %vm1353, %v1294, %v1296
        %v1355 = vsel %vm1353, %v1298, %v1300
        %v1356 = vsel %vm1353, %v1302, %v1304
        %v1357 = vsel %vm1353, %v1306, %v1308
        %v1358 = vsel %vm1353, %v1310, %v1312
        %v1359 = vsel %vm1353, %v1314, %v1316
        %v1360 = vsel %vm1353, %v1318, %v1320
        %v1361 = vsel %vm1353, %v1322, %v1324
        %v1362 = vsel %vm1353, %v1326, %v1328
        %v1363 = vsel %vm1353, %v1330, %v1332
        %v1364 = vsel %vm1353, %v1334, %v1336
        %v1365 = vsel %vm1353, %v1338, %v1340
        %v1366 = vsel %vm1353, %v1342, %v1344
        %v1367 = vsel %vm1353, %v1346, %v1348
        %v1368 = vsel %vm1353, %v1350, %v1352
        %v1399 = vadd.f32 %v1233, %v1294
        %v1400 = vadd.f32 %v1234, %v1354
        %v1401 = vadd.f32 %v1235, %v1298
        %v1402 = vadd.f32 %v1236, %v1355
        %v1403 = vadd.f32 %v1237, %v1302
        %v1404 = vadd.f32 %v1238, %v1356
        %v1405 = vadd.f32 %v1239, %v1306
        %v1406 = vadd.f32 %v1240, %v1357
        %v1407 = vadd.f32 %v1241, %v1310
        %v1408 = vadd.f32 %v1242, %v1358
        %v1409 = vadd.f32 %v1243, %v1314
        %v1410 = vadd.f32 %v1244, %v1359
        %v1411 = vadd.f32 %v1245, %v1318
        %v1412 = vadd.f32 %v1246, %v1360
        %v1413 = vadd.f32 %v1247, %v1322
        %v1414 = vadd.f32 %v1248, %v1361
        %v1415 = vadd.f32 %v1249, %v1326
        %v1416 = vadd.f32 %v1250, %v1362
        %v1417 = vadd.f32 %v1251, %v1330
        %v1418 = vadd.f32 %v1252, %v1363
        %v1419 = vadd.f32 %v1253, %v1334
        %v1420 = vadd.f32 %v1254, %v1364
        %v1421 = vadd.f32 %v1255, %v1338
        %v1422 = vadd.f32 %v1256, %v1365
        %v1423 = vadd.f32 %v1257, %v1342
        %v1424 = vadd.f32 %v1258, %v1366
        %v1425 = vadd.f32 %v1259, %v1346
        %v1426 = vadd.f32 %v1260, %v1367
        %v1427 = vadd.f32 %v1261, %v1350
        %v1428 = vadd.f32 %v1262, %v1368
        %v1429 = vmul.f32 %v874, 3.4256063e-06
        %v1430 = vmul.f32 %v878, 3.4256063e-06
        %v1431 = vmul.f32 %v882, 3.4256063e-06
        %v1432 = vmul.f32 %v886, 3.4256063e-06
        %v1433 = vmul.f32 %v890, 3.4256063e-06
        %v1434 = vmul.f32 %v894, 3.4256063e-06
        %v1435 = vmul.f32 %v898, 3.4256063e-06
        %v1436 = vmul.f32 %v902, 3.4256063e-06
        %v1437 = vmul.f32 %v906, 3.4256063e-06
        %v1438 = vmul.f32 %v910, 3.4256063e-06
        %v1439 = vmul.f32 %v914, 3.4256063e-06
        %v1440 = vmul.f32 %v918, 3.4256063e-06
        %v1441 = vmul.f32 %v922, 3.4256063e-06
        %v1442 = vmul.f32 %v926, 3.4256063e-06
        %v1443 = vmul.f32 %v930, 3.4256063e-06
        %1474 = vrot.lane.b32.xlu0 %v933, 124
        %v1475 = vpop.permute.xlu0 %1474
        %1476 = vrot.lane.b32.xlu0 %v1429, 124
        %v1477 = vpop.permute.xlu0 %1476
        %1478 = vrot.lane.b32.xlu0 %v935, 124
        %v1479 = vpop.permute.xlu0 %1478
        %1480 = vrot.lane.b32.xlu0 %v1430, 124
        %v1481 = vpop.permute.xlu0 %1480
        %1482 = vrot.lane.b32.xlu0 %v937, 124
        %v1483 = vpop.permute.xlu0 %1482
        %1484 = vrot.lane.b32.xlu0 %v1431, 124
        %v1485 = vpop.permute.xlu0 %1484
        %1486 = vrot.lane.b32.xlu0 %v939, 124
        %v1487 = vpop.permute.xlu0 %1486
        %1488 = vrot.lane.b32.xlu0 %v1432, 124
        %v1489 = vpop.permute.xlu0 %1488
        %1490 = vrot.lane.b32.xlu0 %v941, 124
        %v1491 = vpop.permute.xlu0 %1490
        %1492 = vrot.lane.b32.xlu0 %v1433, 124
        %v1493 = vpop.permute.xlu0 %1492
        %1494 = vrot.lane.b32.xlu0 %v943, 124
        %v1495 = vpop.permute.xlu0 %1494
        %1496 = vrot.lane.b32.xlu0 %v1434, 124
        %v1497 = vpop.permute.xlu0 %1496
        %1498 = vrot.lane.b32.xlu0 %v945, 124
        %v1499 = vpop.permute.xlu0 %1498
        %1500 = vrot.lane.b32.xlu0 %v1435, 124
        %v1501 = vpop.permute.xlu0 %1500
        %1502 = vrot.lane.b32.xlu0 %v947, 124
        %v1503 = vpop.permute.xlu0 %1502
        %1504 = vrot.lane.b32.xlu0 %v1436, 124
        %v1505 = vpop.permute.xlu0 %1504
        %1506 = vrot.lane.b32.xlu0 %v949, 124
        %v1507 = vpop.permute.xlu0 %1506
        %1508 = vrot.lane.b32.xlu0 %v1437, 124
        %v1509 = vpop.permute.xlu0 %1508
        %1510 = vrot.lane.b32.xlu0 %v951, 124
        %v1511 = vpop.permute.xlu0 %1510
        %1512 = vrot.lane.b32.xlu0 %v1438, 124
        %v1513 = vpop.permute.xlu0 %1512
        %1514 = vrot.lane.b32.xlu0 %v953, 124
        %v1515 = vpop.permute.xlu0 %1514
        %1516 = vrot.lane.b32.xlu0 %v1439, 124
        %v1517 = vpop.permute.xlu0 %1516
        %1518 = vrot.lane.b32.xlu0 %v955, 124
        %v1519 = vpop.permute.xlu0 %1518
        %1520 = vrot.lane.b32.xlu0 %v1440, 124
        %v1521 = vpop.permute.xlu0 %1520
        %1522 = vrot.lane.b32.xlu0 %v957, 124
        %v1523 = vpop.permute.xlu0 %1522
        %1524 = vrot.lane.b32.xlu0 %v1441, 124
        %v1525 = vpop.permute.xlu0 %1524
        %1526 = vrot.lane.b32.xlu0 %v959, 124
        %v1527 = vpop.permute.xlu0 %1526
        %1528 = vrot.lane.b32.xlu0 %v1442, 124
        %v1529 = vpop.permute.xlu0 %1528
        %1530 = vrot.lane.b32.xlu0 %v961, 124
        %v1531 = vpop.permute.xlu0 %1530
        %1532 = vrot.lane.b32.xlu0 %v1443, 124
        %v1533 = vpop.permute.xlu0 %1532
        %vm1534 = vcmask 1014784
        %v1535 = vsel %vm1534, %v1475, %v1477
        %v1536 = vsel %vm1534, %v1479, %v1481
        %v1537 = vsel %vm1534, %v1483, %v1485
        %v1538 = vsel %vm1534, %v1487, %v1489
        %v1539 = vsel %vm1534, %v1491, %v1493
        %v1540 = vsel %vm1534, %v1495, %v1497
        %v1541 = vsel %vm1534, %v1499, %v1501
        %v1542 = vsel %vm1534, %v1503, %v1505
        %v1543 = vsel %vm1534, %v1507, %v1509
        %v1544 = vsel %vm1534, %v1511, %v1513
        %v1545 = vsel %vm1534, %v1515, %v1517
        %v1546 = vsel %vm1534, %v1519, %v1521
        %v1547 = vsel %vm1534, %v1523, %v1525
        %v1548 = vsel %vm1534, %v1527, %v1529
        %v1549 = vsel %vm1534, %v1531, %v1533
        %v1580 = vadd.f32 %v1399, %v1475
        %v1581 = vadd.f32 %v1400, %v1535
        %v1582 = vadd.f32 %v1401, %v1479
        %v1583 = vadd.f32 %v1402, %v1536
        %v1584 = vadd.f32 %v1403, %v1483
        %v1585 = vadd.f32 %v1404, %v1537
        %v1586 = vadd.f32 %v1405, %v1487
        %v1587 = vadd.f32 %v1406, %v1538
        %v1588 = vadd.f32 %v1407, %v1491
        %v1589 = vadd.f32 %v1408, %v1539
        %v1590 = vadd.f32 %v1409, %v1495
        %v1591 = vadd.f32 %v1410, %v1540
        %v1592 = vadd.f32 %v1411, %v1499
        %v1593 = vadd.f32 %v1412, %v1541
        %v1594 = vadd.f32 %v1413, %v1503
        %v1595 = vadd.f32 %v1414, %v1542
        %v1596 = vadd.f32 %v1415, %v1507
        %v1597 = vadd.f32 %v1416, %v1543
        %v1598 = vadd.f32 %v1417, %v1511
        %v1599 = vadd.f32 %v1418, %v1544
        %v1600 = vadd.f32 %v1419, %v1515
        %v1601 = vadd.f32 %v1420, %v1545
        %v1602 = vadd.f32 %v1421, %v1519
        %v1603 = vadd.f32 %v1422, %v1546
        %v1604 = vadd.f32 %v1423, %v1523
        %v1605 = vadd.f32 %v1424, %v1547
        %v1606 = vadd.f32 %v1425, %v1527
        %v1607 = vadd.f32 %v1426, %v1548
        %v1608 = vadd.f32 %v1427, %v1531
        %v1609 = vadd.f32 %v1428, %v1549
        %v1610 = vmul.f32 %v1580, 0.959609
        %v1611 = vmul.f32 %v1581, 0.959609
        %v1612 = vmul.f32 %v1582, 0.959609
        %v1613 = vmul.f32 %v1583, 0.959609
        %v1614 = vmul.f32 %v1584, 0.959609
        %v1615 = vmul.f32 %v1585, 0.959609
        %v1616 = vmul.f32 %v1586, 0.959609
        %v1617 = vmul.f32 %v1587, 0.959609
        %v1618 = vmul.f32 %v1588, 0.959609
        %v1619 = vmul.f32 %v1589, 0.959609
        %v1620 = vmul.f32 %v1590, 0.040387616
        %v1621 = vmul.f32 %v1591, 0.040387616
        %v1622 = vmul.f32 %v1592, 0.040387616
        %v1623 = vmul.f32 %v1593, 0.040387616
        %v1624 = vmul.f32 %v1594, 0.040387616
        %v1625 = vmul.f32 %v1595, 0.040387616
        %v1626 = vmul.f32 %v1596, 0.040387616
        %v1627 = vmul.f32 %v1597, 0.040387616
        %v1628 = vmul.f32 %v1598, 0.040387616
        %v1629 = vmul.f32 %v1599, 0.040387616
        %v1630 = vadd.f32 %v1610, %v1620
        %v1631 = vadd.f32 %v1611, %v1621
        %v1632 = vadd.f32 %v1612, %v1622
        %v1633 = vadd.f32 %v1613, %v1623
        %v1634 = vadd.f32 %v1614, %v1624
        %v1635 = vadd.f32 %v1615, %v1625
        %v1636 = vadd.f32 %v1616, %v1626
        %v1637 = vadd.f32 %v1617, %v1627
        %v1638 = vadd.f32 %v1618, %v1628
        %v1639 = vadd.f32 %v1619, %v1629
        %v1640 = vmul.f32 %v1600, 3.4256063e-06
        %v1641 = vmul.f32 %v1601, 3.4256063e-06
        %v1642 = vmul.f32 %v1602, 3.4256063e-06
        %v1643 = vmul.f32 %v1603, 3.4256063e-06
        %v1644 = vmul.f32 %v1604, 3.4256063e-06
        %v1645 = vmul.f32 %v1605, 3.4256063e-06
        %v1646 = vmul.f32 %v1606, 3.4256063e-06
        %v1647 = vmul.f32 %v1607, 3.4256063e-06
        %v1648 = vmul.f32 %v1608, 3.4256063e-06
        %v1649 = vmul.f32 %v1609, 3.4256063e-06
        %v1650 = vadd.f32 %v1630, %v1640
        %v1651 = vadd.f32 %v1631, %v1641
        %v1652 = vadd.f32 %v1632, %v1642
        %v1653 = vadd.f32 %v1633, %v1643
        %v1654 = vadd.f32 %v1634, %v1644
        %v1655 = vadd.f32 %v1635, %v1645
        %v1656 = vadd.f32 %v1636, %v1646
        %v1657 = vadd.f32 %v1637, %v1647
        %v1658 = vadd.f32 %v1638, %v1648
        %v1659 = vadd.f32 %v1639, %v1649
        %v1660 = vmax.f32 %v1650, 0.0
        %v1661 = vmax.f32 %v1651, 0.0
        %v1662 = vmax.f32 %v1652, 0.0
        %v1663 = vmax.f32 %v1653, 0.0
        %v1664 = vmax.f32 %v1654, 0.0
        %v1665 = vmax.f32 %v1655, 0.0
        %v1666 = vmax.f32 %v1656, 0.0
        %v1667 = vmax.f32 %v1657, 0.0
        %v1668 = vmax.f32 %v1658, 0.0
        %v1669 = vmax.f32 %v1659, 0.0
        %v1670 = vmin.f32 %v1660, 1.0
        %v1671 = vmin.f32 %v1661, 1.0
        %v1672 = vmin.f32 %v1662, 1.0
        %v1673 = vmin.f32 %v1663, 1.0
        %v1674 = vmin.f32 %v1664, 1.0
        %v1675 = vmin.f32 %v1665, 1.0
        %v1676 = vmin.f32 %v1666, 1.0
        %v1677 = vmin.f32 %v1667, 1.0
        %v1678 = vmin.f32 %v1668, 1.0
        %v1679 = vmin.f32 %v1669, 1.0
        %1690 = vrot.lane.b32.xlu0 %v1670, 2
        %v1691 = vpop.permute.xlu0 %1690
        %1692 = vrot.lane.b32.xlu0 %v1671, 2
        %v1693 = vpop.permute.xlu0 %1692
        %1694 = vrot.lane.b32.xlu0 %v1672, 2
        %v1695 = vpop.permute.xlu0 %1694
        %1696 = vrot.lane.b32.xlu0 %v1673, 2
        %v1697 = vpop.permute.xlu0 %1696
        %1698 = vrot.lane.b32.xlu0 %v1674, 2
        %v1699 = vpop.permute.xlu0 %1698
        %1700 = vrot.lane.b32.xlu0 %v1675, 2
        %v1701 = vpop.permute.xlu0 %1700
        %1702 = vrot.lane.b32.xlu0 %v1676, 2
        %v1703 = vpop.permute.xlu0 %1702
        %1704 = vrot.lane.b32.xlu0 %v1677, 2
        %v1705 = vpop.permute.xlu0 %1704
        %1706 = vrot.lane.b32.xlu0 %v1678, 2
        %v1707 = vpop.permute.xlu0 %1706
        %1708 = vrot.lane.b32.xlu0 %v1679, 2
        %v1709 = vpop.permute.xlu0 %1708
        %vm1710 = vcmask 15360
        %v1711 = vsel %vm1710, %v1691, %v1693
        %v1712 = vsel %vm1710, %v1695, %v1697
        %v1713 = vsel %vm1710, %v1699, %v1701
        %v1714 = vsel %vm1710, %v1703, %v1705
        %v1715 = vsel %vm1710, %v1707, %v1709
        %1721 = vst [vmem:[%s395 - $0x6] sm:$0xc0] %v1711
        %1722 = vst [vmem:[%s395 + $0x2] sm:$0xff] %v1712
        %1723 = vst [vmem:[%s395 + $0xa] sm:$0xff] %v1713
        %1724 = vst [vmem:[%s395 + $0x12] sm:$0xff] %v1714
        %1725 = vst [vmem:[%s395 + $0x1a] sm:$0x3f] %v1715
        %v1726 = vmul.f32 %v1580, 0.040391043
        %v1727 = vmul.f32 %v1581, 0.040391043
        %v1728 = vmul.f32 %v1582, 0.040391043
        %v1729 = vmul.f32 %v1583, 0.040391043
        %v1730 = vmul.f32 %v1584, 0.040391043
        %v1731 = vmul.f32 %v1585, 0.040391043
        %v1732 = vmul.f32 %v1586, 0.040391043
        %v1733 = vmul.f32 %v1587, 0.040391043
        %v1734 = vmul.f32 %v1588, 0.040391043
        %v1735 = vmul.f32 %v1589, 0.040391043
        %v1736 = vmul.f32 %v1590, 0.91921794
        %v1737 = vmul.f32 %v1591, 0.91921794
        %v1738 = vmul.f32 %v1592, 0.91921794
        %v1739 = vmul.f32 %v1593, 0.91921794
        %v1740 = vmul.f32 %v1594, 0.91921794
        %v1741 = vmul.f32 %v1595, 0.91921794
        %v1742 = vmul.f32 %v1596, 0.91921794
        %v1743 = vmul.f32 %v1597, 0.91921794
        %v1744 = vmul.f32 %v1598, 0.91921794
        %v1745 = vmul.f32 %v1599, 0.91921794
        %v1746 = vadd.f32 %v1726, %v1736
        %v1747 = vadd.f32 %v1727, %v1737
        %v1748 = vadd.f32 %v1728, %v1738
        %v1749 = vadd.f32 %v1729, %v1739
        %v1750 = vadd.f32 %v1730, %v1740
        %v1751 = vadd.f32 %v1731, %v1741
        %v1752 = vadd.f32 %v1732, %v1742
        %v1753 = vadd.f32 %v1733, %v1743
        %v1754 = vadd.f32 %v1734, %v1744
        %v1755 = vadd.f32 %v1735, %v1745
        %v1756 = vmul.f32 %v1600, 0.040391043
        %v1757 = vmul.f32 %v1601, 0.040391043
        %v1758 = vmul.f32 %v1602, 0.040391043
        %v1759 = vmul.f32 %v1603, 0.040391043
        %v1760 = vmul.f32 %v1604, 0.040391043
        %v1761 = vmul.f32 %v1605, 0.040391043
        %v1762 = vmul.f32 %v1606, 0.040391043
        %v1763 = vmul.f32 %v1607, 0.040391043
        %v1764 = vmul.f32 %v1608, 0.040391043
        %v1765 = vmul.f32 %v1609, 0.040391043
        %v1766 = vadd.f32 %v1746, %v1756
        %v1767 = vadd.f32 %v1747, %v1757
        %v1768 = vadd.f32 %v1748, %v1758
        %v1769 = vadd.f32 %v1749, %v1759
        %v1770 = vadd.f32 %v1750, %v1760
        %v1771 = vadd.f32 %v1751, %v1761
        %v1772 = vadd.f32 %v1752, %v1762
        %v1773 = vadd.f32 %v1753, %v1763
        %v1774 = vadd.f32 %v1754, %v1764
        %v1775 = vadd.f32 %v1755, %v1765
        %v1776 = vmax.f32 %v1766, 0.0
        %v1777 = vmax.f32 %v1767, 0.0
        %v1778 = vmax.f32 %v1768, 0.0
        %v1779 = vmax.f32 %v1769, 0.0
        %v1780 = vmax.f32 %v1770, 0.0
        %v1781 = vmax.f32 %v1771, 0.0
        %v1782 = vmax.f32 %v1772, 0.0
        %v1783 = vmax.f32 %v1773, 0.0
        %v1784 = vmax.f32 %v1774, 0.0
        %v1785 = vmax.f32 %v1775, 0.0
        %v1786 = vmin.f32 %v1776, 1.0
        %v1787 = vmin.f32 %v1777, 1.0
        %v1788 = vmin.f32 %v1778, 1.0
        %v1789 = vmin.f32 %v1779, 1.0
        %v1790 = vmin.f32 %v1780, 1.0
        %v1791 = vmin.f32 %v1781, 1.0
        %v1792 = vmin.f32 %v1782, 1.0
        %v1793 = vmin.f32 %v1783, 1.0
        %v1794 = vmin.f32 %v1784, 1.0
        %v1795 = vmin.f32 %v1785, 1.0
        %1806 = vrot.lane.b32.xlu0 %v1786, 2
        %v1807 = vpop.permute.xlu0 %1806
        %1808 = vrot.lane.b32.xlu0 %v1787, 2
        %v1809 = vpop.permute.xlu0 %1808
        %1810 = vrot.lane.b32.xlu0 %v1788, 2
        %v1811 = vpop.permute.xlu0 %1810
        %1812 = vrot.lane.b32.xlu0 %v1789, 2
        %v1813 = vpop.permute.xlu0 %1812
        %1814 = vrot.lane.b32.xlu0 %v1790, 2
        %v1815 = vpop.permute.xlu0 %1814
        %1816 = vrot.lane.b32.xlu0 %v1791, 2
        %v1817 = vpop.permute.xlu0 %1816
        %1818 = vrot.lane.b32.xlu0 %v1792, 2
        %v1819 = vpop.permute.xlu0 %1818
        %1820 = vrot.lane.b32.xlu0 %v1793, 2
        %v1821 = vpop.permute.xlu0 %1820
        %1822 = vrot.lane.b32.xlu0 %v1794, 2
        %v1823 = vpop.permute.xlu0 %1822
        %1824 = vrot.lane.b32.xlu0 %v1795, 2
        %v1825 = vpop.permute.xlu0 %1824
        %v1826 = vsel %vm1710, %v1807, %v1809
        %v1827 = vsel %vm1710, %v1811, %v1813
        %v1828 = vsel %vm1710, %v1815, %v1817
        %v1829 = vsel %vm1710, %v1819, %v1821
        %v1830 = vsel %vm1710, %v1823, %v1825
        %s1836 = scalar_lea.vmem %s395, 32 [#allocation5]
        %1837 = vst [vmem:[%s1836 - $0x6] sm:$0xc0] %v1826
        %1838 = vst [vmem:[%s1836 + $0x2] sm:$0xff] %v1827
        %1839 = vst [vmem:[%s1836 + $0xa] sm:$0xff] %v1828
        %1840 = vst [vmem:[%s1836 + $0x12] sm:$0xff] %v1829
        %1841 = vst [vmem:[%s1836 + $0x1a] sm:$0x3f] %v1830
        %v1842 = vmul.f32 %v1580, 3.4256063e-06
        %v1843 = vmul.f32 %v1581, 3.4256063e-06
        %v1844 = vmul.f32 %v1582, 3.4256063e-06
        %v1845 = vmul.f32 %v1583, 3.4256063e-06
        %v1846 = vmul.f32 %v1584, 3.4256063e-06
        %v1847 = vmul.f32 %v1585, 3.4256063e-06
        %v1848 = vmul.f32 %v1586, 3.4256063e-06
        %v1849 = vmul.f32 %v1587, 3.4256063e-06
        %v1850 = vmul.f32 %v1588, 3.4256063e-06
        %v1851 = vmul.f32 %v1589, 3.4256063e-06
        %v1852 = vadd.f32 %v1842, %v1620
        %v1853 = vadd.f32 %v1843, %v1621
        %v1854 = vadd.f32 %v1844, %v1622
        %v1855 = vadd.f32 %v1845, %v1623
        %v1856 = vadd.f32 %v1846, %v1624
        %v1857 = vadd.f32 %v1847, %v1625
        %v1858 = vadd.f32 %v1848, %v1626
        %v1859 = vadd.f32 %v1849, %v1627
        %v1860 = vadd.f32 %v1850, %v1628
        %v1861 = vadd.f32 %v1851, %v1629
        %v1862 = vmul.f32 %v1600, 0.959609
        %v1863 = vmul.f32 %v1601, 0.959609
        %v1864 = vmul.f32 %v1602, 0.959609
        %v1865 = vmul.f32 %v1603, 0.959609
        %v1866 = vmul.f32 %v1604, 0.959609
        %v1867 = vmul.f32 %v1605, 0.959609
        %v1868 = vmul.f32 %v1606, 0.959609
        %v1869 = vmul.f32 %v1607, 0.959609
        %v1870 = vmul.f32 %v1608, 0.959609
        %v1871 = vmul.f32 %v1609, 0.959609
        %v1872 = vadd.f32 %v1852, %v1862
        %v1873 = vadd.f32 %v1853, %v1863
        %v1874 = vadd.f32 %v1854, %v1864
        %v1875 = vadd.f32 %v1855, %v1865
        %v1876 = vadd.f32 %v1856, %v1866
        %v1877 = vadd.f32 %v1857, %v1867
        %v1878 = vadd.f32 %v1858, %v1868
        %v1879 = vadd.f32 %v1859, %v1869
        %v1880 = vadd.f32 %v1860, %v1870
        %v1881 = vadd.f32 %v1861, %v1871
        %v1882 = vmax.f32 %v1872, 0.0
        %v1883 = vmax.f32 %v1873, 0.0
        %v1884 = vmax.f32 %v1874, 0.0
        %v1885 = vmax.f32 %v1875, 0.0
        %v1886 = vmax.f32 %v1876, 0.0
        %v1887 = vmax.f32 %v1877, 0.0
        %v1888 = vmax.f32 %v1878, 0.0
        %v1889 = vmax.f32 %v1879, 0.0
        %v1890 = vmax.f32 %v1880, 0.0
        %v1891 = vmax.f32 %v1881, 0.0
        %v1892 = vmin.f32 %v1882, 1.0
        %v1893 = vmin.f32 %v1883, 1.0
        %v1894 = vmin.f32 %v1884, 1.0
        %v1895 = vmin.f32 %v1885, 1.0
        %v1896 = vmin.f32 %v1886, 1.0
        %v1897 = vmin.f32 %v1887, 1.0
        %v1898 = vmin.f32 %v1888, 1.0
        %v1899 = vmin.f32 %v1889, 1.0
        %v1900 = vmin.f32 %v1890, 1.0
        %v1901 = vmin.f32 %v1891, 1.0
        %1912 = vrot.lane.b32.xlu0 %v1892, 2
        %v1913 = vpop.permute.xlu0 %1912
        %1914 = vrot.lane.b32.xlu0 %v1893, 2
        %v1915 = vpop.permute.xlu0 %1914
        %1916 = vrot.lane.b32.xlu0 %v1894, 2
        %v1917 = vpop.permute.xlu0 %1916
        %1918 = vrot.lane.b32.xlu0 %v1895, 2
        %v1919 = vpop.permute.xlu0 %1918
        %1920 = vrot.lane.b32.xlu0 %v1896, 2
        %v1921 = vpop.permute.xlu0 %1920
        %1922 = vrot.lane.b32.xlu0 %v1897, 2
        %v1923 = vpop.permute.xlu0 %1922
        %1924 = vrot.lane.b32.xlu0 %v1898, 2
        %v1925 = vpop.permute.xlu0 %1924
        %1926 = vrot.lane.b32.xlu0 %v1899, 2
        %v1927 = vpop.permute.xlu0 %1926
        %1928 = vrot.lane.b32.xlu0 %v1900, 2
        %v1929 = vpop.permute.xlu0 %1928
        %1930 = vrot.lane.b32.xlu0 %v1901, 2
        %v1931 = vpop.permute.xlu0 %1930
        %v1932 = vsel %vm1710, %v1913, %v1915
        %v1933 = vsel %vm1710, %v1917, %v1919
        %v1934 = vsel %vm1710, %v1921, %v1923
        %v1935 = vsel %vm1710, %v1925, %v1927
        %v1936 = vsel %vm1710, %v1929, %v1931
        %s1942 = scalar_lea.vmem %s395, 64 [#allocation5]
        %1943 = vst [vmem:[%s1942 - $0x6] sm:$0xc0] %v1932
        %1944 = vst [vmem:[%s1942 + $0x2] sm:$0xff] %v1933
        %1945 = vst [vmem:[%s1942 + $0xa] sm:$0xff] %v1934
        %1946 = vst [vmem:[%s1942 + $0x12] sm:$0xff] %v1935
        %1947 = vst [vmem:[%s1942 + $0x1a] sm:$0x3f] %v1936
        %s1948 = sand.u32 %s119, 1
        %s1949 = scalar_lea.sflag [#allocation6], %s1948
        %s1950 = sand.u32 %s119, 1
        %s1951 = smul.addr %s1950, 96
        %s1952 = scalar_lea.vmem [#allocation5], %s1951
        // Predicated region
        $region147: #{glass_blur.3} parent=133 // pred_check
          %p1953 = pneg %p129
        $region148: #{glass_blur.3} parent=133 // pred_check_branch
          %1955 = sbr.rel (%p1953) target = $region150
        $region149: #{glass_blur.3} parent=133 // pred_region
          #allocation8 [shape = 'u32[6]{0}', space=smem, size = 0x18, scoped, tag = 'DMA stride descriptor']
          %s1956 = smul.u32 4, %s17
          %s1958 = ssub.s32 1536, 1536
          %1959 = vsyncadd %s1949, %s1958
          %s1960 = smul.addr %s1956, 128
          %s1961 = scalar_lea.hbm %s3, %s1960
          %s1963 = sshll.u32 1, 14
          %s1964 = sxor.u32 4294967295, %s1963
          %s1967 = sshll.u32 7, 18
          %s1968 = sxor.u32 4294967295, %s1967
          %s1969 = sand.u32 0, %s1968
          %s1971 = sor.u32 %s1969, 0
          %s1973 = sshll.u32 3, 24
          %s1974 = sxor.u32 4294967295, %s1973
          %s1975 = sand.u32 %s1971, %s1974
          %s1977 = sor.u32 %s1975, 0
          %s1978 = sshll.u32 %s1952, 4
          %s1979 = int_to_ptr.vmem [resolvable:$true] %s1978
          %1985 = sst [smem:[#allocation8]] 512
          %s1986 = scalar_lea.smem [#allocation8], 1
          %1987 = sst [smem:[%s1986]] 1024
          %s1988 = scalar_lea.smem [#allocation8], 2
          %1989 = sst [smem:[%s1988]] 4
          %s1990 = scalar_lea.smem [#allocation8], 3
          %1991 = sst [smem:[%s1990]] 128
          %s1992 = scalar_lea.smem [#allocation8], 4
          %1993 = sst [smem:[%s1992]] 128
          %s1994 = scalar_lea.smem [#allocation8], 5
          %1995 = sst [smem:[%s1994]] 8
          %1997 = dma.general %s1979, 1536, %s1961, %s1949, [#allocation7], [#allocation8], %s1977, 0
        $region150: #{glass_blur.3} parent=133 // pred_fallthru
          _
      $region134: #{glass_blur.3} parent=5 // pred_fallthru
        _
      %p1998 = scmp.le.s32.totalorder 2, %s12
      // Predicated region
      $region151: #{glass_blur.3} parent=5 // pred_check
        %p1999 = pneg %p1998
      $region152: #{glass_blur.3} parent=5 // pred_check_branch
        %2001 = sbr.rel (%p1999) target = $region154
      $region153: #{glass_blur.3} parent=5 // pred_region
        %s2002 = ssub.s32 %s12, 2
        // Predicated region
        $region155: #{glass_blur.3} parent=153 // pred_check
          %p2003 = pneg %p135
        $region156: #{glass_blur.3} parent=153 // pred_check_branch
          %2005 = sbr.rel (%p2003) target = $region158
        $region157: #{glass_blur.3} parent=153 // pred_region
          %s2006 = sand.u32 %s120, 1
          %s2007 = scalar_lea.sflag [#allocation6], %s2006
          %s2008 = sand.u32 %s120, 1
          %s2009 = smul.addr %s2008, 96
          %s2010 = scalar_lea.vmem [#allocation5], %s2009
          %2011 = dma.done %s2007, 1536
        $region158: #{glass_blur.3} parent=153 // pred_fallthru
          _
      $region154: #{glass_blur.3} parent=5 // pred_fallthru
        _
    $region6: #{glass_blur.3} parent=1 // loop_footer
      %s16 = sadd.s32 1, %s12
    $region7: #{glass_blur.3} parent=1 // loop_footer_branch
      %11 = sbr.rel target = $region3
    $region8: #{glass_blur.3} parent=1 // loop_exit
      _
    %2012 = vsyncpa [#allocation6], 1
    %s2013 = scalar_lea.sflag [#allocation6], 1
    %2014 = vsyncpa %s2013, 1

</llo_original>
